<compile_context>
chip_gen: v6e
topology: v6e:2x2x1
jax: 0.10.0
libtpu: 0.0.40
codegen_flags: <defaults>
</compile_context>

<pallas_src>
import functools

import jax
import jax.numpy as jnp
from jax.experimental import pallas as pl
from jax.experimental.pallas import tpu as pltpu


def mlp_kernel(
    x_ref,
    w1_ref, b1_ref,
    w2_ref, b2_ref,
    w3_ref, b3_ref,
    w4_ref, b4_ref,
    w5_ref, b5_ref,
    o_ref,
):
    # x is already bf16 (cast in the wrapper).
    h = x_ref[...]                                           # (BM, 30) bf16

    # fc1..fc4 (with the previous layer's BN folded in) -> bias -> ReLU.
    # bf16 operands on the MXU, f32 accumulation, f32 elementwise.
    for w_ref, b_ref in ((w1_ref, b1_ref), (w2_ref, b2_ref),
                         (w3_ref, b3_ref), (w4_ref, b4_ref)):
        a = jnp.dot(h, w_ref[...], preferred_element_type=jnp.float32) + b_ref[...]
        h = jnp.maximum(a, 0.0).astype(jnp.bfloat16)

    # fc5 (+ folded norm4) -> sigmoid.  Plain (BM,256)@(256,1) -> (BM,1);
    # the ~BM/8 masked stores are cheap and sit under MXU slack.
    y = jnp.dot(h, w5_ref[...], preferred_element_type=jnp.float32) + b5_ref[...]
    o_ref[...] = jax.nn.sigmoid(y)


def _round_up(x, m):
    return (x + m - 1) // m * m


def prepare_params(params):
    """One-time preprocessing: fold eval-mode BatchNorm (scale s_k / shift t_k
    applied after ReLU_k) into the next Linear layer and cast weights to bf16.

    (relu * s + t) @ W + b  ==  relu @ (diag(s) W) + (t @ W + b)
    """
    w = {i: params[f"w{i}"] for i in range(1, 6)}
    b = {i: params[f"b{i}"] for i in range(1, 6)}
    for i in range(2, 6):
        s = params[f"s{i - 1}"]              # (1, out_{i-1})
        t = params[f"t{i - 1}"]              # (1, out_{i-1})
        b[i] = t @ params[f"w{i}"] + b[i]    # uses the original W_i
        w[i] = s.reshape(-1, 1) * w[i]
    folded = {}
    for i in range(1, 6):
        folded[f"w{i}"] = jnp.asarray(w[i], jnp.float32).astype(jnp.bfloat16)
        folded[f"b{i}"] = jnp.asarray(b[i], jnp.float32)
    return folded


def _pick_block_m(n, block_m):
    """Batch tile: multiple of 256 (MXU rows on v6e/v7x, also multiple of
    v5e's 128), as large as block_m, but capped so the grid has >=2 blocks
    whenever there is >=512 rows of (padded) work -- keeps both v7x
    TensorCores busy."""
    block_m = max(256, _round_up(block_m, 256))
    n_pad_min = _round_up(n, 256)
    bm = min(block_m, n_pad_min)
    if n_pad_min >= 512:
        half = max(256, (n_pad_min // 2) // 256 * 256)
        bm = min(bm, half)
    return bm


@functools.partial(jax.jit, static_argnames=("block_m",))
def net_forward(x, folded, *, block_m=2048):
    """Inference forward pass. Works for any batch size (rows are padded to an
    MXU-aligned tile and the padding is sliced off afterwards)."""
    n, d_in = x.shape
    if n == 0:  # static under jit
        return jnp.zeros((0, 1), jnp.float32)

    bm = _pick_block_m(n, block_m)
    n_pad = _round_up(n, bm)
    num_blocks = n_pad // bm

    xb = x.astype(jnp.bfloat16)
    if n_pad != n:
        xb = jnp.pad(xb, ((0, n_pad - n), (0, 0)))

    ordered = [folded["w1"], folded["b1"], folded["w2"], folded["b2"],
               folded["w3"], folded["b3"], folded["w4"], folded["b4"],
               folded["w5"], folded["b5"]]

    def const_spec(arr):
        # Full-array block with a constant index_map: stays resident in VMEM.
        zeros = (0,) * arr.ndim
        return pl.BlockSpec(arr.shape, lambda i: zeros)

    in_specs = [pl.BlockSpec((bm, d_in), lambda i: (i, 0))]
    in_specs += [const_spec(a) for a in ordered]
    out_spec = pl.BlockSpec((bm, 1), lambda i: (i, 0))

    # VMEM budget derived from the tile: resident weights (x2 for buffering),
    # live f32/bf16 activation slabs, double-buffered x/out, +50% headroom.
    weight_bytes = sum(int(a.size) * a.dtype.itemsize for a in ordered)
    act_bytes = bm * 512 * (4 + 4 + 2)
    io_bytes = 2 * (bm * d_in * 2 + bm * 4)
    vmem_limit = int(1.5 * (2 * weight_bytes + act_bytes + io_bytes))
    vmem_limit = min(max(vmem_limit, 16 * 1024 * 1024), 100 * 1024 * 1024)

    out = pl.pallas_call(
        mlp_kernel,
        out_shape=jax.ShapeDtypeStruct((n_pad, 1), jnp.float32),
        grid_spec=pltpu.PrefetchScalarGridSpec(
            num_scalar_prefetch=0,
            grid=(num_blocks,),
            in_specs=in_specs,
            out_specs=out_spec,
        ),
        compiler_params=pltpu.CompilerParams(
            dimension_semantics=("parallel",),   # batch blocks are independent
            vmem_limit_bytes=vmem_limit,
        ),
    )(xb, *ordered)

    return out[:n]


def init_params(key):
    """Deterministic init mimicking PyTorch nn.Linear default
    (U(-1/sqrt(in), 1/sqrt(in))) and default BatchNorm1d state
    (gamma=1, beta=0, running_mean=0, running_var=1)."""
    sizes = [(30, 256), (256, 512), (512, 512), (512, 256), (256, 1)]
    eps = 1e-5
    params = {}
    for idx, (fan_in, fan_out) in enumerate(sizes, start=1):
        key, kw, kb = jax.random.split(key, 3)
        bound = 1.0 / (fan_in ** 0.5)
        # stored as (in, out) = transpose of PyTorch's (out, in)
        params[f"w{idx}"] = jax.random.uniform(
            kw, (fan_in, fan_out), jnp.float32, minval=-bound, maxval=bound)
        params[f"b{idx}"] = jax.random.uniform(
            kb, (1, fan_out), jnp.float32, minval=-bound, maxval=bound)
        if idx <= 4:
            gamma = jnp.ones((1, fan_out), jnp.float32)
            beta = jnp.zeros((1, fan_out), jnp.float32)
            running_mean = jnp.zeros((1, fan_out), jnp.float32)
            running_var = jnp.ones((1, fan_out), jnp.float32)
            scale = gamma / jnp.sqrt(running_var + eps)
            shift = beta - running_mean * scale
            params[f"s{idx}"] = scale
            params[f"t{idx}"] = shift
    return params


def reference_forward(x, params):
    """Pure-JAX f32 reference with the original (unfolded) eval-mode semantics."""
    h = x
    for idx in (1, 2, 3, 4):
        h = jnp.maximum(h @ params[f"w{idx}"] + params[f"b{idx}"], 0.0)
        h = h * params[f"s{idx}"] + params[f"t{idx}"]
    y = h @ params["w5"] + params["b5"]
    return jax.nn.sigmoid(y)


if __name__ == "__main__":
    key = jax.random.PRNGKey(0)
    key, kx = jax.random.split(key)
    batch = 64   # small demo batch; wrapper pads to an MXU-friendly tile
    x = jax.random.normal(kx, (batch, 30), jnp.float32)

    params = init_params(key)
    folded = prepare_params(params)   # one-time BN fold + bf16 cast (hoisted)

    out = jax.block_until_ready(net_forward(x, folded))
    ref = reference_forward(x, params)

    assert out.shape == (batch, 1)
    # bf16 matmuls (f32 accumulation) vs f32 reference -> loose tolerance.
    assert jnp.allclose(out, ref, atol=2e-2), "mismatch vs pure-JAX reference"

    print("KERNEL_OK")
</pallas_src>

<mosaic_0001>
module attributes {stable_mosaic.version = 11 : i64} {
  func.func @mlp_kernel(%arg0: i32, %arg1: memref<256x30xbf16, #tpu.memory_space<vmem>>, %arg2: memref<30x256xbf16, #tpu.memory_space<vmem>>, %arg3: memref<1x256xf32, #tpu.memory_space<vmem>>, %arg4: memref<256x512xbf16, #tpu.memory_space<vmem>>, %arg5: memref<1x512xf32, #tpu.memory_space<vmem>>, %arg6: memref<512x512xbf16, #tpu.memory_space<vmem>>, %arg7: memref<1x512xf32, #tpu.memory_space<vmem>>, %arg8: memref<512x256xbf16, #tpu.memory_space<vmem>>, %arg9: memref<1x256xf32, #tpu.memory_space<vmem>>, %arg10: memref<256x1xbf16, #tpu.memory_space<vmem>>, %arg11: memref<1x1xf32, #tpu.memory_space<vmem>>, %arg12: memref<256x1xf32, #tpu.memory_space<vmem>>) attributes {dimension_semantics = [#tpu.dimension_semantics<parallel>], iteration_bounds = array<i64: 1>, scalar_prefetch = 0 : i64, scratch_operands = 0 : i64, tpu.core_type = #tpu.core_type<tc>, window_params = [{transform_indices = @transform_0, window_bounds = array<i64: 256, 30>}, {pipeline_mode = #tpu.pipeline_mode<synchronous>, transform_indices = @transform_1, window_bounds = array<i64: 30, 256>}, {pipeline_mode = #tpu.pipeline_mode<synchronous>, transform_indices = @transform_2, window_bounds = array<i64: 1, 256>}, {pipeline_mode = #tpu.pipeline_mode<synchronous>, transform_indices = @transform_3, window_bounds = array<i64: 256, 512>}, {pipeline_mode = #tpu.pipeline_mode<synchronous>, transform_indices = @transform_4, window_bounds = array<i64: 1, 512>}, {pipeline_mode = #tpu.pipeline_mode<synchronous>, transform_indices = @transform_5, window_bounds = array<i64: 512, 512>}, {pipeline_mode = #tpu.pipeline_mode<synchronous>, transform_indices = @transform_6, window_bounds = array<i64: 1, 512>}, {pipeline_mode = #tpu.pipeline_mode<synchronous>, transform_indices = @transform_7, window_bounds = array<i64: 512, 256>}, {pipeline_mode = #tpu.pipeline_mode<synchronous>, transform_indices = @transform_8, window_bounds = array<i64: 1, 256>}, {pipeline_mode = #tpu.pipeline_mode<synchronous>, transform_indices = @transform_9, window_bounds = array<i64: 256, 1>}, {pipeline_mode = #tpu.pipeline_mode<synchronous>, transform_indices = @transform_10, window_bounds = array<i64: 1, 1>}, {transform_indices = @transform_11, window_bounds = array<i64: 256, 1>}]} {
    %c0 = arith.constant 0 : index
    %c0_0 = arith.constant 0 : index
    %0 = vector.load %arg1[%c0, %c0_0] : memref<256x30xbf16, #tpu.memory_space<vmem>>, vector<256x30xbf16>
    %c0_1 = arith.constant 0 : index
    %c0_2 = arith.constant 0 : index
    %1 = vector.load %arg2[%c0_1, %c0_2] : memref<30x256xbf16, #tpu.memory_space<vmem>>, vector<30x256xbf16>
    %cst = arith.constant dense<0.000000e+00> : vector<256x256xf32>
    %2 = tpu.matmul %0, %1, %cst {dimension_numbers = #tpu.dot_dimension_numbers<[1], [0], [0], [1], [0, 0, 1, 1], [], []>} : vector<256x30xbf16>, vector<30x256xbf16>, vector<256x256xf32> -> vector<256x256xf32>
    %c0_3 = arith.constant 0 : index
    %c0_4 = arith.constant 0 : index
    %3 = vector.load %arg3[%c0_3, %c0_4] : memref<1x256xf32, #tpu.memory_space<vmem>>, vector<1x256xf32>
    %4 = vector.broadcast %3 : vector<1x256xf32> to vector<256x256xf32>
    %5 = arith.addf %2, %4 : vector<256x256xf32>
    %cst_5 = arith.constant 0.000000e+00 : f32
    %6 = vector.broadcast %cst_5 : f32 to vector<256x256xf32>
    %7 = arith.maximumf %5, %6 : vector<256x256xf32>
    %8 = arith.truncf %7 : vector<256x256xf32> to vector<256x256xbf16>
    %c0_6 = arith.constant 0 : index
    %c0_7 = arith.constant 0 : index
    %9 = vector.load %arg4[%c0_6, %c0_7] : memref<256x512xbf16, #tpu.memory_space<vmem>>, vector<256x512xbf16>
    %cst_8 = arith.constant dense<0.000000e+00> : vector<256x512xf32>
    %10 = tpu.matmul %8, %9, %cst_8 {dimension_numbers = #tpu.dot_dimension_numbers<[1], [0], [0], [1], [0, 0, 1, 1], [], []>} : vector<256x256xbf16>, vector<256x512xbf16>, vector<256x512xf32> -> vector<256x512xf32>
    %c0_9 = arith.constant 0 : index
    %c0_10 = arith.constant 0 : index
    %11 = vector.load %arg5[%c0_9, %c0_10] : memref<1x512xf32, #tpu.memory_space<vmem>>, vector<1x512xf32>
    %12 = vector.broadcast %11 : vector<1x512xf32> to vector<256x512xf32>
    %13 = arith.addf %10, %12 : vector<256x512xf32>
    %cst_11 = arith.constant 0.000000e+00 : f32
    %14 = vector.broadcast %cst_11 : f32 to vector<256x512xf32>
    %15 = arith.maximumf %13, %14 : vector<256x512xf32>
    %16 = arith.truncf %15 : vector<256x512xf32> to vector<256x512xbf16>
    %c0_12 = arith.constant 0 : index
    %c0_13 = arith.constant 0 : index
    %17 = vector.load %arg6[%c0_12, %c0_13] : memref<512x512xbf16, #tpu.memory_space<vmem>>, vector<512x512xbf16>
    %cst_14 = arith.constant dense<0.000000e+00> : vector<256x512xf32>
    %18 = tpu.matmul %16, %17, %cst_14 {dimension_numbers = #tpu.dot_dimension_numbers<[1], [0], [0], [1], [0, 0, 1, 1], [], []>} : vector<256x512xbf16>, vector<512x512xbf16>, vector<256x512xf32> -> vector<256x512xf32>
    %c0_15 = arith.constant 0 : index
    %c0_16 = arith.constant 0 : index
    %19 = vector.load %arg7[%c0_15, %c0_16] : memref<1x512xf32, #tpu.memory_space<vmem>>, vector<1x512xf32>
    %20 = vector.broadcast %19 : vector<1x512xf32> to vector<256x512xf32>
    %21 = arith.addf %18, %20 : vector<256x512xf32>
    %cst_17 = arith.constant 0.000000e+00 : f32
    %22 = vector.broadcast %cst_17 : f32 to vector<256x512xf32>
    %23 = arith.maximumf %21, %22 : vector<256x512xf32>
    %24 = arith.truncf %23 : vector<256x512xf32> to vector<256x512xbf16>
    %c0_18 = arith.constant 0 : index
    %c0_19 = arith.constant 0 : index
    %25 = vector.load %arg8[%c0_18, %c0_19] : memref<512x256xbf16, #tpu.memory_space<vmem>>, vector<512x256xbf16>
    %cst_20 = arith.constant dense<0.000000e+00> : vector<256x256xf32>
    %26 = tpu.matmul %24, %25, %cst_20 {dimension_numbers = #tpu.dot_dimension_numbers<[1], [0], [0], [1], [0, 0, 1, 1], [], []>} : vector<256x512xbf16>, vector<512x256xbf16>, vector<256x256xf32> -> vector<256x256xf32>
    %c0_21 = arith.constant 0 : index
    %c0_22 = arith.constant 0 : index
    %27 = vector.load %arg9[%c0_21, %c0_22] : memref<1x256xf32, #tpu.memory_space<vmem>>, vector<1x256xf32>
    %28 = vector.broadcast %27 : vector<1x256xf32> to vector<256x256xf32>
    %29 = arith.addf %26, %28 : vector<256x256xf32>
    %cst_23 = arith.constant 0.000000e+00 : f32
    %30 = vector.broadcast %cst_23 : f32 to vector<256x256xf32>
    %31 = arith.maximumf %29, %30 : vector<256x256xf32>
    %32 = arith.truncf %31 : vector<256x256xf32> to vector<256x256xbf16>
    %c0_24 = arith.constant 0 : index
    %c0_25 = arith.constant 0 : index
    %33 = vector.load %arg10[%c0_24, %c0_25] : memref<256x1xbf16, #tpu.memory_space<vmem>>, vector<256x1xbf16>
    %cst_26 = arith.constant dense<0.000000e+00> : vector<256x1xf32>
    %34 = tpu.matmul %32, %33, %cst_26 {dimension_numbers = #tpu.dot_dimension_numbers<[1], [0], [0], [1], [0, 0, 1, 1], [], []>} : vector<256x256xbf16>, vector<256x1xbf16>, vector<256x1xf32> -> vector<256x1xf32>
    %c0_27 = arith.constant 0 : index
    %c0_28 = arith.constant 0 : index
    %35 = vector.load %arg11[%c0_27, %c0_28] : memref<1x1xf32, #tpu.memory_space<vmem>>, vector<1x1xf32>
    %36 = vector.broadcast %35 : vector<1x1xf32> to vector<256x1xf32>
    %37 = arith.addf %34, %36 : vector<256x1xf32>
    %38 = arith.negf %37 : vector<256x1xf32>
    %39 = math.exp %38 : vector<256x1xf32>
    %cst_29 = arith.constant 1.000000e+00 : f32
    %40 = vector.broadcast %cst_29 : f32 to vector<256x1xf32>
    %41 = arith.addf %40, %39 : vector<256x1xf32>
    %42 = arith.divf %40, %41 : vector<256x1xf32>
    %c0_30 = arith.constant 0 : index
    %c0_31 = arith.constant 0 : index
    %43 = vector.load %arg12[%c0_30, %c0_31] : memref<256x1xf32, #tpu.memory_space<vmem>>, vector<256x1xf32>
    tpu.vector_store %arg12[%c0_30, %c0_31], %42 {strides = array<i32>} : memref<256x1xf32, #tpu.memory_space<vmem>>, vector<256x1xf32>,
    return
  }
  func.func @transform_0(%arg0: i32) -> (i32, i32) {
    %c0_i32 = arith.constant 0 : i32
    %c0_i32_0 = arith.constant 0 : i32
    return %arg0, %c0_i32 : i32, i32
  }
  func.func @transform_1(%arg0: i32) -> (i32, i32) {
    %c0_i32 = arith.constant 0 : i32
    %c0_i32_0 = arith.constant 0 : i32
    %c0_i32_1 = arith.constant 0 : i32
    return %c0_i32, %c0_i32_0 : i32, i32
  }
  func.func @transform_2(%arg0: i32) -> (i32, i32) {
    %c0_i32 = arith.constant 0 : i32
    %c0_i32_0 = arith.constant 0 : i32
    %c0_i32_1 = arith.constant 0 : i32
    return %c0_i32, %c0_i32_0 : i32, i32
  }
  func.func @transform_3(%arg0: i32) -> (i32, i32) {
    %c0_i32 = arith.constant 0 : i32
    %c0_i32_0 = arith.constant 0 : i32
    %c0_i32_1 = arith.constant 0 : i32
    return %c0_i32, %c0_i32_0 : i32, i32
  }
  func.func @transform_4(%arg0: i32) -> (i32, i32) {
    %c0_i32 = arith.constant 0 : i32
    %c0_i32_0 = arith.constant 0 : i32
    %c0_i32_1 = arith.constant 0 : i32
    return %c0_i32, %c0_i32_0 : i32, i32
  }
  func.func @transform_5(%arg0: i32) -> (i32, i32) {
    %c0_i32 = arith.constant 0 : i32
    %c0_i32_0 = arith.constant 0 : i32
    %c0_i32_1 = arith.constant 0 : i32
    return %c0_i32, %c0_i32_0 : i32, i32
  }
  func.func @transform_6(%arg0: i32) -> (i32, i32) {
    %c0_i32 = arith.constant 0 : i32
    %c0_i32_0 = arith.constant 0 : i32
    %c0_i32_1 = arith.constant 0 : i32
    return %c0_i32, %c0_i32_0 : i32, i32
  }
  func.func @transform_7(%arg0: i32) -> (i32, i32) {
    %c0_i32 = arith.constant 0 : i32
    %c0_i32_0 = arith.constant 0 : i32
    %c0_i32_1 = arith.constant 0 : i32
    return %c0_i32, %c0_i32_0 : i32, i32
  }
  func.func @transform_8(%arg0: i32) -> (i32, i32) {
    %c0_i32 = arith.constant 0 : i32
    %c0_i32_0 = arith.constant 0 : i32
    %c0_i32_1 = arith.constant 0 : i32
    return %c0_i32, %c0_i32_0 : i32, i32
  }
  func.func @transform_9(%arg0: i32) -> (i32, i32) {
    %c0_i32 = arith.constant 0 : i32
    %c0_i32_0 = arith.constant 0 : i32
    %c0_i32_1 = arith.constant 0 : i32
    return %c0_i32, %c0_i32_0 : i32, i32
  }
  func.func @transform_10(%arg0: i32) -> (i32, i32) {
    %c0_i32 = arith.constant 0 : i32
    %c0_i32_0 = arith.constant 0 : i32
    %c0_i32_1 = arith.constant 0 : i32
    return %c0_i32, %c0_i32_0 : i32, i32
  }
  func.func @transform_11(%arg0: i32) -> (i32, i32) {
    %c0_i32 = arith.constant 0 : i32
    %c0_i32_0 = arith.constant 0 : i32
    return %arg0, %c0_i32 : i32, i32
  }
}

</mosaic_0001>

<llo_original>
// kernel: net_forward.1
$region0: #{net_forward.1}
  #allocation0 [shape = 'u32[]', space=smem, size = 0x4, offset = 0x4, fixed_abs, tag = 'smem constant byte address 0x4 - core index']
  #allocation1 [shape = 'u32[144,128]{1,0:T(1,128)}', space=vmem, size = 0x12000, scoped, tag = 'internal scratch']
  #allocation2 [shape = 'f32[1,1]{1,0:T(1,128)S(1)}', space=vmem, size = 0x200, scoped, tag = 'scoped memory for net_forward.1']
  %s0 = inlined_call_operand.vmem [shape: bf16[256,30], index: 0, kind: input, shape index: {}]
  %s1 = inlined_call_operand.vmem [shape: bf16[30,256], index: 1, kind: input, shape index: {}]
  %s2 = inlined_call_operand.vmem [shape: f32[1,256], index: 2, kind: input, shape index: {}]
  %s3 = inlined_call_operand.hbm [shape: bf16[256,512], index: 3, kind: input, shape index: {}]
  %s4 = inlined_call_operand.vmem [shape: f32[1,512], index: 4, kind: input, shape index: {}]
  %s5 = inlined_call_operand.hbm [shape: bf16[512,512], index: 5, kind: input, shape index: {}]
  %s6 = inlined_call_operand.vmem [shape: f32[1,512], index: 6, kind: input, shape index: {}]
  %s7 = inlined_call_operand.hbm [shape: bf16[512,256], index: 7, kind: input, shape index: {}]
  %s8 = inlined_call_operand.vmem [shape: f32[1,256], index: 8, kind: input, shape index: {}]
  %s9 = inlined_call_operand.vmem [shape: bf16[256,1], index: 9, kind: input, shape index: {}]
  %s10 = inlined_call_operand.<no memory space> [shape: f32[1,1], index: 10, kind: input, shape index: {}]
  %s11 = inlined_call_operand.vmem [shape: f32[256,1], index: 11, kind: output, shape index: {}]
  %s12 = sld [smem:[#allocation0]]
  $region66: #{net_forward.1} parent=0
    _
  %s14 = ssub.s32 1, %s12
  %s15 = scalar_select 0, %s14, %s12
  %v16 = vstv %s10
  %17 = vst [vmem:[#allocation2] sm:$0x1] %v16
  $region1: #{net_forward.1} parent=0
    #allocation3 [shape = 'u8[262144]{0}', space=vmem, size = 0x40000, scoped, tag = 'input window, operand 3, single buffered']
    #allocation4 [shape = 's32[1]{0}', space=sflag, size = 0x4, scoped, tag = 'scoped memory for net_forward.1']
    #allocation5 [shape = 'u8[524288]{0}', space=vmem, size = 0x80000, scoped, tag = 'input window, operand 5, single buffered']
    #allocation6 [shape = 's32[1]{0}', space=sflag, size = 0x4, scoped, tag = 'scoped memory for net_forward.1']
    #allocation7 [shape = 'u8[262144]{0}', space=vmem, size = 0x40000, scoped, tag = 'input window, operand 7, single buffered']
    %18 = vsyncpa [#allocation4], 0
    %19 = vsyncpa [#allocation6], 0
    // Predicated region
    $region2: #{net_forward.1} parent=1 // pred_check
      _
    $region3: #{net_forward.1} parent=1 // pred_check_branch
      %21 = sbr.rel (0) target = $region5
    $region4: #{net_forward.1} parent=1 // pred_region
      _
    $region5: #{net_forward.1} parent=1 // pred_fallthru
      _
    // Predicated region
    $region6: #{net_forward.1} parent=1 // pred_check
      _
    $region7: #{net_forward.1} parent=1 // pred_check_branch
      %23 = sbr.rel (0) target = $region9
    $region8: #{net_forward.1} parent=1 // pred_region
      _
    $region9: #{net_forward.1} parent=1 // pred_fallthru
      _
    // Predicated region
    $region10: #{net_forward.1} parent=1 // pred_check
      _
    $region11: #{net_forward.1} parent=1 // pred_check_branch
      %25 = sbr.rel (0) target = $region13
    $region12: #{net_forward.1} parent=1 // pred_region
      _
    $region13: #{net_forward.1} parent=1 // pred_fallthru
      _
    // Predicated region
    $region14: #{net_forward.1} parent=1 // pred_check
      _
    $region15: #{net_forward.1} parent=1 // pred_check_branch
      %27 = sbr.rel (0) target = $region17
    $region16: #{net_forward.1} parent=1 // pred_region
      %s29 = ssub.s32 8192, 8192
      %30 = vsyncadd [#allocation4], %s29
      %s31 = sshll.u32 [#allocation3], 4
      %s32 = int_to_ptr.vmem [resolvable:$true] %s31
      %37 = dma.hbm_to_vmem [thread:$0]  %s3, 8192, %s32, [#allocation4], 256, 256, 16
    $region17: #{net_forward.1} parent=1 // pred_fallthru
      _
    // Predicated region
    $region18: #{net_forward.1} parent=1 // pred_check
      _
    $region19: #{net_forward.1} parent=1 // pred_check_branch
      %39 = sbr.rel (0) target = $region21
    $region20: #{net_forward.1} parent=1 // pred_region
      _
    $region21: #{net_forward.1} parent=1 // pred_fallthru
      _
    // Predicated region
    $region22: #{net_forward.1} parent=1 // pred_check
      _
    $region23: #{net_forward.1} parent=1 // pred_check_branch
      %41 = sbr.rel (0) target = $region25
    $region24: #{net_forward.1} parent=1 // pred_region
      %s43 = ssub.s32 16384, 16384
      %44 = vsyncadd [#allocation6], %s43
      %s45 = sshll.u32 [#allocation5], 4
      %s46 = int_to_ptr.vmem [resolvable:$true] %s45
      %51 = dma.hbm_to_vmem [thread:$0]  %s5, 16384, %s46, [#allocation6], 256, 256, 16
    $region25: #{net_forward.1} parent=1 // pred_fallthru
      _
    // Predicated region
    $region26: #{net_forward.1} parent=1 // pred_check
      _
    $region27: #{net_forward.1} parent=1 // pred_check_branch
      %53 = sbr.rel (0) target = $region29
    $region28: #{net_forward.1} parent=1 // pred_region
      _
    $region29: #{net_forward.1} parent=1 // pred_fallthru
      _
    // Predicated region
    $region30: #{net_forward.1} parent=1 // pred_check
      _
    $region31: #{net_forward.1} parent=1 // pred_check_branch
      %55 = sbr.rel (0) target = $region33
    $region32: #{net_forward.1} parent=1 // pred_region
      %s57 = ssub.s32 8192, 8192
      %58 = vsyncadd [#allocation6], %s57
      %s59 = sshll.u32 [#allocation7], 4
      %s60 = int_to_ptr.vmem [resolvable:$true] %s59
      %65 = dma.hbm_to_vmem [thread:$0]  %s7, 8192, %s60, [#allocation6], 128, 128, 8
    $region33: #{net_forward.1} parent=1 // pred_fallthru
      _
    // Predicated region
    $region34: #{net_forward.1} parent=1 // pred_check
      _
    $region35: #{net_forward.1} parent=1 // pred_check_branch
      %67 = sbr.rel (0) target = $region37
    $region36: #{net_forward.1} parent=1 // pred_region
      _
    $region37: #{net_forward.1} parent=1 // pred_fallthru
      _
    // Predicated region
    $region38: #{net_forward.1} parent=1 // pred_check
      _
    $region39: #{net_forward.1} parent=1 // pred_check_branch
      %69 = sbr.rel (0) target = $region41
    $region40: #{net_forward.1} parent=1 // pred_region
      _
    $region41: #{net_forward.1} parent=1 // pred_fallthru
      _
    // Predicated region
    $region42: #{net_forward.1} parent=1 // pred_check
      _
    $region43: #{net_forward.1} parent=1 // pred_check_branch
      %71 = sbr.rel (0) target = $region45
    $region44: #{net_forward.1} parent=1 // pred_region
      _
    $region45: #{net_forward.1} parent=1 // pred_fallthru
      _
    // Predicated region
    $region46: #{net_forward.1} parent=1 // pred_check
      _
    $region47: #{net_forward.1} parent=1 // pred_check_branch
      %73 = sbr.rel (0) target = $region49
    $region48: #{net_forward.1} parent=1 // pred_region
      %74 = dma.done [#allocation4], 8192
    $region49: #{net_forward.1} parent=1 // pred_fallthru
      _
    // Predicated region
    $region50: #{net_forward.1} parent=1 // pred_check
      _
    $region51: #{net_forward.1} parent=1 // pred_check_branch
      %76 = sbr.rel (0) target = $region53
    $region52: #{net_forward.1} parent=1 // pred_region
      %77 = dma.done [#allocation6], 16384
    $region53: #{net_forward.1} parent=1 // pred_fallthru
      _
    // Predicated region
    $region54: #{net_forward.1} parent=1 // pred_check
      _
    $region55: #{net_forward.1} parent=1 // pred_check_branch
      %79 = sbr.rel (0) target = $region57
    $region56: #{net_forward.1} parent=1 // pred_region
      %80 = dma.done [#allocation6], 8192
    $region57: #{net_forward.1} parent=1 // pred_fallthru
      _
    %v82 = vld [vmem:[%s0] sm:$0xf]
    %v83 = vld [vmem:[%s0 + $0x4] sm:$0xf]
    %v84 = vld [vmem:[%s0 + $0x8] sm:$0xf]
    %v85 = vld [vmem:[%s0 + $0xc] sm:$0xf]
    %v86 = vld [vmem:[%s0 + $0x10] sm:$0xf]
    %v87 = vld [vmem:[%s0 + $0x14] sm:$0xf]
    %v88 = vld [vmem:[%s0 + $0x18] sm:$0xf]
    %v89 = vld [vmem:[%s0 + $0x1c] sm:$0xf]
    %v90 = vld [vmem:[%s0 + $0x20] sm:$0xf]
    %v91 = vld [vmem:[%s0 + $0x24] sm:$0xf]
    %v92 = vld [vmem:[%s0 + $0x28] sm:$0xf]
    %v93 = vld [vmem:[%s0 + $0x2c] sm:$0xf]
    %v94 = vld [vmem:[%s0 + $0x30] sm:$0xf]
    %v95 = vld [vmem:[%s0 + $0x34] sm:$0xf]
    %v96 = vld [vmem:[%s0 + $0x38] sm:$0xf]
    %v97 = vld [vmem:[%s0 + $0x3c] sm:$0xf]
    %v98 = vld [vmem:[%s0 + $0x40] sm:$0xf]
    %v99 = vld [vmem:[%s0 + $0x44] sm:$0xf]
    %v100 = vld [vmem:[%s0 + $0x48] sm:$0xf]
    %v101 = vld [vmem:[%s0 + $0x4c] sm:$0xf]
    %v102 = vld [vmem:[%s0 + $0x50] sm:$0xf]
    %v103 = vld [vmem:[%s0 + $0x54] sm:$0xf]
    %v104 = vld [vmem:[%s0 + $0x58] sm:$0xf]
    %v105 = vld [vmem:[%s0 + $0x5c] sm:$0xf]
    %v106 = vld [vmem:[%s0 + $0x60] sm:$0xf]
    %v107 = vld [vmem:[%s0 + $0x64] sm:$0xf]
    %v108 = vld [vmem:[%s0 + $0x68] sm:$0xf]
    %v109 = vld [vmem:[%s0 + $0x6c] sm:$0xf]
    %v110 = vld [vmem:[%s0 + $0x70] sm:$0xf]
    %v111 = vld [vmem:[%s0 + $0x74] sm:$0xf]
    %v112 = vld [vmem:[%s0 + $0x78] sm:$0xf]
    %v113 = vld [vmem:[%s0 + $0x7c] sm:$0xf]
    %v114 = vld [vmem:[%s1] sm:$0xff]
    %v115 = vld [vmem:[%s1 + $0x8] sm:$0xff]
    %v116 = vld [vmem:[%s1 + $0x10] sm:$0xff]
    %v117 = vld [vmem:[%s1 + $0x18] sm:$0x77]
    %v118 = vld [vmem:[%s2] sm:$0x3]
    %v120 = vlaneseq
    %v121 = vshrl.u32 %v120, 7
    %v122 = vsub.s32 0, %v121
    %v123 = vrot.slane %v118, %v122
    %v124 = vlaneseq
    %v125 = vshrl.u32 %v124, 7
    %v126 = vsub.s32 1, %v125
    %v127 = vrot.slane %v118, %v126
    %v162 = vunpack.c.l.b16 %v82
    %v163 = vunpack.c.l.b16 %v83
    %v164 = vunpack.c.l.b16 %v84
    %v165 = vunpack.c.l.b16 %v85
    %v166 = vunpack.c.l.b16 %v86
    %v167 = vunpack.c.l.b16 %v87
    %v168 = vunpack.c.l.b16 %v88
    %v169 = vunpack.c.l.b16 %v89
    %v170 = vunpack.c.l.b16 %v90
    %v171 = vunpack.c.l.b16 %v91
    %v172 = vunpack.c.l.b16 %v92
    %v173 = vunpack.c.l.b16 %v93
    %v174 = vunpack.c.l.b16 %v94
    %v175 = vunpack.c.l.b16 %v95
    %v176 = vunpack.c.l.b16 %v96
    %v177 = vunpack.c.l.b16 %v97
    %v178 = vunpack.c.l.b16 %v98
    %v179 = vunpack.c.l.b16 %v99
    %v180 = vunpack.c.l.b16 %v100
    %v181 = vunpack.c.l.b16 %v101
    %v182 = vunpack.c.l.b16 %v102
    %v183 = vunpack.c.l.b16 %v103
    %v184 = vunpack.c.l.b16 %v104
    %v185 = vunpack.c.l.b16 %v105
    %v186 = vunpack.c.l.b16 %v106
    %v187 = vunpack.c.l.b16 %v107
    %v188 = vunpack.c.l.b16 %v108
    %v189 = vunpack.c.l.b16 %v109
    %v190 = vunpack.c.l.b16 %v110
    %v191 = vunpack.c.l.b16 %v111
    %v192 = vunpack.c.l.b16 %v112
    %v193 = vunpack.c.l.b16 %v113
    %v194 = vpack.c.b16 %v163, %v162
    %v195 = vpack.c.b16 %v165, %v164
    %v196 = vpack.c.b16 %v167, %v166
    %v197 = vpack.c.b16 %v169, %v168
    %v198 = vpack.c.b16 %v171, %v170
    %v199 = vpack.c.b16 %v173, %v172
    %v200 = vpack.c.b16 %v175, %v174
    %v201 = vpack.c.b16 %v177, %v176
    %v202 = vpack.c.b16 %v179, %v178
    %v203 = vpack.c.b16 %v181, %v180
    %v204 = vpack.c.b16 %v183, %v182
    %v205 = vpack.c.b16 %v185, %v184
    %v206 = vpack.c.b16 %v187, %v186
    %v207 = vpack.c.b16 %v189, %v188
    %v208 = vpack.c.b16 %v191, %v190
    %v209 = vpack.c.b16 %v193, %v192
    %v214 = vunpack.c.l.b16 %v114
    %v215 = vunpack.c.h.b16 %v114
    %v216 = vunpack.c.l.b16 %v115
    %v217 = vunpack.c.h.b16 %v115
    %v218 = vunpack.c.l.b16 %v116
    %v219 = vunpack.c.h.b16 %v116
    %v220 = vunpack.c.l.b16 %v117
    %v221 = vunpack.c.h.b16 %v117
    %v222 = vpack.c.b16 %v216, %v214
    %v223 = vpack.c.b16 %v217, %v215
    %v224 = vpack.c.b16 %v220, %v218
    %v225 = vpack.c.b16 %v221, %v219
    %vm228 = vcmask 244736
    %v230 = vsel %vm228, %v194, 0
    %v233 = vsel %vm228, %v195, 0
    %v236 = vsel %vm228, %v196, 0
    %v239 = vsel %vm228, %v197, 0
    %v242 = vsel %vm228, %v198, 0
    %v245 = vsel %vm228, %v199, 0
    %v248 = vsel %vm228, %v200, 0
    %v251 = vsel %vm228, %v201, 0
    %v254 = vsel %vm228, %v202, 0
    %v257 = vsel %vm228, %v203, 0
    %v260 = vsel %vm228, %v204, 0
    %v263 = vsel %vm228, %v205, 0
    %v266 = vsel %vm228, %v206, 0
    %v269 = vsel %vm228, %v207, 0
    %v272 = vsel %vm228, %v208, 0
    %v275 = vsel %vm228, %v209, 0
    %vm277 = vcmask 1046528
    %v279 = vsel %vm277, %v224, 0
    %v282 = vsel %vm277, %v225, 0
    %284 = vmatprep.subr.bf16.mxu0 0
    %285 = vmatpush1.bf16.msra.mxu0 0
    %286 = vmatprep.subr.bf16.mxu0 0
    %287 = vmatpush1.bf16.msra.mxu0 0
    %288 = vmatprep.subr.bf16.mxu0 0
    %289 = vmatpush1.bf16.msra.mxu0 0
    %290 = vmatprep.subr.bf16.mxu0 0
    %291 = vmatpush1.bf16.msra.mxu0 0
    %292 = vmatprep.subr.bf16.mxu0 0
    %293 = vmatpush1.bf16.msra.mxu0 0
    %294 = vmatprep.subr.bf16.mxu0 0
    %295 = vmatpush1.bf16.msra.mxu0 0
    %296 = vmatprep.subr.bf16.mxu0 %v282
    %297 = vmatpush1.bf16.msra.mxu0 %v279
    %298 = vmatprep.subr.bf16.mxu0 %v223
    %299 = vmatpush1.bf16.msra.mxu0 %v222
    %300 = vmatprep.subr.bf16.mxu0 0
    %301 = vmatpush2.bf16.msra.mxu0 0
    %302 = vmatprep.subr.bf16.mxu0 0
    %303 = vmatpush2.bf16.msra.mxu0 0
    %304 = vmatprep.subr.bf16.mxu0 0
    %305 = vmatpush2.bf16.msra.mxu0 0
    %306 = vmatprep.subr.bf16.mxu0 0
    %307 = vmatpush2.bf16.msra.mxu0 0
    %308 = vmatprep.subr.bf16.mxu0 0
    %309 = vmatpush2.bf16.msra.mxu0 0
    %310 = vmatprep.subr.bf16.mxu0 0
    %311 = vmatpush2.bf16.msra.mxu0 0
    %312 = vmatprep.subr.bf16.mxu0 0
    %313 = vmatpush2.bf16.msra.mxu0 0
    %314 = vmatprep.subr.bf16.mxu0 0
    %315 = vmatpush2.bf16.msra.mxu0 0
    %316 = vmatprep.mubr.bf16.mxu0 0
    %317 = vmatmul.mubr.bf16.gmra.mxu0 %v230
    %v318 = vpop.f32.mrf.mxu0
    %v319 = vadd.f32 %v123, %v318
    %v320 = vpop.f32.mrf.mxu0
    %v321 = vadd.f32 %v127, %v320
    %v322 = vpop.f32.mrf.mxu0
    %v323 = vadd.f32 %v123, %v322
    %v324 = vpop.f32.mrf.mxu0
    %v325 = vadd.f32 %v127, %v324
    %326 = vmatprep.mubr.bf16.mxu0 0
    %327 = vmatmul.mubr.bf16.gmra.mxu0 %v233
    %v328 = vpop.f32.mrf.mxu0
    %v329 = vadd.f32 %v123, %v328
    %v330 = vpop.f32.mrf.mxu0
    %v331 = vadd.f32 %v127, %v330
    %v332 = vpop.f32.mrf.mxu0
    %v333 = vadd.f32 %v123, %v332
    %v334 = vpop.f32.mrf.mxu0
    %v335 = vadd.f32 %v127, %v334
    %336 = vmatprep.mubr.bf16.mxu0 0
    %337 = vmatmul.mubr.bf16.gmra.mxu0 %v236
    %v338 = vpop.f32.mrf.mxu0
    %v339 = vadd.f32 %v123, %v338
    %v340 = vpop.f32.mrf.mxu0
    %v341 = vadd.f32 %v127, %v340
    %v342 = vpop.f32.mrf.mxu0
    %v343 = vadd.f32 %v123, %v342
    %v344 = vpop.f32.mrf.mxu0
    %v345 = vadd.f32 %v127, %v344
    %346 = vmatprep.mubr.bf16.mxu0 0
    %347 = vmatmul.mubr.bf16.gmra.mxu0 %v239
    %v348 = vpop.f32.mrf.mxu0
    %v349 = vadd.f32 %v123, %v348
    %v350 = vpop.f32.mrf.mxu0
    %v351 = vadd.f32 %v127, %v350
    %v352 = vpop.f32.mrf.mxu0
    %v353 = vadd.f32 %v123, %v352
    %v354 = vpop.f32.mrf.mxu0
    %v355 = vadd.f32 %v127, %v354
    %356 = vmatprep.mubr.bf16.mxu0 0
    %357 = vmatmul.mubr.bf16.gmra.mxu0 %v242
    %v358 = vpop.f32.mrf.mxu0
    %v359 = vadd.f32 %v123, %v358
    %v360 = vpop.f32.mrf.mxu0
    %v361 = vadd.f32 %v127, %v360
    %v362 = vpop.f32.mrf.mxu0
    %v363 = vadd.f32 %v123, %v362
    %v364 = vpop.f32.mrf.mxu0
    %v365 = vadd.f32 %v127, %v364
    %366 = vmatprep.mubr.bf16.mxu0 0
    %367 = vmatmul.mubr.bf16.gmra.mxu0 %v245
    %v368 = vpop.f32.mrf.mxu0
    %v369 = vadd.f32 %v123, %v368
    %v370 = vpop.f32.mrf.mxu0
    %v371 = vadd.f32 %v127, %v370
    %v372 = vpop.f32.mrf.mxu0
    %v373 = vadd.f32 %v123, %v372
    %v374 = vpop.f32.mrf.mxu0
    %v375 = vadd.f32 %v127, %v374
    %376 = vmatprep.mubr.bf16.mxu0 0
    %377 = vmatmul.mubr.bf16.gmra.mxu0 %v248
    %v378 = vpop.f32.mrf.mxu0
    %v379 = vadd.f32 %v123, %v378
    %v380 = vpop.f32.mrf.mxu0
    %v381 = vadd.f32 %v127, %v380
    %v382 = vpop.f32.mrf.mxu0
    %v383 = vadd.f32 %v123, %v382
    %v384 = vpop.f32.mrf.mxu0
    %v385 = vadd.f32 %v127, %v384
    %386 = vmatprep.mubr.bf16.mxu0 0
    %387 = vmatmul.mubr.bf16.gmra.mxu0 %v251
    %v388 = vpop.f32.mrf.mxu0
    %v389 = vadd.f32 %v123, %v388
    %v390 = vpop.f32.mrf.mxu0
    %v391 = vadd.f32 %v127, %v390
    %v392 = vpop.f32.mrf.mxu0
    %v393 = vadd.f32 %v123, %v392
    %v394 = vpop.f32.mrf.mxu0
    %v395 = vadd.f32 %v127, %v394
    %396 = vmatprep.mubr.bf16.mxu0 0
    %397 = vmatmul.mubr.bf16.gmra.mxu0 %v254
    %v398 = vpop.f32.mrf.mxu0
    %v399 = vadd.f32 %v123, %v398
    %v400 = vpop.f32.mrf.mxu0
    %v401 = vadd.f32 %v127, %v400
    %v402 = vpop.f32.mrf.mxu0
    %v403 = vadd.f32 %v123, %v402
    %v404 = vpop.f32.mrf.mxu0
    %v405 = vadd.f32 %v127, %v404
    %406 = vmatprep.mubr.bf16.mxu0 0
    %407 = vmatmul.mubr.bf16.gmra.mxu0 %v257
    %v408 = vpop.f32.mrf.mxu0
    %v409 = vadd.f32 %v123, %v408
    %v410 = vpop.f32.mrf.mxu0
    %v411 = vadd.f32 %v127, %v410
    %v412 = vpop.f32.mrf.mxu0
    %v413 = vadd.f32 %v123, %v412
    %v414 = vpop.f32.mrf.mxu0
    %v415 = vadd.f32 %v127, %v414
    %416 = vmatprep.mubr.bf16.mxu0 0
    %417 = vmatmul.mubr.bf16.gmra.mxu0 %v260
    %v418 = vpop.f32.mrf.mxu0
    %v419 = vadd.f32 %v123, %v418
    %v420 = vpop.f32.mrf.mxu0
    %v421 = vadd.f32 %v127, %v420
    %v422 = vpop.f32.mrf.mxu0
    %v423 = vadd.f32 %v123, %v422
    %v424 = vpop.f32.mrf.mxu0
    %v425 = vadd.f32 %v127, %v424
    %426 = vmatprep.mubr.bf16.mxu0 0
    %427 = vmatmul.mubr.bf16.gmra.mxu0 %v263
    %v428 = vpop.f32.mrf.mxu0
    %v429 = vadd.f32 %v123, %v428
    %v430 = vpop.f32.mrf.mxu0
    %v431 = vadd.f32 %v127, %v430
    %v432 = vpop.f32.mrf.mxu0
    %v433 = vadd.f32 %v123, %v432
    %v434 = vpop.f32.mrf.mxu0
    %v435 = vadd.f32 %v127, %v434
    %436 = vmatprep.mubr.bf16.mxu0 0
    %437 = vmatmul.mubr.bf16.gmra.mxu0 %v266
    %v438 = vpop.f32.mrf.mxu0
    %v439 = vadd.f32 %v123, %v438
    %v440 = vpop.f32.mrf.mxu0
    %v441 = vadd.f32 %v127, %v440
    %v442 = vpop.f32.mrf.mxu0
    %v443 = vadd.f32 %v123, %v442
    %v444 = vpop.f32.mrf.mxu0
    %v445 = vadd.f32 %v127, %v444
    %446 = vmatprep.mubr.bf16.mxu0 0
    %447 = vmatmul.mubr.bf16.gmra.mxu0 %v269
    %v448 = vpop.f32.mrf.mxu0
    %v449 = vadd.f32 %v123, %v448
    %v450 = vpop.f32.mrf.mxu0
    %v451 = vadd.f32 %v127, %v450
    %v452 = vpop.f32.mrf.mxu0
    %v453 = vadd.f32 %v123, %v452
    %v454 = vpop.f32.mrf.mxu0
    %v455 = vadd.f32 %v127, %v454
    %456 = vmatprep.mubr.bf16.mxu0 0
    %457 = vmatmul.mubr.bf16.gmra.mxu0 %v272
    %v458 = vpop.f32.mrf.mxu0
    %v459 = vadd.f32 %v123, %v458
    %v460 = vpop.f32.mrf.mxu0
    %v461 = vadd.f32 %v127, %v460
    %v462 = vpop.f32.mrf.mxu0
    %v463 = vadd.f32 %v123, %v462
    %v464 = vpop.f32.mrf.mxu0
    %v465 = vadd.f32 %v127, %v464
    %466 = vmatprep.mubr.bf16.mxu0 0
    %467 = vmatmul.mubr.bf16.gmra.mxu0 %v275
    %v468 = vpop.f32.mrf.mxu0
    %v469 = vadd.f32 %v123, %v468
    %v470 = vpop.f32.mrf.mxu0
    %v471 = vadd.f32 %v127, %v470
    %v472 = vpop.f32.mrf.mxu0
    %v473 = vadd.f32 %v123, %v472
    %v474 = vpop.f32.mrf.mxu0
    %v475 = vadd.f32 %v127, %v474
    %476 = vdwg.mxu0
    %v477 = vmax.f32 %v319, 0.0
    %v478 = vmax.f32 %v321, 0.0
    %v479 = vmax.f32 %v323, 0.0
    %v480 = vmax.f32 %v325, 0.0
    %v481 = vmax.f32 %v329, 0.0
    %v482 = vmax.f32 %v331, 0.0
    %v483 = vmax.f32 %v333, 0.0
    %v484 = vmax.f32 %v335, 0.0
    %v485 = vmax.f32 %v339, 0.0
    %v486 = vmax.f32 %v341, 0.0
    %v487 = vmax.f32 %v343, 0.0
    %v488 = vmax.f32 %v345, 0.0
    %v489 = vmax.f32 %v349, 0.0
    %v490 = vmax.f32 %v351, 0.0
    %v491 = vmax.f32 %v353, 0.0
    %v492 = vmax.f32 %v355, 0.0
    %v493 = vmax.f32 %v359, 0.0
    %v494 = vmax.f32 %v361, 0.0
    %v495 = vmax.f32 %v363, 0.0
    %v496 = vmax.f32 %v365, 0.0
    %v497 = vmax.f32 %v369, 0.0
    %v498 = vmax.f32 %v371, 0.0
    %v499 = vmax.f32 %v373, 0.0
    %v500 = vmax.f32 %v375, 0.0
    %v501 = vmax.f32 %v379, 0.0
    %v502 = vmax.f32 %v381, 0.0
    %v503 = vmax.f32 %v383, 0.0
    %v504 = vmax.f32 %v385, 0.0
    %v505 = vmax.f32 %v389, 0.0
    %v506 = vmax.f32 %v391, 0.0
    %v507 = vmax.f32 %v393, 0.0
    %v508 = vmax.f32 %v395, 0.0
    %v509 = vmax.f32 %v399, 0.0
    %v510 = vmax.f32 %v401, 0.0
    %v511 = vmax.f32 %v403, 0.0
    %v512 = vmax.f32 %v405, 0.0
    %v513 = vmax.f32 %v409, 0.0
    %v514 = vmax.f32 %v411, 0.0
    %v515 = vmax.f32 %v413, 0.0
    %v516 = vmax.f32 %v415, 0.0
    %v517 = vmax.f32 %v419, 0.0
    %v518 = vmax.f32 %v421, 0.0
    %v519 = vmax.f32 %v423, 0.0
    %v520 = vmax.f32 %v425, 0.0
    %v521 = vmax.f32 %v429, 0.0
    %v522 = vmax.f32 %v431, 0.0
    %v523 = vmax.f32 %v433, 0.0
    %v524 = vmax.f32 %v435, 0.0
    %v525 = vmax.f32 %v439, 0.0
    %v526 = vmax.f32 %v441, 0.0
    %v527 = vmax.f32 %v443, 0.0
    %v528 = vmax.f32 %v445, 0.0
    %v529 = vmax.f32 %v449, 0.0
    %v530 = vmax.f32 %v451, 0.0
    %v531 = vmax.f32 %v453, 0.0
    %v532 = vmax.f32 %v455, 0.0
    %v533 = vmax.f32 %v459, 0.0
    %v534 = vmax.f32 %v461, 0.0
    %v535 = vmax.f32 %v463, 0.0
    %v536 = vmax.f32 %v465, 0.0
    %v537 = vmax.f32 %v469, 0.0
    %v538 = vmax.f32 %v471, 0.0
    %v539 = vmax.f32 %v473, 0.0
    %v540 = vmax.f32 %v475, 0.0
    %v541 = vpack.c.bf16 %v479, %v477
    %v542 = vpack.c.bf16 %v480, %v478
    %v543 = vpack.c.bf16 %v483, %v481
    %v544 = vpack.c.bf16 %v484, %v482
    %v545 = vpack.c.bf16 %v487, %v485
    %v546 = vpack.c.bf16 %v488, %v486
    %v547 = vpack.c.bf16 %v491, %v489
    %v548 = vpack.c.bf16 %v492, %v490
    %v549 = vpack.c.bf16 %v495, %v493
    %v550 = vpack.c.bf16 %v496, %v494
    %v551 = vpack.c.bf16 %v499, %v497
    %v552 = vpack.c.bf16 %v500, %v498
    %v553 = vpack.c.bf16 %v503, %v501
    %v554 = vpack.c.bf16 %v504, %v502
    %v555 = vpack.c.bf16 %v507, %v505
    %v556 = vpack.c.bf16 %v508, %v506
    %v557 = vpack.c.bf16 %v511, %v509
    %v558 = vpack.c.bf16 %v512, %v510
    %v559 = vpack.c.bf16 %v515, %v513
    %v560 = vpack.c.bf16 %v516, %v514
    %v561 = vpack.c.bf16 %v519, %v517
    %v562 = vpack.c.bf16 %v520, %v518
    %v563 = vpack.c.bf16 %v523, %v521
    %v564 = vpack.c.bf16 %v524, %v522
    %v565 = vpack.c.bf16 %v527, %v525
    %v566 = vpack.c.bf16 %v528, %v526
    %v567 = vpack.c.bf16 %v531, %v529
    %v568 = vpack.c.bf16 %v532, %v530
    %v569 = vpack.c.bf16 %v535, %v533
    %v570 = vpack.c.bf16 %v536, %v534
    %v571 = vpack.c.bf16 %v539, %v537
    %v572 = vpack.c.bf16 %v540, %v538
    %v573 = vld [vmem:[#allocation3] sm:$0xff]
    %v574 = vld [vmem:[#allocation3 + $0x8] sm:$0xff]
    %v575 = vld [vmem:[#allocation3 + $0x10] sm:$0xff]
    %v576 = vld [vmem:[#allocation3 + $0x18] sm:$0xff]
    %v577 = vld [vmem:[#allocation3 + $0x20] sm:$0xff]
    %v578 = vld [vmem:[#allocation3 + $0x28] sm:$0xff]
    %v579 = vld [vmem:[#allocation3 + $0x30] sm:$0xff]
    %v580 = vld [vmem:[#allocation3 + $0x38] sm:$0xff]
    %v581 = vld [vmem:[#allocation3 + $0x40] sm:$0xff]
    %v582 = vld [vmem:[#allocation3 + $0x48] sm:$0xff]
    %v583 = vld [vmem:[#allocation3 + $0x50] sm:$0xff]
    %v584 = vld [vmem:[#allocation3 + $0x58] sm:$0xff]
    %v585 = vld [vmem:[#allocation3 + $0x60] sm:$0xff]
    %v586 = vld [vmem:[#allocation3 + $0x68] sm:$0xff]
    %v587 = vld [vmem:[#allocation3 + $0x70] sm:$0xff]
    %v588 = vld [vmem:[#allocation3 + $0x78] sm:$0xff]
    %v589 = vld [vmem:[#allocation3 + $0x80] sm:$0xff]
    %v590 = vld [vmem:[#allocation3 + $0x88] sm:$0xff]
    %v591 = vld [vmem:[#allocation3 + $0x90] sm:$0xff]
    %v592 = vld [vmem:[#allocation3 + $0x98] sm:$0xff]
    %v593 = vld [vmem:[#allocation3 + $0xa0] sm:$0xff]
    %v594 = vld [vmem:[#allocation3 + $0xa8] sm:$0xff]
    %v595 = vld [vmem:[#allocation3 + $0xb0] sm:$0xff]
    %v596 = vld [vmem:[#allocation3 + $0xb8] sm:$0xff]
    %v597 = vld [vmem:[#allocation3 + $0xc0] sm:$0xff]
    %v598 = vld [vmem:[#allocation3 + $0xc8] sm:$0xff]
    %v599 = vld [vmem:[#allocation3 + $0xd0] sm:$0xff]
    %v600 = vld [vmem:[#allocation3 + $0xd8] sm:$0xff]
    %v601 = vld [vmem:[#allocation3 + $0xe0] sm:$0xff]
    %v602 = vld [vmem:[#allocation3 + $0xe8] sm:$0xff]
    %v603 = vld [vmem:[#allocation3 + $0xf0] sm:$0xff]
    %v604 = vld [vmem:[#allocation3 + $0xf8] sm:$0xff]
    %v605 = vld [vmem:[#allocation3 + $0x100] sm:$0xff]
    %v606 = vld [vmem:[#allocation3 + $0x108] sm:$0xff]
    %v607 = vld [vmem:[#allocation3 + $0x110] sm:$0xff]
    %v608 = vld [vmem:[#allocation3 + $0x118] sm:$0xff]
    %v609 = vld [vmem:[#allocation3 + $0x120] sm:$0xff]
    %v610 = vld [vmem:[#allocation3 + $0x128] sm:$0xff]
    %v611 = vld [vmem:[#allocation3 + $0x130] sm:$0xff]
    %v612 = vld [vmem:[#allocation3 + $0x138] sm:$0xff]
    %v613 = vld [vmem:[#allocation3 + $0x140] sm:$0xff]
    %v614 = vld [vmem:[#allocation3 + $0x148] sm:$0xff]
    %v615 = vld [vmem:[#allocation3 + $0x150] sm:$0xff]
    %v616 = vld [vmem:[#allocation3 + $0x158] sm:$0xff]
    %v617 = vld [vmem:[#allocation3 + $0x160] sm:$0xff]
    %v618 = vld [vmem:[#allocation3 + $0x168] sm:$0xff]
    %v619 = vld [vmem:[#allocation3 + $0x170] sm:$0xff]
    %v620 = vld [vmem:[#allocation3 + $0x178] sm:$0xff]
    %v621 = vld [vmem:[#allocation3 + $0x180] sm:$0xff]
    %v622 = vld [vmem:[#allocation3 + $0x188] sm:$0xff]
    %v623 = vld [vmem:[#allocation3 + $0x190] sm:$0xff]
    %v624 = vld [vmem:[#allocation3 + $0x198] sm:$0xff]
    %v625 = vld [vmem:[#allocation3 + $0x1a0] sm:$0xff]
    %v626 = vld [vmem:[#allocation3 + $0x1a8] sm:$0xff]
    %v627 = vld [vmem:[#allocation3 + $0x1b0] sm:$0xff]
    %v628 = vld [vmem:[#allocation3 + $0x1b8] sm:$0xff]
    %v629 = vld [vmem:[#allocation3 + $0x1c0] sm:$0xff]
    %v630 = vld [vmem:[#allocation3 + $0x1c8] sm:$0xff]
    %v631 = vld [vmem:[#allocation3 + $0x1d0] sm:$0xff]
    %v632 = vld [vmem:[#allocation3 + $0x1d8] sm:$0xff]
    %v633 = vld [vmem:[#allocation3 + $0x1e0] sm:$0xff]
    %v634 = vld [vmem:[#allocation3 + $0x1e8] sm:$0xff]
    %v635 = vld [vmem:[#allocation3 + $0x1f0] sm:$0xff]
    %v636 = vld [vmem:[#allocation3 + $0x1f8] sm:$0xff]
    %v637 = vld [vmem:[%s4] sm:$0xf]
    %v639 = vlaneseq
    %v640 = vshrl.u32 %v639, 7
    %v641 = vsub.s32 0, %v640
    %v642 = vrot.slane %v637, %v641
    %v643 = vlaneseq
    %v644 = vshrl.u32 %v643, 7
    %v645 = vsub.s32 1, %v644
    %v646 = vrot.slane %v637, %v645
    %v647 = vlaneseq
    %v648 = vshrl.u32 %v647, 7
    %v649 = vsub.s32 2, %v648
    %v650 = vrot.slane %v637, %v649
    %v651 = vlaneseq
    %v652 = vshrl.u32 %v651, 7
    %v653 = vsub.s32 3, %v652
    %v654 = vrot.slane %v637, %v653
    %v723 = vunpack.c.l.b16 %v573
    %v724 = vunpack.c.h.b16 %v573
    %v725 = vunpack.c.l.b16 %v574
    %v726 = vunpack.c.h.b16 %v574
    %v727 = vunpack.c.l.b16 %v575
    %v728 = vunpack.c.h.b16 %v575
    %v729 = vunpack.c.l.b16 %v576
    %v730 = vunpack.c.h.b16 %v576
    %v731 = vunpack.c.l.b16 %v577
    %v732 = vunpack.c.h.b16 %v577
    %v733 = vunpack.c.l.b16 %v578
    %v734 = vunpack.c.h.b16 %v578
    %v735 = vunpack.c.l.b16 %v579
    %v736 = vunpack.c.h.b16 %v579
    %v737 = vunpack.c.l.b16 %v580
    %v738 = vunpack.c.h.b16 %v580
    %v739 = vunpack.c.l.b16 %v581
    %v740 = vunpack.c.h.b16 %v581
    %v741 = vunpack.c.l.b16 %v582
    %v742 = vunpack.c.h.b16 %v582
    %v743 = vunpack.c.l.b16 %v583
    %v744 = vunpack.c.h.b16 %v583
    %v745 = vunpack.c.l.b16 %v584
    %v746 = vunpack.c.h.b16 %v584
    %v747 = vunpack.c.l.b16 %v585
    %v748 = vunpack.c.h.b16 %v585
    %v749 = vunpack.c.l.b16 %v586
    %v750 = vunpack.c.h.b16 %v586
    %v751 = vunpack.c.l.b16 %v587
    %v752 = vunpack.c.h.b16 %v587
    %v753 = vunpack.c.l.b16 %v588
    %v754 = vunpack.c.h.b16 %v588
    %v755 = vunpack.c.l.b16 %v589
    %v756 = vunpack.c.h.b16 %v589
    %v757 = vunpack.c.l.b16 %v590
    %v758 = vunpack.c.h.b16 %v590
    %v759 = vunpack.c.l.b16 %v591
    %v760 = vunpack.c.h.b16 %v591
    %v761 = vunpack.c.l.b16 %v592
    %v762 = vunpack.c.h.b16 %v592
    %v763 = vunpack.c.l.b16 %v593
    %v764 = vunpack.c.h.b16 %v593
    %v765 = vunpack.c.l.b16 %v594
    %v766 = vunpack.c.h.b16 %v594
    %v767 = vunpack.c.l.b16 %v595
    %v768 = vunpack.c.h.b16 %v595
    %v769 = vunpack.c.l.b16 %v596
    %v770 = vunpack.c.h.b16 %v596
    %v771 = vunpack.c.l.b16 %v597
    %v772 = vunpack.c.h.b16 %v597
    %v773 = vunpack.c.l.b16 %v598
    %v774 = vunpack.c.h.b16 %v598
    %v775 = vunpack.c.l.b16 %v599
    %v776 = vunpack.c.h.b16 %v599
    %v777 = vunpack.c.l.b16 %v600
    %v778 = vunpack.c.h.b16 %v600
    %v779 = vunpack.c.l.b16 %v601
    %v780 = vunpack.c.h.b16 %v601
    %v781 = vunpack.c.l.b16 %v602
    %v782 = vunpack.c.h.b16 %v602
    %v783 = vunpack.c.l.b16 %v603
    %v784 = vunpack.c.h.b16 %v603
    %v785 = vunpack.c.l.b16 %v604
    %v786 = vunpack.c.h.b16 %v604
    %v787 = vunpack.c.l.b16 %v605
    %v788 = vunpack.c.h.b16 %v605
    %v789 = vunpack.c.l.b16 %v606
    %v790 = vunpack.c.h.b16 %v606
    %v791 = vunpack.c.l.b16 %v607
    %v792 = vunpack.c.h.b16 %v607
    %v793 = vunpack.c.l.b16 %v608
    %v794 = vunpack.c.h.b16 %v608
    %v795 = vunpack.c.l.b16 %v609
    %v796 = vunpack.c.h.b16 %v609
    %v797 = vunpack.c.l.b16 %v610
    %v798 = vunpack.c.h.b16 %v610
    %v799 = vunpack.c.l.b16 %v611
    %v800 = vunpack.c.h.b16 %v611
    %v801 = vunpack.c.l.b16 %v612
    %v802 = vunpack.c.h.b16 %v612
    %v803 = vunpack.c.l.b16 %v613
    %v804 = vunpack.c.h.b16 %v613
    %v805 = vunpack.c.l.b16 %v614
    %v806 = vunpack.c.h.b16 %v614
    %v807 = vunpack.c.l.b16 %v615
    %v808 = vunpack.c.h.b16 %v615
    %v809 = vunpack.c.l.b16 %v616
    %v810 = vunpack.c.h.b16 %v616
    %v811 = vunpack.c.l.b16 %v617
    %v812 = vunpack.c.h.b16 %v617
    %v813 = vunpack.c.l.b16 %v618
    %v814 = vunpack.c.h.b16 %v618
    %v815 = vunpack.c.l.b16 %v619
    %v816 = vunpack.c.h.b16 %v619
    %v817 = vunpack.c.l.b16 %v620
    %v818 = vunpack.c.h.b16 %v620
    %v819 = vunpack.c.l.b16 %v621
    %v820 = vunpack.c.h.b16 %v621
    %v821 = vunpack.c.l.b16 %v622
    %v822 = vunpack.c.h.b16 %v622
    %v823 = vunpack.c.l.b16 %v623
    %v824 = vunpack.c.h.b16 %v623
    %v825 = vunpack.c.l.b16 %v624
    %v826 = vunpack.c.h.b16 %v624
    %v827 = vunpack.c.l.b16 %v625
    %v828 = vunpack.c.h.b16 %v625
    %v829 = vunpack.c.l.b16 %v626
    %v830 = vunpack.c.h.b16 %v626
    %v831 = vunpack.c.l.b16 %v627
    %v832 = vunpack.c.h.b16 %v627
    %v833 = vunpack.c.l.b16 %v628
    %v834 = vunpack.c.h.b16 %v628
    %v835 = vunpack.c.l.b16 %v629
    %v836 = vunpack.c.h.b16 %v629
    %v837 = vunpack.c.l.b16 %v630
    %v838 = vunpack.c.h.b16 %v630
    %v839 = vunpack.c.l.b16 %v631
    %v840 = vunpack.c.h.b16 %v631
    %v841 = vunpack.c.l.b16 %v632
    %v842 = vunpack.c.h.b16 %v632
    %v843 = vunpack.c.l.b16 %v633
    %v844 = vunpack.c.h.b16 %v633
    %v845 = vunpack.c.l.b16 %v634
    %v846 = vunpack.c.h.b16 %v634
    %v847 = vunpack.c.l.b16 %v635
    %v848 = vunpack.c.h.b16 %v635
    %v849 = vunpack.c.l.b16 %v636
    %v850 = vunpack.c.h.b16 %v636
    %v851 = vpack.c.b16 %v727, %v723
    %v852 = vpack.c.b16 %v728, %v724
    %v853 = vpack.c.b16 %v729, %v725
    %v854 = vpack.c.b16 %v730, %v726
    %v855 = vpack.c.b16 %v735, %v731
    %v856 = vpack.c.b16 %v736, %v732
    %v857 = vpack.c.b16 %v737, %v733
    %v858 = vpack.c.b16 %v738, %v734
    %v859 = vpack.c.b16 %v743, %v739
    %v860 = vpack.c.b16 %v744, %v740
    %v861 = vpack.c.b16 %v745, %v741
    %v862 = vpack.c.b16 %v746, %v742
    %v863 = vpack.c.b16 %v751, %v747
    %v864 = vpack.c.b16 %v752, %v748
    %v865 = vpack.c.b16 %v753, %v749
    %v866 = vpack.c.b16 %v754, %v750
    %v867 = vpack.c.b16 %v759, %v755
    %v868 = vpack.c.b16 %v760, %v756
    %v869 = vpack.c.b16 %v761, %v757
    %v870 = vpack.c.b16 %v762, %v758
    %v871 = vpack.c.b16 %v767, %v763
    %v872 = vpack.c.b16 %v768, %v764
    %v873 = vpack.c.b16 %v769, %v765
    %v874 = vpack.c.b16 %v770, %v766
    %v875 = vpack.c.b16 %v775, %v771
    %v876 = vpack.c.b16 %v776, %v772
    %v877 = vpack.c.b16 %v777, %v773
    %v878 = vpack.c.b16 %v778, %v774
    %v879 = vpack.c.b16 %v783, %v779
    %v880 = vpack.c.b16 %v784, %v780
    %v881 = vpack.c.b16 %v785, %v781
    %v882 = vpack.c.b16 %v786, %v782
    %v883 = vpack.c.b16 %v791, %v787
    %v884 = vpack.c.b16 %v792, %v788
    %v885 = vpack.c.b16 %v793, %v789
    %v886 = vpack.c.b16 %v794, %v790
    %v887 = vpack.c.b16 %v799, %v795
    %v888 = vpack.c.b16 %v800, %v796
    %v889 = vpack.c.b16 %v801, %v797
    %v890 = vpack.c.b16 %v802, %v798
    %v891 = vpack.c.b16 %v807, %v803
    %v892 = vpack.c.b16 %v808, %v804
    %v893 = vpack.c.b16 %v809, %v805
    %v894 = vpack.c.b16 %v810, %v806
    %v895 = vpack.c.b16 %v815, %v811
    %v896 = vpack.c.b16 %v816, %v812
    %v897 = vpack.c.b16 %v817, %v813
    %v898 = vpack.c.b16 %v818, %v814
    %v899 = vpack.c.b16 %v823, %v819
    %v900 = vpack.c.b16 %v824, %v820
    %v901 = vpack.c.b16 %v825, %v821
    %v902 = vpack.c.b16 %v826, %v822
    %v903 = vpack.c.b16 %v831, %v827
    %v904 = vpack.c.b16 %v832, %v828
    %v905 = vpack.c.b16 %v833, %v829
    %v906 = vpack.c.b16 %v834, %v830
    %v907 = vpack.c.b16 %v839, %v835
    %v908 = vpack.c.b16 %v840, %v836
    %v909 = vpack.c.b16 %v841, %v837
    %v910 = vpack.c.b16 %v842, %v838
    %v911 = vpack.c.b16 %v847, %v843
    %v912 = vpack.c.b16 %v848, %v844
    %v913 = vpack.c.b16 %v849, %v845
    %v914 = vpack.c.b16 %v850, %v846
    %979 = vmatprep.subr.bf16.mxu0 %v880
    %980 = vmatpush1.bf16.msra.mxu0 %v879
    %981 = vmatprep.subr.bf16.mxu0 %v876
    %982 = vmatpush1.bf16.msra.mxu0 %v875
    %983 = vmatprep.subr.bf16.mxu0 %v872
    %984 = vmatpush1.bf16.msra.mxu0 %v871
    %985 = vmatprep.subr.bf16.mxu0 %v868
    %986 = vmatpush1.bf16.msra.mxu0 %v867
    %987 = vmatprep.subr.bf16.mxu0 %v864
    %988 = vmatpush1.bf16.msra.mxu0 %v863
    %989 = vmatprep.subr.bf16.mxu0 %v860
    %990 = vmatpush1.bf16.msra.mxu0 %v859
    %991 = vmatprep.subr.bf16.mxu0 %v856
    %992 = vmatpush1.bf16.msra.mxu0 %v855
    %993 = vmatprep.subr.bf16.mxu0 %v852
    %994 = vmatpush1.bf16.msra.mxu0 %v851
    %995 = vmatprep.subr.bf16.mxu0 %v912
    %996 = vmatpush2.bf16.msra.mxu0 %v911
    %997 = vmatprep.subr.bf16.mxu0 %v908
    %998 = vmatpush2.bf16.msra.mxu0 %v907
    %999 = vmatprep.subr.bf16.mxu0 %v904
    %1000 = vmatpush2.bf16.msra.mxu0 %v903
    %1001 = vmatprep.subr.bf16.mxu0 %v900
    %1002 = vmatpush2.bf16.msra.mxu0 %v899
    %1003 = vmatprep.subr.bf16.mxu0 %v896
    %1004 = vmatpush2.bf16.msra.mxu0 %v895
    %1005 = vmatprep.subr.bf16.mxu0 %v892
    %1006 = vmatpush2.bf16.msra.mxu0 %v891
    %1007 = vmatprep.subr.bf16.mxu0 %v888
    %1008 = vmatpush2.bf16.msra.mxu0 %v887
    %1009 = vmatprep.subr.bf16.mxu0 %v884
    %1010 = vmatpush2.bf16.msra.mxu0 %v883
    %1011 = vmatprep.mubr.bf16.mxu0 %v542
    %1012 = vmatmul.mubr.bf16.gmra.mxu0 %v541
    %v1013 = vpop.f32.mrf.mxu0
    %v1014 = vadd.f32 %v642, %v1013
    %v1015 = vpop.f32.mrf.mxu0
    %v1016 = vadd.f32 %v646, %v1015
    %v1017 = vpop.f32.mrf.mxu0
    %v1018 = vadd.f32 %v642, %v1017
    %v1019 = vpop.f32.mrf.mxu0
    %v1020 = vadd.f32 %v646, %v1019
    %1021 = vmatprep.mubr.bf16.mxu0 %v544
    %1022 = vmatmul.mubr.bf16.gmra.mxu0 %v543
    %v1023 = vpop.f32.mrf.mxu0
    %v1024 = vadd.f32 %v642, %v1023
    %v1025 = vpop.f32.mrf.mxu0
    %v1026 = vadd.f32 %v646, %v1025
    %v1027 = vpop.f32.mrf.mxu0
    %v1028 = vadd.f32 %v642, %v1027
    %v1029 = vpop.f32.mrf.mxu0
    %v1030 = vadd.f32 %v646, %v1029
    %1031 = vmatprep.mubr.bf16.mxu0 %v546
    %1032 = vmatmul.mubr.bf16.gmra.mxu0 %v545
    %v1033 = vpop.f32.mrf.mxu0
    %v1034 = vadd.f32 %v642, %v1033
    %v1035 = vpop.f32.mrf.mxu0
    %v1036 = vadd.f32 %v646, %v1035
    %v1037 = vpop.f32.mrf.mxu0
    %v1038 = vadd.f32 %v642, %v1037
    %v1039 = vpop.f32.mrf.mxu0
    %v1040 = vadd.f32 %v646, %v1039
    %1041 = vmatprep.mubr.bf16.mxu0 %v548
    %1042 = vmatmul.mubr.bf16.gmra.mxu0 %v547
    %v1043 = vpop.f32.mrf.mxu0
    %v1044 = vadd.f32 %v642, %v1043
    %v1045 = vpop.f32.mrf.mxu0
    %v1046 = vadd.f32 %v646, %v1045
    %v1047 = vpop.f32.mrf.mxu0
    %v1048 = vadd.f32 %v642, %v1047
    %v1049 = vpop.f32.mrf.mxu0
    %v1050 = vadd.f32 %v646, %v1049
    %1051 = vmatprep.mubr.bf16.mxu0 %v550
    %1052 = vmatmul.mubr.bf16.gmra.mxu0 %v549
    %v1053 = vpop.f32.mrf.mxu0
    %v1054 = vadd.f32 %v642, %v1053
    %v1055 = vpop.f32.mrf.mxu0
    %v1056 = vadd.f32 %v646, %v1055
    %v1057 = vpop.f32.mrf.mxu0
    %v1058 = vadd.f32 %v642, %v1057
    %v1059 = vpop.f32.mrf.mxu0
    %v1060 = vadd.f32 %v646, %v1059
    %1061 = vmatprep.mubr.bf16.mxu0 %v552
    %1062 = vmatmul.mubr.bf16.gmra.mxu0 %v551
    %v1063 = vpop.f32.mrf.mxu0
    %v1064 = vadd.f32 %v642, %v1063
    %v1065 = vpop.f32.mrf.mxu0
    %v1066 = vadd.f32 %v646, %v1065
    %v1067 = vpop.f32.mrf.mxu0
    %v1068 = vadd.f32 %v642, %v1067
    %v1069 = vpop.f32.mrf.mxu0
    %v1070 = vadd.f32 %v646, %v1069
    %1071 = vmatprep.mubr.bf16.mxu0 %v554
    %1072 = vmatmul.mubr.bf16.gmra.mxu0 %v553
    %v1073 = vpop.f32.mrf.mxu0
    %v1074 = vadd.f32 %v642, %v1073
    %v1075 = vpop.f32.mrf.mxu0
    %v1076 = vadd.f32 %v646, %v1075
    %v1077 = vpop.f32.mrf.mxu0
    %v1078 = vadd.f32 %v642, %v1077
    %v1079 = vpop.f32.mrf.mxu0
    %v1080 = vadd.f32 %v646, %v1079
    %1081 = vmatprep.mubr.bf16.mxu0 %v556
    %1082 = vmatmul.mubr.bf16.gmra.mxu0 %v555
    %v1083 = vpop.f32.mrf.mxu0
    %v1084 = vadd.f32 %v642, %v1083
    %v1085 = vpop.f32.mrf.mxu0
    %v1086 = vadd.f32 %v646, %v1085
    %v1087 = vpop.f32.mrf.mxu0
    %v1088 = vadd.f32 %v642, %v1087
    %v1089 = vpop.f32.mrf.mxu0
    %v1090 = vadd.f32 %v646, %v1089
    %1091 = vmatprep.mubr.bf16.mxu0 %v558
    %1092 = vmatmul.mubr.bf16.gmra.mxu0 %v557
    %v1093 = vpop.f32.mrf.mxu0
    %v1094 = vadd.f32 %v642, %v1093
    %v1095 = vpop.f32.mrf.mxu0
    %v1096 = vadd.f32 %v646, %v1095
    %v1097 = vpop.f32.mrf.mxu0
    %v1098 = vadd.f32 %v642, %v1097
    %v1099 = vpop.f32.mrf.mxu0
    %v1100 = vadd.f32 %v646, %v1099
    %1101 = vmatprep.mubr.bf16.mxu0 %v560
    %1102 = vmatmul.mubr.bf16.gmra.mxu0 %v559
    %v1103 = vpop.f32.mrf.mxu0
    %v1104 = vadd.f32 %v642, %v1103
    %v1105 = vpop.f32.mrf.mxu0
    %v1106 = vadd.f32 %v646, %v1105
    %v1107 = vpop.f32.mrf.mxu0
    %v1108 = vadd.f32 %v642, %v1107
    %v1109 = vpop.f32.mrf.mxu0
    %v1110 = vadd.f32 %v646, %v1109
    %1111 = vmatprep.mubr.bf16.mxu0 %v562
    %1112 = vmatmul.mubr.bf16.gmra.mxu0 %v561
    %v1113 = vpop.f32.mrf.mxu0
    %v1114 = vadd.f32 %v642, %v1113
    %v1115 = vpop.f32.mrf.mxu0
    %v1116 = vadd.f32 %v646, %v1115
    %v1117 = vpop.f32.mrf.mxu0
    %v1118 = vadd.f32 %v642, %v1117
    %v1119 = vpop.f32.mrf.mxu0
    %v1120 = vadd.f32 %v646, %v1119
    %1121 = vmatprep.mubr.bf16.mxu0 %v564
    %1122 = vmatmul.mubr.bf16.gmra.mxu0 %v563
    %v1123 = vpop.f32.mrf.mxu0
    %v1124 = vadd.f32 %v642, %v1123
    %v1125 = vpop.f32.mrf.mxu0
    %v1126 = vadd.f32 %v646, %v1125
    %v1127 = vpop.f32.mrf.mxu0
    %v1128 = vadd.f32 %v642, %v1127
    %v1129 = vpop.f32.mrf.mxu0
    %v1130 = vadd.f32 %v646, %v1129
    %1131 = vmatprep.mubr.bf16.mxu0 %v566
    %1132 = vmatmul.mubr.bf16.gmra.mxu0 %v565
    %v1133 = vpop.f32.mrf.mxu0
    %v1134 = vadd.f32 %v642, %v1133
    %v1135 = vpop.f32.mrf.mxu0
    %v1136 = vadd.f32 %v646, %v1135
    %v1137 = vpop.f32.mrf.mxu0
    %v1138 = vadd.f32 %v642, %v1137
    %v1139 = vpop.f32.mrf.mxu0
    %v1140 = vadd.f32 %v646, %v1139
    %1141 = vmatprep.mubr.bf16.mxu0 %v568
    %1142 = vmatmul.mubr.bf16.gmra.mxu0 %v567
    %v1143 = vpop.f32.mrf.mxu0
    %v1144 = vadd.f32 %v642, %v1143
    %v1145 = vpop.f32.mrf.mxu0
    %v1146 = vadd.f32 %v646, %v1145
    %v1147 = vpop.f32.mrf.mxu0
    %v1148 = vadd.f32 %v642, %v1147
    %v1149 = vpop.f32.mrf.mxu0
    %v1150 = vadd.f32 %v646, %v1149
    %1151 = vmatprep.mubr.bf16.mxu0 %v570
    %1152 = vmatmul.mubr.bf16.gmra.mxu0 %v569
    %v1153 = vpop.f32.mrf.mxu0
    %v1154 = vadd.f32 %v642, %v1153
    %v1155 = vpop.f32.mrf.mxu0
    %v1156 = vadd.f32 %v646, %v1155
    %v1157 = vpop.f32.mrf.mxu0
    %v1158 = vadd.f32 %v642, %v1157
    %v1159 = vpop.f32.mrf.mxu0
    %v1160 = vadd.f32 %v646, %v1159
    %1161 = vmatprep.mubr.bf16.mxu0 %v572
    %1162 = vmatmul.mubr.bf16.gmra.mxu0 %v571
    %v1163 = vpop.f32.mrf.mxu0
    %v1164 = vadd.f32 %v642, %v1163
    %v1165 = vpop.f32.mrf.mxu0
    %v1166 = vadd.f32 %v646, %v1165
    %v1167 = vpop.f32.mrf.mxu0
    %v1168 = vadd.f32 %v642, %v1167
    %v1169 = vpop.f32.mrf.mxu0
    %v1170 = vadd.f32 %v646, %v1169
    %1171 = vdwg.mxu0
    %1172 = vmatprep.subr.bf16.mxu0 %v882
    %1173 = vmatpush1.bf16.msra.mxu0 %v881
    %1174 = vmatprep.subr.bf16.mxu0 %v878
    %1175 = vmatpush1.bf16.msra.mxu0 %v877
    %1176 = vmatprep.subr.bf16.mxu0 %v874
    %1177 = vmatpush1.bf16.msra.mxu0 %v873
    %1178 = vmatprep.subr.bf16.mxu0 %v870
    %1179 = vmatpush1.bf16.msra.mxu0 %v869
    %1180 = vmatprep.subr.bf16.mxu0 %v866
    %1181 = vmatpush1.bf16.msra.mxu0 %v865
    %1182 = vmatprep.subr.bf16.mxu0 %v862
    %1183 = vmatpush1.bf16.msra.mxu0 %v861
    %1184 = vmatprep.subr.bf16.mxu0 %v858
    %1185 = vmatpush1.bf16.msra.mxu0 %v857
    %1186 = vmatprep.subr.bf16.mxu0 %v854
    %1187 = vmatpush1.bf16.msra.mxu0 %v853
    %1188 = vmatprep.subr.bf16.mxu0 %v914
    %1189 = vmatpush2.bf16.msra.mxu0 %v913
    %1190 = vmatprep.subr.bf16.mxu0 %v910
    %1191 = vmatpush2.bf16.msra.mxu0 %v909
    %1192 = vmatprep.subr.bf16.mxu0 %v906
    %1193 = vmatpush2.bf16.msra.mxu0 %v905
    %1194 = vmatprep.subr.bf16.mxu0 %v902
    %1195 = vmatpush2.bf16.msra.mxu0 %v901
    %1196 = vmatprep.subr.bf16.mxu0 %v898
    %1197 = vmatpush2.bf16.msra.mxu0 %v897
    %1198 = vmatprep.subr.bf16.mxu0 %v894
    %1199 = vmatpush2.bf16.msra.mxu0 %v893
    %1200 = vmatprep.subr.bf16.mxu0 %v890
    %1201 = vmatpush2.bf16.msra.mxu0 %v889
    %1202 = vmatprep.subr.bf16.mxu0 %v886
    %1203 = vmatpush2.bf16.msra.mxu0 %v885
    %1204 = vmatprep.mubr.bf16.mxu0 %v542
    %1205 = vmatmul.mubr.bf16.gmra.mxu0 %v541
    %v1206 = vpop.f32.mrf.mxu0
    %v1207 = vadd.f32 %v650, %v1206
    %v1208 = vpop.f32.mrf.mxu0
    %v1209 = vadd.f32 %v654, %v1208
    %v1210 = vpop.f32.mrf.mxu0
    %v1211 = vadd.f32 %v650, %v1210
    %v1212 = vpop.f32.mrf.mxu0
    %v1213 = vadd.f32 %v654, %v1212
    %1214 = vmatprep.mubr.bf16.mxu0 %v544
    %1215 = vmatmul.mubr.bf16.gmra.mxu0 %v543
    %v1216 = vpop.f32.mrf.mxu0
    %v1217 = vadd.f32 %v650, %v1216
    %v1218 = vpop.f32.mrf.mxu0
    %v1219 = vadd.f32 %v654, %v1218
    %v1220 = vpop.f32.mrf.mxu0
    %v1221 = vadd.f32 %v650, %v1220
    %v1222 = vpop.f32.mrf.mxu0
    %v1223 = vadd.f32 %v654, %v1222
    %1224 = vmatprep.mubr.bf16.mxu0 %v546
    %1225 = vmatmul.mubr.bf16.gmra.mxu0 %v545
    %v1226 = vpop.f32.mrf.mxu0
    %v1227 = vadd.f32 %v650, %v1226
    %v1228 = vpop.f32.mrf.mxu0
    %v1229 = vadd.f32 %v654, %v1228
    %v1230 = vpop.f32.mrf.mxu0
    %v1231 = vadd.f32 %v650, %v1230
    %v1232 = vpop.f32.mrf.mxu0
    %v1233 = vadd.f32 %v654, %v1232
    %1234 = vmatprep.mubr.bf16.mxu0 %v548
    %1235 = vmatmul.mubr.bf16.gmra.mxu0 %v547
    %v1236 = vpop.f32.mrf.mxu0
    %v1237 = vadd.f32 %v650, %v1236
    %v1238 = vpop.f32.mrf.mxu0
    %v1239 = vadd.f32 %v654, %v1238
    %v1240 = vpop.f32.mrf.mxu0
    %v1241 = vadd.f32 %v650, %v1240
    %v1242 = vpop.f32.mrf.mxu0
    %v1243 = vadd.f32 %v654, %v1242
    %1244 = vmatprep.mubr.bf16.mxu0 %v550
    %1245 = vmatmul.mubr.bf16.gmra.mxu0 %v549
    %v1246 = vpop.f32.mrf.mxu0
    %v1247 = vadd.f32 %v650, %v1246
    %v1248 = vpop.f32.mrf.mxu0
    %v1249 = vadd.f32 %v654, %v1248
    %v1250 = vpop.f32.mrf.mxu0
    %v1251 = vadd.f32 %v650, %v1250
    %v1252 = vpop.f32.mrf.mxu0
    %v1253 = vadd.f32 %v654, %v1252
    %1254 = vmatprep.mubr.bf16.mxu0 %v552
    %1255 = vmatmul.mubr.bf16.gmra.mxu0 %v551
    %v1256 = vpop.f32.mrf.mxu0
    %v1257 = vadd.f32 %v650, %v1256
    %v1258 = vpop.f32.mrf.mxu0
    %v1259 = vadd.f32 %v654, %v1258
    %v1260 = vpop.f32.mrf.mxu0
    %v1261 = vadd.f32 %v650, %v1260
    %v1262 = vpop.f32.mrf.mxu0
    %v1263 = vadd.f32 %v654, %v1262
    %1264 = vmatprep.mubr.bf16.mxu0 %v554
    %1265 = vmatmul.mubr.bf16.gmra.mxu0 %v553
    %v1266 = vpop.f32.mrf.mxu0
    %v1267 = vadd.f32 %v650, %v1266
    %v1268 = vpop.f32.mrf.mxu0
    %v1269 = vadd.f32 %v654, %v1268
    %v1270 = vpop.f32.mrf.mxu0
    %v1271 = vadd.f32 %v650, %v1270
    %v1272 = vpop.f32.mrf.mxu0
    %v1273 = vadd.f32 %v654, %v1272
    %1274 = vmatprep.mubr.bf16.mxu0 %v556
    %1275 = vmatmul.mubr.bf16.gmra.mxu0 %v555
    %v1276 = vpop.f32.mrf.mxu0
    %v1277 = vadd.f32 %v650, %v1276
    %v1278 = vpop.f32.mrf.mxu0
    %v1279 = vadd.f32 %v654, %v1278
    %v1280 = vpop.f32.mrf.mxu0
    %v1281 = vadd.f32 %v650, %v1280
    %v1282 = vpop.f32.mrf.mxu0
    %v1283 = vadd.f32 %v654, %v1282
    %1284 = vmatprep.mubr.bf16.mxu0 %v558
    %1285 = vmatmul.mubr.bf16.gmra.mxu0 %v557
    %v1286 = vpop.f32.mrf.mxu0
    %v1287 = vadd.f32 %v650, %v1286
    %v1288 = vpop.f32.mrf.mxu0
    %v1289 = vadd.f32 %v654, %v1288
    %v1290 = vpop.f32.mrf.mxu0
    %v1291 = vadd.f32 %v650, %v1290
    %v1292 = vpop.f32.mrf.mxu0
    %v1293 = vadd.f32 %v654, %v1292
    %1294 = vmatprep.mubr.bf16.mxu0 %v560
    %1295 = vmatmul.mubr.bf16.gmra.mxu0 %v559
    %v1296 = vpop.f32.mrf.mxu0
    %v1297 = vadd.f32 %v650, %v1296
    %v1298 = vpop.f32.mrf.mxu0
    %v1299 = vadd.f32 %v654, %v1298
    %v1300 = vpop.f32.mrf.mxu0
    %v1301 = vadd.f32 %v650, %v1300
    %v1302 = vpop.f32.mrf.mxu0
    %v1303 = vadd.f32 %v654, %v1302
    %1304 = vmatprep.mubr.bf16.mxu0 %v562
    %1305 = vmatmul.mubr.bf16.gmra.mxu0 %v561
    %v1306 = vpop.f32.mrf.mxu0
    %v1307 = vadd.f32 %v650, %v1306
    %v1308 = vpop.f32.mrf.mxu0
    %v1309 = vadd.f32 %v654, %v1308
    %v1310 = vpop.f32.mrf.mxu0
    %v1311 = vadd.f32 %v650, %v1310
    %v1312 = vpop.f32.mrf.mxu0
    %v1313 = vadd.f32 %v654, %v1312
    %1314 = vmatprep.mubr.bf16.mxu0 %v564
    %1315 = vmatmul.mubr.bf16.gmra.mxu0 %v563
    %v1316 = vpop.f32.mrf.mxu0
    %v1317 = vadd.f32 %v650, %v1316
    %v1318 = vpop.f32.mrf.mxu0
    %v1319 = vadd.f32 %v654, %v1318
    %v1320 = vpop.f32.mrf.mxu0
    %v1321 = vadd.f32 %v650, %v1320
    %v1322 = vpop.f32.mrf.mxu0
    %v1323 = vadd.f32 %v654, %v1322
    %1324 = vmatprep.mubr.bf16.mxu0 %v566
    %1325 = vmatmul.mubr.bf16.gmra.mxu0 %v565
    %v1326 = vpop.f32.mrf.mxu0
    %v1327 = vadd.f32 %v650, %v1326
    %v1328 = vpop.f32.mrf.mxu0
    %v1329 = vadd.f32 %v654, %v1328
    %v1330 = vpop.f32.mrf.mxu0
    %v1331 = vadd.f32 %v650, %v1330
    %v1332 = vpop.f32.mrf.mxu0
    %v1333 = vadd.f32 %v654, %v1332
    %1334 = vmatprep.mubr.bf16.mxu0 %v568
    %1335 = vmatmul.mubr.bf16.gmra.mxu0 %v567
    %v1336 = vpop.f32.mrf.mxu0
    %v1337 = vadd.f32 %v650, %v1336
    %v1338 = vpop.f32.mrf.mxu0
    %v1339 = vadd.f32 %v654, %v1338
    %v1340 = vpop.f32.mrf.mxu0
    %v1341 = vadd.f32 %v650, %v1340
    %v1342 = vpop.f32.mrf.mxu0
    %v1343 = vadd.f32 %v654, %v1342
    %1344 = vmatprep.mubr.bf16.mxu0 %v570
    %1345 = vmatmul.mubr.bf16.gmra.mxu0 %v569
    %v1346 = vpop.f32.mrf.mxu0
    %v1347 = vadd.f32 %v650, %v1346
    %v1348 = vpop.f32.mrf.mxu0
    %v1349 = vadd.f32 %v654, %v1348
    %v1350 = vpop.f32.mrf.mxu0
    %v1351 = vadd.f32 %v650, %v1350
    %v1352 = vpop.f32.mrf.mxu0
    %v1353 = vadd.f32 %v654, %v1352
    %1354 = vmatprep.mubr.bf16.mxu0 %v572
    %1355 = vmatmul.mubr.bf16.gmra.mxu0 %v571
    %v1356 = vpop.f32.mrf.mxu0
    %v1357 = vadd.f32 %v650, %v1356
    %v1358 = vpop.f32.mrf.mxu0
    %v1359 = vadd.f32 %v654, %v1358
    %v1360 = vpop.f32.mrf.mxu0
    %v1361 = vadd.f32 %v650, %v1360
    %v1362 = vpop.f32.mrf.mxu0
    %v1363 = vadd.f32 %v654, %v1362
    %1364 = vdwg.mxu0
    %v1365 = vmax.f32 %v1014, 0.0
    %v1366 = vmax.f32 %v1016, 0.0
    %v1367 = vmax.f32 %v1207, 0.0
    %v1368 = vmax.f32 %v1209, 0.0
    %v1369 = vmax.f32 %v1018, 0.0
    %v1370 = vmax.f32 %v1020, 0.0
    %v1371 = vmax.f32 %v1211, 0.0
    %v1372 = vmax.f32 %v1213, 0.0
    %v1373 = vmax.f32 %v1024, 0.0
    %v1374 = vmax.f32 %v1026, 0.0
    %v1375 = vmax.f32 %v1217, 0.0
    %v1376 = vmax.f32 %v1219, 0.0
    %v1377 = vmax.f32 %v1028, 0.0
    %v1378 = vmax.f32 %v1030, 0.0
    %v1379 = vmax.f32 %v1221, 0.0
    %v1380 = vmax.f32 %v1223, 0.0
    %v1381 = vmax.f32 %v1034, 0.0
    %v1382 = vmax.f32 %v1036, 0.0
    %v1383 = vmax.f32 %v1227, 0.0
    %v1384 = vmax.f32 %v1229, 0.0
    %v1385 = vmax.f32 %v1038, 0.0
    %v1386 = vmax.f32 %v1040, 0.0
    %v1387 = vmax.f32 %v1231, 0.0
    %v1388 = vmax.f32 %v1233, 0.0
    %v1389 = vmax.f32 %v1044, 0.0
    %v1390 = vmax.f32 %v1046, 0.0
    %v1391 = vmax.f32 %v1237, 0.0
    %v1392 = vmax.f32 %v1239, 0.0
    %v1393 = vmax.f32 %v1048, 0.0
    %v1394 = vmax.f32 %v1050, 0.0
    %v1395 = vmax.f32 %v1241, 0.0
    %v1396 = vmax.f32 %v1243, 0.0
    %v1397 = vmax.f32 %v1054, 0.0
    %v1398 = vmax.f32 %v1056, 0.0
    %v1399 = vmax.f32 %v1247, 0.0
    %v1400 = vmax.f32 %v1249, 0.0
    %v1401 = vmax.f32 %v1058, 0.0
    %v1402 = vmax.f32 %v1060, 0.0
    %v1403 = vmax.f32 %v1251, 0.0
    %v1404 = vmax.f32 %v1253, 0.0
    %v1405 = vmax.f32 %v1064, 0.0
    %v1406 = vmax.f32 %v1066, 0.0
    %v1407 = vmax.f32 %v1257, 0.0
    %v1408 = vmax.f32 %v1259, 0.0
    %v1409 = vmax.f32 %v1068, 0.0
    %v1410 = vmax.f32 %v1070, 0.0
    %v1411 = vmax.f32 %v1261, 0.0
    %v1412 = vmax.f32 %v1263, 0.0
    %v1413 = vmax.f32 %v1074, 0.0
    %v1414 = vmax.f32 %v1076, 0.0
    %v1415 = vmax.f32 %v1267, 0.0
    %v1416 = vmax.f32 %v1269, 0.0
    %v1417 = vmax.f32 %v1078, 0.0
    %v1418 = vmax.f32 %v1080, 0.0
    %v1419 = vmax.f32 %v1271, 0.0
    %v1420 = vmax.f32 %v1273, 0.0
    %v1421 = vmax.f32 %v1084, 0.0
    %v1422 = vmax.f32 %v1086, 0.0
    %v1423 = vmax.f32 %v1277, 0.0
    %v1424 = vmax.f32 %v1279, 0.0
    %v1425 = vmax.f32 %v1088, 0.0
    %v1426 = vmax.f32 %v1090, 0.0
    %v1427 = vmax.f32 %v1281, 0.0
    %v1428 = vmax.f32 %v1283, 0.0
    %v1429 = vmax.f32 %v1094, 0.0
    %v1430 = vmax.f32 %v1096, 0.0
    %v1431 = vmax.f32 %v1287, 0.0
    %v1432 = vmax.f32 %v1289, 0.0
    %v1433 = vmax.f32 %v1098, 0.0
    %v1434 = vmax.f32 %v1100, 0.0
    %v1435 = vmax.f32 %v1291, 0.0
    %v1436 = vmax.f32 %v1293, 0.0
    %v1437 = vmax.f32 %v1104, 0.0
    %v1438 = vmax.f32 %v1106, 0.0
    %v1439 = vmax.f32 %v1297, 0.0
    %v1440 = vmax.f32 %v1299, 0.0
    %v1441 = vmax.f32 %v1108, 0.0
    %v1442 = vmax.f32 %v1110, 0.0
    %v1443 = vmax.f32 %v1301, 0.0
    %v1444 = vmax.f32 %v1303, 0.0
    %v1445 = vmax.f32 %v1114, 0.0
    %v1446 = vmax.f32 %v1116, 0.0
    %v1447 = vmax.f32 %v1307, 0.0
    %v1448 = vmax.f32 %v1309, 0.0
    %v1449 = vmax.f32 %v1118, 0.0
    %v1450 = vmax.f32 %v1120, 0.0
    %v1451 = vmax.f32 %v1311, 0.0
    %v1452 = vmax.f32 %v1313, 0.0
    %v1453 = vmax.f32 %v1124, 0.0
    %v1454 = vmax.f32 %v1126, 0.0
    %v1455 = vmax.f32 %v1317, 0.0
    %v1456 = vmax.f32 %v1319, 0.0
    %v1457 = vmax.f32 %v1128, 0.0
    %v1458 = vmax.f32 %v1130, 0.0
    %v1459 = vmax.f32 %v1321, 0.0
    %v1460 = vmax.f32 %v1323, 0.0
    %v1461 = vmax.f32 %v1134, 0.0
    %v1462 = vmax.f32 %v1136, 0.0
    %v1463 = vmax.f32 %v1327, 0.0
    %v1464 = vmax.f32 %v1329, 0.0
    %v1465 = vmax.f32 %v1138, 0.0
    %v1466 = vmax.f32 %v1140, 0.0
    %v1467 = vmax.f32 %v1331, 0.0
    %v1468 = vmax.f32 %v1333, 0.0
    %v1469 = vmax.f32 %v1144, 0.0
    %v1470 = vmax.f32 %v1146, 0.0
    %v1471 = vmax.f32 %v1337, 0.0
    %v1472 = vmax.f32 %v1339, 0.0
    %v1473 = vmax.f32 %v1148, 0.0
    %v1474 = vmax.f32 %v1150, 0.0
    %v1475 = vmax.f32 %v1341, 0.0
    %v1476 = vmax.f32 %v1343, 0.0
    %v1477 = vmax.f32 %v1154, 0.0
    %v1478 = vmax.f32 %v1156, 0.0
    %v1479 = vmax.f32 %v1347, 0.0
    %v1480 = vmax.f32 %v1349, 0.0
    %v1481 = vmax.f32 %v1158, 0.0
    %v1482 = vmax.f32 %v1160, 0.0
    %v1483 = vmax.f32 %v1351, 0.0
    %v1484 = vmax.f32 %v1353, 0.0
    %v1485 = vmax.f32 %v1164, 0.0
    %v1486 = vmax.f32 %v1166, 0.0
    %v1487 = vmax.f32 %v1357, 0.0
    %v1488 = vmax.f32 %v1359, 0.0
    %v1489 = vmax.f32 %v1168, 0.0
    %v1490 = vmax.f32 %v1170, 0.0
    %v1491 = vmax.f32 %v1361, 0.0
    %v1492 = vmax.f32 %v1363, 0.0
    %v1493 = vpack.c.bf16 %v1369, %v1365
    %v1494 = vpack.c.bf16 %v1370, %v1366
    %v1495 = vpack.c.bf16 %v1371, %v1367
    %v1496 = vpack.c.bf16 %v1372, %v1368
    %v1497 = vpack.c.bf16 %v1377, %v1373
    %v1498 = vpack.c.bf16 %v1378, %v1374
    %v1499 = vpack.c.bf16 %v1379, %v1375
    %v1500 = vpack.c.bf16 %v1380, %v1376
    %v1501 = vpack.c.bf16 %v1385, %v1381
    %v1502 = vpack.c.bf16 %v1386, %v1382
    %v1503 = vpack.c.bf16 %v1387, %v1383
    %v1504 = vpack.c.bf16 %v1388, %v1384
    %v1505 = vpack.c.bf16 %v1393, %v1389
    %v1506 = vpack.c.bf16 %v1394, %v1390
    %v1507 = vpack.c.bf16 %v1395, %v1391
    %v1508 = vpack.c.bf16 %v1396, %v1392
    %v1509 = vpack.c.bf16 %v1401, %v1397
    %v1510 = vpack.c.bf16 %v1402, %v1398
    %v1511 = vpack.c.bf16 %v1403, %v1399
    %v1512 = vpack.c.bf16 %v1404, %v1400
    %v1513 = vpack.c.bf16 %v1409, %v1405
    %v1514 = vpack.c.bf16 %v1410, %v1406
    %v1515 = vpack.c.bf16 %v1411, %v1407
    %v1516 = vpack.c.bf16 %v1412, %v1408
    %v1517 = vpack.c.bf16 %v1417, %v1413
    %v1518 = vpack.c.bf16 %v1418, %v1414
    %v1519 = vpack.c.bf16 %v1419, %v1415
    %v1520 = vpack.c.bf16 %v1420, %v1416
    %v1521 = vpack.c.bf16 %v1425, %v1421
    %v1522 = vpack.c.bf16 %v1426, %v1422
    %v1523 = vpack.c.bf16 %v1427, %v1423
    %v1524 = vpack.c.bf16 %v1428, %v1424
    %v1525 = vpack.c.bf16 %v1433, %v1429
    %v1526 = vpack.c.bf16 %v1434, %v1430
    %v1527 = vpack.c.bf16 %v1435, %v1431
    %v1528 = vpack.c.bf16 %v1436, %v1432
    %v1529 = vpack.c.bf16 %v1441, %v1437
    %v1530 = vpack.c.bf16 %v1442, %v1438
    %v1531 = vpack.c.bf16 %v1443, %v1439
    %v1532 = vpack.c.bf16 %v1444, %v1440
    %v1533 = vpack.c.bf16 %v1449, %v1445
    %v1534 = vpack.c.bf16 %v1450, %v1446
    %v1535 = vpack.c.bf16 %v1451, %v1447
    %v1536 = vpack.c.bf16 %v1452, %v1448
    %v1537 = vpack.c.bf16 %v1457, %v1453
    %v1538 = vpack.c.bf16 %v1458, %v1454
    %v1539 = vpack.c.bf16 %v1459, %v1455
    %v1540 = vpack.c.bf16 %v1460, %v1456
    %v1541 = vpack.c.bf16 %v1465, %v1461
    %v1542 = vpack.c.bf16 %v1466, %v1462
    %v1543 = vpack.c.bf16 %v1467, %v1463
    %v1544 = vpack.c.bf16 %v1468, %v1464
    %v1545 = vpack.c.bf16 %v1473, %v1469
    %v1546 = vpack.c.bf16 %v1474, %v1470
    %v1547 = vpack.c.bf16 %v1475, %v1471
    %v1548 = vpack.c.bf16 %v1476, %v1472
    %v1549 = vpack.c.bf16 %v1481, %v1477
    %v1550 = vpack.c.bf16 %v1482, %v1478
    %v1551 = vpack.c.bf16 %v1483, %v1479
    %v1552 = vpack.c.bf16 %v1484, %v1480
    %v1553 = vpack.c.bf16 %v1489, %v1485
    %v1554 = vpack.c.bf16 %v1490, %v1486
    %v1555 = vpack.c.bf16 %v1491, %v1487
    %v1556 = vpack.c.bf16 %v1492, %v1488
    %v1557 = vld [vmem:[#allocation5] sm:$0xff]
    %v1558 = vld [vmem:[#allocation5 + $0x8] sm:$0xff]
    %v1559 = vld [vmem:[#allocation5 + $0x10] sm:$0xff]
    %v1560 = vld [vmem:[#allocation5 + $0x18] sm:$0xff]
    %v1561 = vld [vmem:[#allocation5 + $0x20] sm:$0xff]
    %v1562 = vld [vmem:[#allocation5 + $0x28] sm:$0xff]
    %v1563 = vld [vmem:[#allocation5 + $0x30] sm:$0xff]
    %v1564 = vld [vmem:[#allocation5 + $0x38] sm:$0xff]
    %v1565 = vld [vmem:[#allocation5 + $0x40] sm:$0xff]
    %v1566 = vld [vmem:[#allocation5 + $0x48] sm:$0xff]
    %v1567 = vld [vmem:[#allocation5 + $0x50] sm:$0xff]
    %v1568 = vld [vmem:[#allocation5 + $0x58] sm:$0xff]
    %v1569 = vld [vmem:[#allocation5 + $0x60] sm:$0xff]
    %v1570 = vld [vmem:[#allocation5 + $0x68] sm:$0xff]
    %v1571 = vld [vmem:[#allocation5 + $0x70] sm:$0xff]
    %v1572 = vld [vmem:[#allocation5 + $0x78] sm:$0xff]
    %v1573 = vld [vmem:[#allocation5 + $0x80] sm:$0xff]
    %v1574 = vld [vmem:[#allocation5 + $0x88] sm:$0xff]
    %v1575 = vld [vmem:[#allocation5 + $0x90] sm:$0xff]
    %v1576 = vld [vmem:[#allocation5 + $0x98] sm:$0xff]
    %v1577 = vld [vmem:[#allocation5 + $0xa0] sm:$0xff]
    %v1578 = vld [vmem:[#allocation5 + $0xa8] sm:$0xff]
    %v1579 = vld [vmem:[#allocation5 + $0xb0] sm:$0xff]
    %v1580 = vld [vmem:[#allocation5 + $0xb8] sm:$0xff]
    %v1581 = vld [vmem:[#allocation5 + $0xc0] sm:$0xff]
    %v1582 = vld [vmem:[#allocation5 + $0xc8] sm:$0xff]
    %v1583 = vld [vmem:[#allocation5 + $0xd0] sm:$0xff]
    %v1584 = vld [vmem:[#allocation5 + $0xd8] sm:$0xff]
    %v1585 = vld [vmem:[#allocation5 + $0xe0] sm:$0xff]
    %v1586 = vld [vmem:[#allocation5 + $0xe8] sm:$0xff]
    %v1587 = vld [vmem:[#allocation5 + $0xf0] sm:$0xff]
    %v1588 = vld [vmem:[#allocation5 + $0xf8] sm:$0xff]
    %v1589 = vld [vmem:[#allocation5 + $0x100] sm:$0xff]
    %v1590 = vld [vmem:[#allocation5 + $0x108] sm:$0xff]
    %v1591 = vld [vmem:[#allocation5 + $0x110] sm:$0xff]
    %v1592 = vld [vmem:[#allocation5 + $0x118] sm:$0xff]
    %v1593 = vld [vmem:[#allocation5 + $0x120] sm:$0xff]
    %v1594 = vld [vmem:[#allocation5 + $0x128] sm:$0xff]
    %v1595 = vld [vmem:[#allocation5 + $0x130] sm:$0xff]
    %v1596 = vld [vmem:[#allocation5 + $0x138] sm:$0xff]
    %v1597 = vld [vmem:[#allocation5 + $0x140] sm:$0xff]
    %v1598 = vld [vmem:[#allocation5 + $0x148] sm:$0xff]
    %v1599 = vld [vmem:[#allocation5 + $0x150] sm:$0xff]
    %v1600 = vld [vmem:[#allocation5 + $0x158] sm:$0xff]
    %v1601 = vld [vmem:[#allocation5 + $0x160] sm:$0xff]
    %v1602 = vld [vmem:[#allocation5 + $0x168] sm:$0xff]
    %v1603 = vld [vmem:[#allocation5 + $0x170] sm:$0xff]
    %v1604 = vld [vmem:[#allocation5 + $0x178] sm:$0xff]
    %v1605 = vld [vmem:[#allocation5 + $0x180] sm:$0xff]
    %v1606 = vld [vmem:[#allocation5 + $0x188] sm:$0xff]
    %v1607 = vld [vmem:[#allocation5 + $0x190] sm:$0xff]
    %v1608 = vld [vmem:[#allocation5 + $0x198] sm:$0xff]
    %v1609 = vld [vmem:[#allocation5 + $0x1a0] sm:$0xff]
    %v1610 = vld [vmem:[#allocation5 + $0x1a8] sm:$0xff]
    %v1611 = vld [vmem:[#allocation5 + $0x1b0] sm:$0xff]
    %v1612 = vld [vmem:[#allocation5 + $0x1b8] sm:$0xff]
    %v1613 = vld [vmem:[#allocation5 + $0x1c0] sm:$0xff]
    %v1614 = vld [vmem:[#allocation5 + $0x1c8] sm:$0xff]
    %v1615 = vld [vmem:[#allocation5 + $0x1d0] sm:$0xff]
    %v1616 = vld [vmem:[#allocation5 + $0x1d8] sm:$0xff]
    %v1617 = vld [vmem:[#allocation5 + $0x1e0] sm:$0xff]
    %v1618 = vld [vmem:[#allocation5 + $0x1e8] sm:$0xff]
    %v1619 = vld [vmem:[#allocation5 + $0x1f0] sm:$0xff]
    %v1620 = vld [vmem:[#allocation5 + $0x1f8] sm:$0xff]
    %v1621 = vld [vmem:[#allocation5 + $0x200] sm:$0xff]
    %v1622 = vld [vmem:[#allocation5 + $0x208] sm:$0xff]
    %v1623 = vld [vmem:[#allocation5 + $0x210] sm:$0xff]
    %v1624 = vld [vmem:[#allocation5 + $0x218] sm:$0xff]
    %v1625 = vld [vmem:[#allocation5 + $0x220] sm:$0xff]
    %v1626 = vld [vmem:[#allocation5 + $0x228] sm:$0xff]
    %v1627 = vld [vmem:[#allocation5 + $0x230] sm:$0xff]
    %v1628 = vld [vmem:[#allocation5 + $0x238] sm:$0xff]
    %v1629 = vld [vmem:[#allocation5 + $0x240] sm:$0xff]
    %v1630 = vld [vmem:[#allocation5 + $0x248] sm:$0xff]
    %v1631 = vld [vmem:[#allocation5 + $0x250] sm:$0xff]
    %v1632 = vld [vmem:[#allocation5 + $0x258] sm:$0xff]
    %v1633 = vld [vmem:[#allocation5 + $0x260] sm:$0xff]
    %v1634 = vld [vmem:[#allocation5 + $0x268] sm:$0xff]
    %v1635 = vld [vmem:[#allocation5 + $0x270] sm:$0xff]
    %v1636 = vld [vmem:[#allocation5 + $0x278] sm:$0xff]
    %v1637 = vld [vmem:[#allocation5 + $0x280] sm:$0xff]
    %v1638 = vld [vmem:[#allocation5 + $0x288] sm:$0xff]
    %v1639 = vld [vmem:[#allocation5 + $0x290] sm:$0xff]
    %v1640 = vld [vmem:[#allocation5 + $0x298] sm:$0xff]
    %v1641 = vld [vmem:[#allocation5 + $0x2a0] sm:$0xff]
    %v1642 = vld [vmem:[#allocation5 + $0x2a8] sm:$0xff]
    %v1643 = vld [vmem:[#allocation5 + $0x2b0] sm:$0xff]
    %v1644 = vld [vmem:[#allocation5 + $0x2b8] sm:$0xff]
    %v1645 = vld [vmem:[#allocation5 + $0x2c0] sm:$0xff]
    %v1646 = vld [vmem:[#allocation5 + $0x2c8] sm:$0xff]
    %v1647 = vld [vmem:[#allocation5 + $0x2d0] sm:$0xff]
    %v1648 = vld [vmem:[#allocation5 + $0x2d8] sm:$0xff]
    %v1649 = vld [vmem:[#allocation5 + $0x2e0] sm:$0xff]
    %v1650 = vld [vmem:[#allocation5 + $0x2e8] sm:$0xff]
    %v1651 = vld [vmem:[#allocation5 + $0x2f0] sm:$0xff]
    %v1652 = vld [vmem:[#allocation5 + $0x2f8] sm:$0xff]
    %v1653 = vld [vmem:[#allocation5 + $0x300] sm:$0xff]
    %v1654 = vld [vmem:[#allocation5 + $0x308] sm:$0xff]
    %v1655 = vld [vmem:[#allocation5 + $0x310] sm:$0xff]
    %v1656 = vld [vmem:[#allocation5 + $0x318] sm:$0xff]
    %v1657 = vld [vmem:[#allocation5 + $0x320] sm:$0xff]
    %v1658 = vld [vmem:[#allocation5 + $0x328] sm:$0xff]
    %v1659 = vld [vmem:[#allocation5 + $0x330] sm:$0xff]
    %v1660 = vld [vmem:[#allocation5 + $0x338] sm:$0xff]
    %v1661 = vld [vmem:[#allocation5 + $0x340] sm:$0xff]
    %v1662 = vld [vmem:[#allocation5 + $0x348] sm:$0xff]
    %v1663 = vld [vmem:[#allocation5 + $0x350] sm:$0xff]
    %v1664 = vld [vmem:[#allocation5 + $0x358] sm:$0xff]
    %v1665 = vld [vmem:[#allocation5 + $0x360] sm:$0xff]
    %v1666 = vld [vmem:[#allocation5 + $0x368] sm:$0xff]
    %v1667 = vld [vmem:[#allocation5 + $0x370] sm:$0xff]
    %v1668 = vld [vmem:[#allocation5 + $0x378] sm:$0xff]
    %v1669 = vld [vmem:[#allocation5 + $0x380] sm:$0xff]
    %v1670 = vld [vmem:[#allocation5 + $0x388] sm:$0xff]
    %v1671 = vld [vmem:[#allocation5 + $0x390] sm:$0xff]
    %v1672 = vld [vmem:[#allocation5 + $0x398] sm:$0xff]
    %v1673 = vld [vmem:[#allocation5 + $0x3a0] sm:$0xff]
    %v1674 = vld [vmem:[#allocation5 + $0x3a8] sm:$0xff]
    %v1675 = vld [vmem:[#allocation5 + $0x3b0] sm:$0xff]
    %v1676 = vld [vmem:[#allocation5 + $0x3b8] sm:$0xff]
    %v1677 = vld [vmem:[#allocation5 + $0x3c0] sm:$0xff]
    %v1678 = vld [vmem:[#allocation5 + $0x3c8] sm:$0xff]
    %v1679 = vld [vmem:[#allocation5 + $0x3d0] sm:$0xff]
    %v1680 = vld [vmem:[#allocation5 + $0x3d8] sm:$0xff]
    %v1681 = vld [vmem:[#allocation5 + $0x3e0] sm:$0xff]
    %v1682 = vld [vmem:[#allocation5 + $0x3e8] sm:$0xff]
    %v1683 = vld [vmem:[#allocation5 + $0x3f0] sm:$0xff]
    %v1684 = vld [vmem:[#allocation5 + $0x3f8] sm:$0xff]
    %v1685 = vld [vmem:[%s6] sm:$0xf]
    %v1687 = vlaneseq
    %v1688 = vshrl.u32 %v1687, 7
    %v1689 = vsub.s32 0, %v1688
    %v1690 = vrot.slane %v1685, %v1689
    %v1691 = vlaneseq
    %v1692 = vshrl.u32 %v1691, 7
    %v1693 = vsub.s32 1, %v1692
    %v1694 = vrot.slane %v1685, %v1693
    %v1695 = vlaneseq
    %v1696 = vshrl.u32 %v1695, 7
    %v1697 = vsub.s32 2, %v1696
    %v1698 = vrot.slane %v1685, %v1697
    %v1699 = vlaneseq
    %v1700 = vshrl.u32 %v1699, 7
    %v1701 = vsub.s32 3, %v1700
    %v1702 = vrot.slane %v1685, %v1701
    %v1835 = vunpack.c.l.b16 %v1557
    %v1836 = vunpack.c.h.b16 %v1557
    %v1837 = vunpack.c.l.b16 %v1558
    %v1838 = vunpack.c.h.b16 %v1558
    %v1839 = vunpack.c.l.b16 %v1559
    %v1840 = vunpack.c.h.b16 %v1559
    %v1841 = vunpack.c.l.b16 %v1560
    %v1842 = vunpack.c.h.b16 %v1560
    %v1843 = vunpack.c.l.b16 %v1561
    %v1844 = vunpack.c.h.b16 %v1561
    %v1845 = vunpack.c.l.b16 %v1562
    %v1846 = vunpack.c.h.b16 %v1562
    %v1847 = vunpack.c.l.b16 %v1563
    %v1848 = vunpack.c.h.b16 %v1563
    %v1849 = vunpack.c.l.b16 %v1564
    %v1850 = vunpack.c.h.b16 %v1564
    %v1851 = vunpack.c.l.b16 %v1565
    %v1852 = vunpack.c.h.b16 %v1565
    %v1853 = vunpack.c.l.b16 %v1566
    %v1854 = vunpack.c.h.b16 %v1566
    %v1855 = vunpack.c.l.b16 %v1567
    %v1856 = vunpack.c.h.b16 %v1567
    %v1857 = vunpack.c.l.b16 %v1568
    %v1858 = vunpack.c.h.b16 %v1568
    %v1859 = vunpack.c.l.b16 %v1569
    %v1860 = vunpack.c.h.b16 %v1569
    %v1861 = vunpack.c.l.b16 %v1570
    %v1862 = vunpack.c.h.b16 %v1570
    %v1863 = vunpack.c.l.b16 %v1571
    %v1864 = vunpack.c.h.b16 %v1571
    %v1865 = vunpack.c.l.b16 %v1572
    %v1866 = vunpack.c.h.b16 %v1572
    %v1867 = vunpack.c.l.b16 %v1573
    %v1868 = vunpack.c.h.b16 %v1573
    %v1869 = vunpack.c.l.b16 %v1574
    %v1870 = vunpack.c.h.b16 %v1574
    %v1871 = vunpack.c.l.b16 %v1575
    %v1872 = vunpack.c.h.b16 %v1575
    %v1873 = vunpack.c.l.b16 %v1576
    %v1874 = vunpack.c.h.b16 %v1576
    %v1875 = vunpack.c.l.b16 %v1577
    %v1876 = vunpack.c.h.b16 %v1577
    %v1877 = vunpack.c.l.b16 %v1578
    %v1878 = vunpack.c.h.b16 %v1578
    %v1879 = vunpack.c.l.b16 %v1579
    %v1880 = vunpack.c.h.b16 %v1579
    %v1881 = vunpack.c.l.b16 %v1580
    %v1882 = vunpack.c.h.b16 %v1580
    %v1883 = vunpack.c.l.b16 %v1581
    %v1884 = vunpack.c.h.b16 %v1581
    %v1885 = vunpack.c.l.b16 %v1582
    %v1886 = vunpack.c.h.b16 %v1582
    %v1887 = vunpack.c.l.b16 %v1583
    %v1888 = vunpack.c.h.b16 %v1583
    %v1889 = vunpack.c.l.b16 %v1584
    %v1890 = vunpack.c.h.b16 %v1584
    %v1891 = vunpack.c.l.b16 %v1585
    %v1892 = vunpack.c.h.b16 %v1585
    %v1893 = vunpack.c.l.b16 %v1586
    %v1894 = vunpack.c.h.b16 %v1586
    %v1895 = vunpack.c.l.b16 %v1587
    %v1896 = vunpack.c.h.b16 %v1587
    %v1897 = vunpack.c.l.b16 %v1588
    %v1898 = vunpack.c.h.b16 %v1588
    %v1899 = vunpack.c.l.b16 %v1589
    %v1900 = vunpack.c.h.b16 %v1589
    %v1901 = vunpack.c.l.b16 %v1590
    %v1902 = vunpack.c.h.b16 %v1590
    %v1903 = vunpack.c.l.b16 %v1591
    %v1904 = vunpack.c.h.b16 %v1591
    %v1905 = vunpack.c.l.b16 %v1592
    %v1906 = vunpack.c.h.b16 %v1592
    %v1907 = vunpack.c.l.b16 %v1593
    %v1908 = vunpack.c.h.b16 %v1593
    %v1909 = vunpack.c.l.b16 %v1594
    %v1910 = vunpack.c.h.b16 %v1594
    %v1911 = vunpack.c.l.b16 %v1595
    %v1912 = vunpack.c.h.b16 %v1595
    %v1913 = vunpack.c.l.b16 %v1596
    %v1914 = vunpack.c.h.b16 %v1596
    %v1915 = vunpack.c.l.b16 %v1597
    %v1916 = vunpack.c.h.b16 %v1597
    %v1917 = vunpack.c.l.b16 %v1598
    %v1918 = vunpack.c.h.b16 %v1598
    %v1919 = vunpack.c.l.b16 %v1599
    %v1920 = vunpack.c.h.b16 %v1599
    %v1921 = vunpack.c.l.b16 %v1600
    %v1922 = vunpack.c.h.b16 %v1600
    %v1923 = vunpack.c.l.b16 %v1601
    %v1924 = vunpack.c.h.b16 %v1601
    %v1925 = vunpack.c.l.b16 %v1602
    %v1926 = vunpack.c.h.b16 %v1602
    %v1927 = vunpack.c.l.b16 %v1603
    %v1928 = vunpack.c.h.b16 %v1603
    %v1929 = vunpack.c.l.b16 %v1604
    %v1930 = vunpack.c.h.b16 %v1604
    %v1931 = vunpack.c.l.b16 %v1605
    %v1932 = vunpack.c.h.b16 %v1605
    %v1933 = vunpack.c.l.b16 %v1606
    %v1934 = vunpack.c.h.b16 %v1606
    %v1935 = vunpack.c.l.b16 %v1607
    %v1936 = vunpack.c.h.b16 %v1607
    %v1937 = vunpack.c.l.b16 %v1608
    %v1938 = vunpack.c.h.b16 %v1608
    %v1939 = vunpack.c.l.b16 %v1609
    %v1940 = vunpack.c.h.b16 %v1609
    %v1941 = vunpack.c.l.b16 %v1610
    %v1942 = vunpack.c.h.b16 %v1610
    %v1943 = vunpack.c.l.b16 %v1611
    %v1944 = vunpack.c.h.b16 %v1611
    %v1945 = vunpack.c.l.b16 %v1612
    %v1946 = vunpack.c.h.b16 %v1612
    %v1947 = vunpack.c.l.b16 %v1613
    %v1948 = vunpack.c.h.b16 %v1613
    %v1949 = vunpack.c.l.b16 %v1614
    %v1950 = vunpack.c.h.b16 %v1614
    %v1951 = vunpack.c.l.b16 %v1615
    %v1952 = vunpack.c.h.b16 %v1615
    %v1953 = vunpack.c.l.b16 %v1616
    %v1954 = vunpack.c.h.b16 %v1616
    %v1955 = vunpack.c.l.b16 %v1617
    %v1956 = vunpack.c.h.b16 %v1617
    %v1957 = vunpack.c.l.b16 %v1618
    %v1958 = vunpack.c.h.b16 %v1618
    %v1959 = vunpack.c.l.b16 %v1619
    %v1960 = vunpack.c.h.b16 %v1619
    %v1961 = vunpack.c.l.b16 %v1620
    %v1962 = vunpack.c.h.b16 %v1620
    %v1963 = vunpack.c.l.b16 %v1621
    %v1964 = vunpack.c.h.b16 %v1621
    %v1965 = vunpack.c.l.b16 %v1622
    %v1966 = vunpack.c.h.b16 %v1622
    %v1967 = vunpack.c.l.b16 %v1623
    %v1968 = vunpack.c.h.b16 %v1623
    %v1969 = vunpack.c.l.b16 %v1624
    %v1970 = vunpack.c.h.b16 %v1624
    %v1971 = vunpack.c.l.b16 %v1625
    %v1972 = vunpack.c.h.b16 %v1625
    %v1973 = vunpack.c.l.b16 %v1626
    %v1974 = vunpack.c.h.b16 %v1626
    %v1975 = vunpack.c.l.b16 %v1627
    %v1976 = vunpack.c.h.b16 %v1627
    %v1977 = vunpack.c.l.b16 %v1628
    %v1978 = vunpack.c.h.b16 %v1628
    %v1979 = vunpack.c.l.b16 %v1629
    %v1980 = vunpack.c.h.b16 %v1629
    %v1981 = vunpack.c.l.b16 %v1630
    %v1982 = vunpack.c.h.b16 %v1630
    %v1983 = vunpack.c.l.b16 %v1631
    %v1984 = vunpack.c.h.b16 %v1631
    %v1985 = vunpack.c.l.b16 %v1632
    %v1986 = vunpack.c.h.b16 %v1632
    %v1987 = vunpack.c.l.b16 %v1633
    %v1988 = vunpack.c.h.b16 %v1633
    %v1989 = vunpack.c.l.b16 %v1634
    %v1990 = vunpack.c.h.b16 %v1634
    %v1991 = vunpack.c.l.b16 %v1635
    %v1992 = vunpack.c.h.b16 %v1635
    %v1993 = vunpack.c.l.b16 %v1636
    %v1994 = vunpack.c.h.b16 %v1636
    %v1995 = vunpack.c.l.b16 %v1637
    %v1996 = vunpack.c.h.b16 %v1637
    %v1997 = vunpack.c.l.b16 %v1638
    %v1998 = vunpack.c.h.b16 %v1638
    %v1999 = vunpack.c.l.b16 %v1639
    %v2000 = vunpack.c.h.b16 %v1639
    %v2001 = vunpack.c.l.b16 %v1640
    %v2002 = vunpack.c.h.b16 %v1640
    %v2003 = vunpack.c.l.b16 %v1641
    %v2004 = vunpack.c.h.b16 %v1641
    %v2005 = vunpack.c.l.b16 %v1642
    %v2006 = vunpack.c.h.b16 %v1642
    %v2007 = vunpack.c.l.b16 %v1643
    %v2008 = vunpack.c.h.b16 %v1643
    %v2009 = vunpack.c.l.b16 %v1644
    %v2010 = vunpack.c.h.b16 %v1644
    %v2011 = vunpack.c.l.b16 %v1645
    %v2012 = vunpack.c.h.b16 %v1645
    %v2013 = vunpack.c.l.b16 %v1646
    %v2014 = vunpack.c.h.b16 %v1646
    %v2015 = vunpack.c.l.b16 %v1647
    %v2016 = vunpack.c.h.b16 %v1647
    %v2017 = vunpack.c.l.b16 %v1648
    %v2018 = vunpack.c.h.b16 %v1648
    %v2019 = vunpack.c.l.b16 %v1649
    %v2020 = vunpack.c.h.b16 %v1649
    %v2021 = vunpack.c.l.b16 %v1650
    %v2022 = vunpack.c.h.b16 %v1650
    %v2023 = vunpack.c.l.b16 %v1651
    %v2024 = vunpack.c.h.b16 %v1651
    %v2025 = vunpack.c.l.b16 %v1652
    %v2026 = vunpack.c.h.b16 %v1652
    %v2027 = vunpack.c.l.b16 %v1653
    %v2028 = vunpack.c.h.b16 %v1653
    %v2029 = vunpack.c.l.b16 %v1654
    %v2030 = vunpack.c.h.b16 %v1654
    %v2031 = vunpack.c.l.b16 %v1655
    %v2032 = vunpack.c.h.b16 %v1655
    %v2033 = vunpack.c.l.b16 %v1656
    %v2034 = vunpack.c.h.b16 %v1656
    %v2035 = vunpack.c.l.b16 %v1657
    %v2036 = vunpack.c.h.b16 %v1657
    %v2037 = vunpack.c.l.b16 %v1658
    %v2038 = vunpack.c.h.b16 %v1658
    %v2039 = vunpack.c.l.b16 %v1659
    %v2040 = vunpack.c.h.b16 %v1659
    %v2041 = vunpack.c.l.b16 %v1660
    %v2042 = vunpack.c.h.b16 %v1660
    %v2043 = vunpack.c.l.b16 %v1661
    %v2044 = vunpack.c.h.b16 %v1661
    %v2045 = vunpack.c.l.b16 %v1662
    %v2046 = vunpack.c.h.b16 %v1662
    %v2047 = vunpack.c.l.b16 %v1663
    %v2048 = vunpack.c.h.b16 %v1663
    %v2049 = vunpack.c.l.b16 %v1664
    %v2050 = vunpack.c.h.b16 %v1664
    %v2051 = vunpack.c.l.b16 %v1665
    %v2052 = vunpack.c.h.b16 %v1665
    %v2053 = vunpack.c.l.b16 %v1666
    %v2054 = vunpack.c.h.b16 %v1666
    %v2055 = vunpack.c.l.b16 %v1667
    %v2056 = vunpack.c.h.b16 %v1667
    %v2057 = vunpack.c.l.b16 %v1668
    %v2058 = vunpack.c.h.b16 %v1668
    %v2059 = vunpack.c.l.b16 %v1669
    %v2060 = vunpack.c.h.b16 %v1669
    %v2061 = vunpack.c.l.b16 %v1670
    %v2062 = vunpack.c.h.b16 %v1670
    %v2063 = vunpack.c.l.b16 %v1671
    %v2064 = vunpack.c.h.b16 %v1671
    %v2065 = vunpack.c.l.b16 %v1672
    %v2066 = vunpack.c.h.b16 %v1672
    %v2067 = vunpack.c.l.b16 %v1673
    %v2068 = vunpack.c.h.b16 %v1673
    %v2069 = vunpack.c.l.b16 %v1674
    %v2070 = vunpack.c.h.b16 %v1674
    %v2071 = vunpack.c.l.b16 %v1675
    %v2072 = vunpack.c.h.b16 %v1675
    %v2073 = vunpack.c.l.b16 %v1676
    %v2074 = vunpack.c.h.b16 %v1676
    %v2075 = vunpack.c.l.b16 %v1677
    %v2076 = vunpack.c.h.b16 %v1677
    %v2077 = vunpack.c.l.b16 %v1678
    %v2078 = vunpack.c.h.b16 %v1678
    %v2079 = vunpack.c.l.b16 %v1679
    %v2080 = vunpack.c.h.b16 %v1679
    %v2081 = vunpack.c.l.b16 %v1680
    %v2082 = vunpack.c.h.b16 %v1680
    %v2083 = vunpack.c.l.b16 %v1681
    %v2084 = vunpack.c.h.b16 %v1681
    %v2085 = vunpack.c.l.b16 %v1682
    %v2086 = vunpack.c.h.b16 %v1682
    %v2087 = vunpack.c.l.b16 %v1683
    %v2088 = vunpack.c.h.b16 %v1683
    %v2089 = vunpack.c.l.b16 %v1684
    %v2090 = vunpack.c.h.b16 %v1684
    %v2091 = vpack.c.b16 %v1839, %v1835
    %v2092 = vpack.c.b16 %v1840, %v1836
    %v2093 = vpack.c.b16 %v1841, %v1837
    %v2094 = vpack.c.b16 %v1842, %v1838
    %v2095 = vpack.c.b16 %v1847, %v1843
    %v2096 = vpack.c.b16 %v1848, %v1844
    %v2097 = vpack.c.b16 %v1849, %v1845
    %v2098 = vpack.c.b16 %v1850, %v1846
    %v2099 = vpack.c.b16 %v1855, %v1851
    %v2100 = vpack.c.b16 %v1856, %v1852
    %v2101 = vpack.c.b16 %v1857, %v1853
    %v2102 = vpack.c.b16 %v1858, %v1854
    %v2103 = vpack.c.b16 %v1863, %v1859
    %v2104 = vpack.c.b16 %v1864, %v1860
    %v2105 = vpack.c.b16 %v1865, %v1861
    %v2106 = vpack.c.b16 %v1866, %v1862
    %v2107 = vpack.c.b16 %v1871, %v1867
    %v2108 = vpack.c.b16 %v1872, %v1868
    %v2109 = vpack.c.b16 %v1873, %v1869
    %v2110 = vpack.c.b16 %v1874, %v1870
    %v2111 = vpack.c.b16 %v1879, %v1875
    %v2112 = vpack.c.b16 %v1880, %v1876
    %v2113 = vpack.c.b16 %v1881, %v1877
    %v2114 = vpack.c.b16 %v1882, %v1878
    %v2115 = vpack.c.b16 %v1887, %v1883
    %v2116 = vpack.c.b16 %v1888, %v1884
    %v2117 = vpack.c.b16 %v1889, %v1885
    %v2118 = vpack.c.b16 %v1890, %v1886
    %v2119 = vpack.c.b16 %v1895, %v1891
    %v2120 = vpack.c.b16 %v1896, %v1892
    %v2121 = vpack.c.b16 %v1897, %v1893
    %v2122 = vpack.c.b16 %v1898, %v1894
    %v2123 = vpack.c.b16 %v1903, %v1899
    %v2124 = vpack.c.b16 %v1904, %v1900
    %v2125 = vpack.c.b16 %v1905, %v1901
    %v2126 = vpack.c.b16 %v1906, %v1902
    %v2127 = vpack.c.b16 %v1911, %v1907
    %v2128 = vpack.c.b16 %v1912, %v1908
    %v2129 = vpack.c.b16 %v1913, %v1909
    %v2130 = vpack.c.b16 %v1914, %v1910
    %v2131 = vpack.c.b16 %v1919, %v1915
    %v2132 = vpack.c.b16 %v1920, %v1916
    %v2133 = vpack.c.b16 %v1921, %v1917
    %v2134 = vpack.c.b16 %v1922, %v1918
    %v2135 = vpack.c.b16 %v1927, %v1923
    %v2136 = vpack.c.b16 %v1928, %v1924
    %v2137 = vpack.c.b16 %v1929, %v1925
    %v2138 = vpack.c.b16 %v1930, %v1926
    %v2139 = vpack.c.b16 %v1935, %v1931
    %v2140 = vpack.c.b16 %v1936, %v1932
    %v2141 = vpack.c.b16 %v1937, %v1933
    %v2142 = vpack.c.b16 %v1938, %v1934
    %v2143 = vpack.c.b16 %v1943, %v1939
    %v2144 = vpack.c.b16 %v1944, %v1940
    %v2145 = vpack.c.b16 %v1945, %v1941
    %v2146 = vpack.c.b16 %v1946, %v1942
    %v2147 = vpack.c.b16 %v1951, %v1947
    %v2148 = vpack.c.b16 %v1952, %v1948
    %v2149 = vpack.c.b16 %v1953, %v1949
    %v2150 = vpack.c.b16 %v1954, %v1950
    %v2151 = vpack.c.b16 %v1959, %v1955
    %v2152 = vpack.c.b16 %v1960, %v1956
    %v2153 = vpack.c.b16 %v1961, %v1957
    %v2154 = vpack.c.b16 %v1962, %v1958
    %v2155 = vpack.c.b16 %v1967, %v1963
    %v2156 = vpack.c.b16 %v1968, %v1964
    %v2157 = vpack.c.b16 %v1969, %v1965
    %v2158 = vpack.c.b16 %v1970, %v1966
    %v2159 = vpack.c.b16 %v1975, %v1971
    %v2160 = vpack.c.b16 %v1976, %v1972
    %v2161 = vpack.c.b16 %v1977, %v1973
    %v2162 = vpack.c.b16 %v1978, %v1974
    %v2163 = vpack.c.b16 %v1983, %v1979
    %v2164 = vpack.c.b16 %v1984, %v1980
    %v2165 = vpack.c.b16 %v1985, %v1981
    %v2166 = vpack.c.b16 %v1986, %v1982
    %v2167 = vpack.c.b16 %v1991, %v1987
    %v2168 = vpack.c.b16 %v1992, %v1988
    %v2169 = vpack.c.b16 %v1993, %v1989
    %v2170 = vpack.c.b16 %v1994, %v1990
    %v2171 = vpack.c.b16 %v1999, %v1995
    %v2172 = vpack.c.b16 %v2000, %v1996
    %v2173 = vpack.c.b16 %v2001, %v1997
    %v2174 = vpack.c.b16 %v2002, %v1998
    %v2175 = vpack.c.b16 %v2007, %v2003
    %v2176 = vpack.c.b16 %v2008, %v2004
    %v2177 = vpack.c.b16 %v2009, %v2005
    %v2178 = vpack.c.b16 %v2010, %v2006
    %v2179 = vpack.c.b16 %v2015, %v2011
    %v2180 = vpack.c.b16 %v2016, %v2012
    %v2181 = vpack.c.b16 %v2017, %v2013
    %v2182 = vpack.c.b16 %v2018, %v2014
    %v2183 = vpack.c.b16 %v2023, %v2019
    %v2184 = vpack.c.b16 %v2024, %v2020
    %v2185 = vpack.c.b16 %v2025, %v2021
    %v2186 = vpack.c.b16 %v2026, %v2022
    %v2187 = vpack.c.b16 %v2031, %v2027
    %v2188 = vpack.c.b16 %v2032, %v2028
    %v2189 = vpack.c.b16 %v2033, %v2029
    %v2190 = vpack.c.b16 %v2034, %v2030
    %v2191 = vpack.c.b16 %v2039, %v2035
    %v2192 = vpack.c.b16 %v2040, %v2036
    %v2193 = vpack.c.b16 %v2041, %v2037
    %v2194 = vpack.c.b16 %v2042, %v2038
    %v2195 = vpack.c.b16 %v2047, %v2043
    %v2196 = vpack.c.b16 %v2048, %v2044
    %v2197 = vpack.c.b16 %v2049, %v2045
    %v2198 = vpack.c.b16 %v2050, %v2046
    %v2199 = vpack.c.b16 %v2055, %v2051
    %v2200 = vpack.c.b16 %v2056, %v2052
    %v2201 = vpack.c.b16 %v2057, %v2053
    %v2202 = vpack.c.b16 %v2058, %v2054
    %v2203 = vpack.c.b16 %v2063, %v2059
    %v2204 = vpack.c.b16 %v2064, %v2060
    %v2205 = vpack.c.b16 %v2065, %v2061
    %v2206 = vpack.c.b16 %v2066, %v2062
    %v2207 = vpack.c.b16 %v2071, %v2067
    %v2208 = vpack.c.b16 %v2072, %v2068
    %v2209 = vpack.c.b16 %v2073, %v2069
    %v2210 = vpack.c.b16 %v2074, %v2070
    %v2211 = vpack.c.b16 %v2079, %v2075
    %v2212 = vpack.c.b16 %v2080, %v2076
    %v2213 = vpack.c.b16 %v2081, %v2077
    %v2214 = vpack.c.b16 %v2082, %v2078
    %v2215 = vpack.c.b16 %v2087, %v2083
    %v2216 = vpack.c.b16 %v2088, %v2084
    %v2217 = vpack.c.b16 %v2089, %v2085
    %v2218 = vpack.c.b16 %v2090, %v2086
    %2347 = vmatprep.subr.bf16.mxu0 %v2120
    %2348 = vmatpush1.bf16.msra.mxu0 %v2119
    %2349 = vmatprep.subr.bf16.mxu0 %v2116
    %2350 = vmatpush1.bf16.msra.mxu0 %v2115
    %2351 = vmatprep.subr.bf16.mxu0 %v2112
    %2352 = vmatpush1.bf16.msra.mxu0 %v2111
    %2353 = vmatprep.subr.bf16.mxu0 %v2108
    %2354 = vmatpush1.bf16.msra.mxu0 %v2107
    %2355 = vmatprep.subr.bf16.mxu0 %v2104
    %2356 = vmatpush1.bf16.msra.mxu0 %v2103
    %2357 = vmatprep.subr.bf16.mxu0 %v2100
    %2358 = vmatpush1.bf16.msra.mxu0 %v2099
    %2359 = vmatprep.subr.bf16.mxu0 %v2096
    %2360 = vmatpush1.bf16.msra.mxu0 %v2095
    %2361 = vmatprep.subr.bf16.mxu0 %v2092
    %2362 = vmatpush1.bf16.msra.mxu0 %v2091
    %2363 = vmatprep.subr.bf16.mxu0 %v2152
    %2364 = vmatpush2.bf16.msra.mxu0 %v2151
    %2365 = vmatprep.subr.bf16.mxu0 %v2148
    %2366 = vmatpush2.bf16.msra.mxu0 %v2147
    %2367 = vmatprep.subr.bf16.mxu0 %v2144
    %2368 = vmatpush2.bf16.msra.mxu0 %v2143
    %2369 = vmatprep.subr.bf16.mxu0 %v2140
    %2370 = vmatpush2.bf16.msra.mxu0 %v2139
    %2371 = vmatprep.subr.bf16.mxu0 %v2136
    %2372 = vmatpush2.bf16.msra.mxu0 %v2135
    %2373 = vmatprep.subr.bf16.mxu0 %v2132
    %2374 = vmatpush2.bf16.msra.mxu0 %v2131
    %2375 = vmatprep.subr.bf16.mxu0 %v2128
    %2376 = vmatpush2.bf16.msra.mxu0 %v2127
    %2377 = vmatprep.subr.bf16.mxu0 %v2124
    %2378 = vmatpush2.bf16.msra.mxu0 %v2123
    %2379 = vmatprep.mubr.bf16.mxu0 %v1494
    %2380 = vmatmul.mubr.bf16.gmra.mxu0 %v1493
    %v2381 = vpop.f32.mrf.mxu0
    %v2382 = vadd.f32 %v1690, %v2381
    %v2383 = vpop.f32.mrf.mxu0
    %v2384 = vadd.f32 %v1694, %v2383
    %v2385 = vpop.f32.mrf.mxu0
    %v2386 = vadd.f32 %v1690, %v2385
    %v2387 = vpop.f32.mrf.mxu0
    %v2388 = vadd.f32 %v1694, %v2387
    %2389 = vmatprep.mubr.bf16.mxu0 %v1498
    %2390 = vmatmul.mubr.bf16.gmra.mxu0 %v1497
    %v2391 = vpop.f32.mrf.mxu0
    %v2392 = vadd.f32 %v1690, %v2391
    %v2393 = vpop.f32.mrf.mxu0
    %v2394 = vadd.f32 %v1694, %v2393
    %v2395 = vpop.f32.mrf.mxu0
    %v2396 = vadd.f32 %v1690, %v2395
    %v2397 = vpop.f32.mrf.mxu0
    %v2398 = vadd.f32 %v1694, %v2397
    %2399 = vmatprep.mubr.bf16.mxu0 %v1502
    %2400 = vmatmul.mubr.bf16.gmra.mxu0 %v1501
    %v2401 = vpop.f32.mrf.mxu0
    %v2402 = vadd.f32 %v1690, %v2401
    %v2403 = vpop.f32.mrf.mxu0
    %v2404 = vadd.f32 %v1694, %v2403
    %v2405 = vpop.f32.mrf.mxu0
    %v2406 = vadd.f32 %v1690, %v2405
    %v2407 = vpop.f32.mrf.mxu0
    %v2408 = vadd.f32 %v1694, %v2407
    %2409 = vmatprep.mubr.bf16.mxu0 %v1506
    %2410 = vmatmul.mubr.bf16.gmra.mxu0 %v1505
    %v2411 = vpop.f32.mrf.mxu0
    %v2412 = vadd.f32 %v1690, %v2411
    %v2413 = vpop.f32.mrf.mxu0
    %v2414 = vadd.f32 %v1694, %v2413
    %v2415 = vpop.f32.mrf.mxu0
    %v2416 = vadd.f32 %v1690, %v2415
    %v2417 = vpop.f32.mrf.mxu0
    %v2418 = vadd.f32 %v1694, %v2417
    %2419 = vmatprep.mubr.bf16.mxu0 %v1510
    %2420 = vmatmul.mubr.bf16.gmra.mxu0 %v1509
    %v2421 = vpop.f32.mrf.mxu0
    %v2422 = vadd.f32 %v1690, %v2421
    %v2423 = vpop.f32.mrf.mxu0
    %v2424 = vadd.f32 %v1694, %v2423
    %v2425 = vpop.f32.mrf.mxu0
    %v2426 = vadd.f32 %v1690, %v2425
    %v2427 = vpop.f32.mrf.mxu0
    %v2428 = vadd.f32 %v1694, %v2427
    %2429 = vmatprep.mubr.bf16.mxu0 %v1514
    %2430 = vmatmul.mubr.bf16.gmra.mxu0 %v1513
    %v2431 = vpop.f32.mrf.mxu0
    %v2432 = vadd.f32 %v1690, %v2431
    %v2433 = vpop.f32.mrf.mxu0
    %v2434 = vadd.f32 %v1694, %v2433
    %v2435 = vpop.f32.mrf.mxu0
    %v2436 = vadd.f32 %v1690, %v2435
    %v2437 = vpop.f32.mrf.mxu0
    %v2438 = vadd.f32 %v1694, %v2437
    %2439 = vmatprep.mubr.bf16.mxu0 %v1518
    %2440 = vmatmul.mubr.bf16.gmra.mxu0 %v1517
    %v2441 = vpop.f32.mrf.mxu0
    %v2442 = vadd.f32 %v1690, %v2441
    %v2443 = vpop.f32.mrf.mxu0
    %v2444 = vadd.f32 %v1694, %v2443
    %v2445 = vpop.f32.mrf.mxu0
    %v2446 = vadd.f32 %v1690, %v2445
    %v2447 = vpop.f32.mrf.mxu0
    %v2448 = vadd.f32 %v1694, %v2447
    %2449 = vmatprep.mubr.bf16.mxu0 %v1522
    %2450 = vmatmul.mubr.bf16.gmra.mxu0 %v1521
    %v2451 = vpop.f32.mrf.mxu0
    %v2452 = vadd.f32 %v1690, %v2451
    %v2453 = vpop.f32.mrf.mxu0
    %v2454 = vadd.f32 %v1694, %v2453
    %v2455 = vpop.f32.mrf.mxu0
    %v2456 = vadd.f32 %v1690, %v2455
    %v2457 = vpop.f32.mrf.mxu0
    %v2458 = vadd.f32 %v1694, %v2457
    %2459 = vmatprep.mubr.bf16.mxu0 %v1526
    %2460 = vmatmul.mubr.bf16.gmra.mxu0 %v1525
    %v2461 = vpop.f32.mrf.mxu0
    %v2462 = vadd.f32 %v1690, %v2461
    %v2463 = vpop.f32.mrf.mxu0
    %v2464 = vadd.f32 %v1694, %v2463
    %v2465 = vpop.f32.mrf.mxu0
    %v2466 = vadd.f32 %v1690, %v2465
    %v2467 = vpop.f32.mrf.mxu0
    %v2468 = vadd.f32 %v1694, %v2467
    %2469 = vmatprep.mubr.bf16.mxu0 %v1530
    %2470 = vmatmul.mubr.bf16.gmra.mxu0 %v1529
    %v2471 = vpop.f32.mrf.mxu0
    %v2472 = vadd.f32 %v1690, %v2471
    %v2473 = vpop.f32.mrf.mxu0
    %v2474 = vadd.f32 %v1694, %v2473
    %v2475 = vpop.f32.mrf.mxu0
    %v2476 = vadd.f32 %v1690, %v2475
    %v2477 = vpop.f32.mrf.mxu0
    %v2478 = vadd.f32 %v1694, %v2477
    %2479 = vmatprep.mubr.bf16.mxu0 %v1534
    %2480 = vmatmul.mubr.bf16.gmra.mxu0 %v1533
    %v2481 = vpop.f32.mrf.mxu0
    %v2482 = vadd.f32 %v1690, %v2481
    %v2483 = vpop.f32.mrf.mxu0
    %v2484 = vadd.f32 %v1694, %v2483
    %v2485 = vpop.f32.mrf.mxu0
    %v2486 = vadd.f32 %v1690, %v2485
    %v2487 = vpop.f32.mrf.mxu0
    %v2488 = vadd.f32 %v1694, %v2487
    %2489 = vmatprep.mubr.bf16.mxu0 %v1538
    %2490 = vmatmul.mubr.bf16.gmra.mxu0 %v1537
    %v2491 = vpop.f32.mrf.mxu0
    %v2492 = vadd.f32 %v1690, %v2491
    %v2493 = vpop.f32.mrf.mxu0
    %v2494 = vadd.f32 %v1694, %v2493
    %v2495 = vpop.f32.mrf.mxu0
    %v2496 = vadd.f32 %v1690, %v2495
    %v2497 = vpop.f32.mrf.mxu0
    %v2498 = vadd.f32 %v1694, %v2497
    %2499 = vmatprep.mubr.bf16.mxu0 %v1542
    %2500 = vmatmul.mubr.bf16.gmra.mxu0 %v1541
    %v2501 = vpop.f32.mrf.mxu0
    %v2502 = vadd.f32 %v1690, %v2501
    %v2503 = vpop.f32.mrf.mxu0
    %v2504 = vadd.f32 %v1694, %v2503
    %v2505 = vpop.f32.mrf.mxu0
    %v2506 = vadd.f32 %v1690, %v2505
    %v2507 = vpop.f32.mrf.mxu0
    %v2508 = vadd.f32 %v1694, %v2507
    %2509 = vmatprep.mubr.bf16.mxu0 %v1546
    %2510 = vmatmul.mubr.bf16.gmra.mxu0 %v1545
    %v2511 = vpop.f32.mrf.mxu0
    %v2512 = vadd.f32 %v1690, %v2511
    %v2513 = vpop.f32.mrf.mxu0
    %v2514 = vadd.f32 %v1694, %v2513
    %v2515 = vpop.f32.mrf.mxu0
    %v2516 = vadd.f32 %v1690, %v2515
    %v2517 = vpop.f32.mrf.mxu0
    %v2518 = vadd.f32 %v1694, %v2517
    %2519 = vmatprep.mubr.bf16.mxu0 %v1550
    %2520 = vmatmul.mubr.bf16.gmra.mxu0 %v1549
    %v2521 = vpop.f32.mrf.mxu0
    %v2522 = vadd.f32 %v1690, %v2521
    %v2523 = vpop.f32.mrf.mxu0
    %v2524 = vadd.f32 %v1694, %v2523
    %v2525 = vpop.f32.mrf.mxu0
    %v2526 = vadd.f32 %v1690, %v2525
    %v2527 = vpop.f32.mrf.mxu0
    %v2528 = vadd.f32 %v1694, %v2527
    %2529 = vmatprep.mubr.bf16.mxu0 %v1554
    %2530 = vmatmul.mubr.bf16.gmra.mxu0 %v1553
    %v2531 = vpop.f32.mrf.mxu0
    %v2532 = vadd.f32 %v1690, %v2531
    %v2533 = vpop.f32.mrf.mxu0
    %v2534 = vadd.f32 %v1694, %v2533
    %v2535 = vpop.f32.mrf.mxu0
    %v2536 = vadd.f32 %v1690, %v2535
    %v2537 = vpop.f32.mrf.mxu0
    %v2538 = vadd.f32 %v1694, %v2537
    %2539 = vdwg.mxu0
    %2540 = vmatprep.subr.bf16.mxu0 %v2184
    %2541 = vmatpush1.bf16.msra.mxu0 %v2183
    %2542 = vmatprep.subr.bf16.mxu0 %v2180
    %2543 = vmatpush1.bf16.msra.mxu0 %v2179
    %2544 = vmatprep.subr.bf16.mxu0 %v2176
    %2545 = vmatpush1.bf16.msra.mxu0 %v2175
    %2546 = vmatprep.subr.bf16.mxu0 %v2172
    %2547 = vmatpush1.bf16.msra.mxu0 %v2171
    %2548 = vmatprep.subr.bf16.mxu0 %v2168
    %2549 = vmatpush1.bf16.msra.mxu0 %v2167
    %2550 = vmatprep.subr.bf16.mxu0 %v2164
    %2551 = vmatpush1.bf16.msra.mxu0 %v2163
    %2552 = vmatprep.subr.bf16.mxu0 %v2160
    %2553 = vmatpush1.bf16.msra.mxu0 %v2159
    %2554 = vmatprep.subr.bf16.mxu0 %v2156
    %2555 = vmatpush1.bf16.msra.mxu0 %v2155
    %2556 = vmatprep.subr.bf16.mxu0 %v2216
    %2557 = vmatpush2.bf16.msra.mxu0 %v2215
    %2558 = vmatprep.subr.bf16.mxu0 %v2212
    %2559 = vmatpush2.bf16.msra.mxu0 %v2211
    %2560 = vmatprep.subr.bf16.mxu0 %v2208
    %2561 = vmatpush2.bf16.msra.mxu0 %v2207
    %2562 = vmatprep.subr.bf16.mxu0 %v2204
    %2563 = vmatpush2.bf16.msra.mxu0 %v2203
    %2564 = vmatprep.subr.bf16.mxu0 %v2200
    %2565 = vmatpush2.bf16.msra.mxu0 %v2199
    %2566 = vmatprep.subr.bf16.mxu0 %v2196
    %2567 = vmatpush2.bf16.msra.mxu0 %v2195
    %2568 = vmatprep.subr.bf16.mxu0 %v2192
    %2569 = vmatpush2.bf16.msra.mxu0 %v2191
    %2570 = vmatprep.subr.bf16.mxu0 %v2188
    %2571 = vmatpush2.bf16.msra.mxu0 %v2187
    %2572 = vmatprep.mubr.bf16.mxu0 %v1496
    %2573 = vmatmul.mubr.bf16.gmra.mxu0 %v1495
    %v2574 = vpop.f32.mrf.mxu0
    %v2575 = vadd.f32 %v2382, %v2574
    %v2576 = vpop.f32.mrf.mxu0
    %v2577 = vadd.f32 %v2384, %v2576
    %v2578 = vpop.f32.mrf.mxu0
    %v2579 = vadd.f32 %v2386, %v2578
    %v2580 = vpop.f32.mrf.mxu0
    %v2581 = vadd.f32 %v2388, %v2580
    %2582 = vmatprep.mubr.bf16.mxu0 %v1500
    %2583 = vmatmul.mubr.bf16.gmra.mxu0 %v1499
    %v2584 = vpop.f32.mrf.mxu0
    %v2585 = vadd.f32 %v2392, %v2584
    %v2586 = vpop.f32.mrf.mxu0
    %v2587 = vadd.f32 %v2394, %v2586
    %v2588 = vpop.f32.mrf.mxu0
    %v2589 = vadd.f32 %v2396, %v2588
    %v2590 = vpop.f32.mrf.mxu0
    %v2591 = vadd.f32 %v2398, %v2590
    %2592 = vmatprep.mubr.bf16.mxu0 %v1504
    %2593 = vmatmul.mubr.bf16.gmra.mxu0 %v1503
    %v2594 = vpop.f32.mrf.mxu0
    %v2595 = vadd.f32 %v2402, %v2594
    %v2596 = vpop.f32.mrf.mxu0
    %v2597 = vadd.f32 %v2404, %v2596
    %v2598 = vpop.f32.mrf.mxu0
    %v2599 = vadd.f32 %v2406, %v2598
    %v2600 = vpop.f32.mrf.mxu0
    %v2601 = vadd.f32 %v2408, %v2600
    %2602 = vmatprep.mubr.bf16.mxu0 %v1508
    %2603 = vmatmul.mubr.bf16.gmra.mxu0 %v1507
    %v2604 = vpop.f32.mrf.mxu0
    %v2605 = vadd.f32 %v2412, %v2604
    %v2606 = vpop.f32.mrf.mxu0
    %v2607 = vadd.f32 %v2414, %v2606
    %v2608 = vpop.f32.mrf.mxu0
    %v2609 = vadd.f32 %v2416, %v2608
    %v2610 = vpop.f32.mrf.mxu0
    %v2611 = vadd.f32 %v2418, %v2610
    %2612 = vmatprep.mubr.bf16.mxu0 %v1512
    %2613 = vmatmul.mubr.bf16.gmra.mxu0 %v1511
    %v2614 = vpop.f32.mrf.mxu0
    %v2615 = vadd.f32 %v2422, %v2614
    %v2616 = vpop.f32.mrf.mxu0
    %v2617 = vadd.f32 %v2424, %v2616
    %v2618 = vpop.f32.mrf.mxu0
    %v2619 = vadd.f32 %v2426, %v2618
    %v2620 = vpop.f32.mrf.mxu0
    %v2621 = vadd.f32 %v2428, %v2620
    %2622 = vmatprep.mubr.bf16.mxu0 %v1516
    %2623 = vmatmul.mubr.bf16.gmra.mxu0 %v1515
    %v2624 = vpop.f32.mrf.mxu0
    %v2625 = vadd.f32 %v2432, %v2624
    %v2626 = vpop.f32.mrf.mxu0
    %v2627 = vadd.f32 %v2434, %v2626
    %v2628 = vpop.f32.mrf.mxu0
    %v2629 = vadd.f32 %v2436, %v2628
    %v2630 = vpop.f32.mrf.mxu0
    %v2631 = vadd.f32 %v2438, %v2630
    %2632 = vmatprep.mubr.bf16.mxu0 %v1520
    %2633 = vmatmul.mubr.bf16.gmra.mxu0 %v1519
    %v2634 = vpop.f32.mrf.mxu0
    %v2635 = vadd.f32 %v2442, %v2634
    %v2636 = vpop.f32.mrf.mxu0
    %v2637 = vadd.f32 %v2444, %v2636
    %v2638 = vpop.f32.mrf.mxu0
    %v2639 = vadd.f32 %v2446, %v2638
    %v2640 = vpop.f32.mrf.mxu0
    %v2641 = vadd.f32 %v2448, %v2640
    %2642 = vmatprep.mubr.bf16.mxu0 %v1524
    %2643 = vmatmul.mubr.bf16.gmra.mxu0 %v1523
    %v2644 = vpop.f32.mrf.mxu0
    %v2645 = vadd.f32 %v2452, %v2644
    %v2646 = vpop.f32.mrf.mxu0
    %v2647 = vadd.f32 %v2454, %v2646
    %v2648 = vpop.f32.mrf.mxu0
    %v2649 = vadd.f32 %v2456, %v2648
    %v2650 = vpop.f32.mrf.mxu0
    %v2651 = vadd.f32 %v2458, %v2650
    %2652 = vmatprep.mubr.bf16.mxu0 %v1528
    %2653 = vmatmul.mubr.bf16.gmra.mxu0 %v1527
    %v2654 = vpop.f32.mrf.mxu0
    %v2655 = vadd.f32 %v2462, %v2654
    %v2656 = vpop.f32.mrf.mxu0
    %v2657 = vadd.f32 %v2464, %v2656
    %v2658 = vpop.f32.mrf.mxu0
    %v2659 = vadd.f32 %v2466, %v2658
    %v2660 = vpop.f32.mrf.mxu0
    %v2661 = vadd.f32 %v2468, %v2660
    %2662 = vmatprep.mubr.bf16.mxu0 %v1532
    %2663 = vmatmul.mubr.bf16.gmra.mxu0 %v1531
    %v2664 = vpop.f32.mrf.mxu0
    %v2665 = vadd.f32 %v2472, %v2664
    %v2666 = vpop.f32.mrf.mxu0
    %v2667 = vadd.f32 %v2474, %v2666
    %v2668 = vpop.f32.mrf.mxu0
    %v2669 = vadd.f32 %v2476, %v2668
    %v2670 = vpop.f32.mrf.mxu0
    %v2671 = vadd.f32 %v2478, %v2670
    %2672 = vmatprep.mubr.bf16.mxu0 %v1536
    %2673 = vmatmul.mubr.bf16.gmra.mxu0 %v1535
    %v2674 = vpop.f32.mrf.mxu0
    %v2675 = vadd.f32 %v2482, %v2674
    %v2676 = vpop.f32.mrf.mxu0
    %v2677 = vadd.f32 %v2484, %v2676
    %v2678 = vpop.f32.mrf.mxu0
    %v2679 = vadd.f32 %v2486, %v2678
    %v2680 = vpop.f32.mrf.mxu0
    %v2681 = vadd.f32 %v2488, %v2680
    %2682 = vmatprep.mubr.bf16.mxu0 %v1540
    %2683 = vmatmul.mubr.bf16.gmra.mxu0 %v1539
    %v2684 = vpop.f32.mrf.mxu0
    %v2685 = vadd.f32 %v2492, %v2684
    %v2686 = vpop.f32.mrf.mxu0
    %v2687 = vadd.f32 %v2494, %v2686
    %v2688 = vpop.f32.mrf.mxu0
    %v2689 = vadd.f32 %v2496, %v2688
    %v2690 = vpop.f32.mrf.mxu0
    %v2691 = vadd.f32 %v2498, %v2690
    %2692 = vmatprep.mubr.bf16.mxu0 %v1544
    %2693 = vmatmul.mubr.bf16.gmra.mxu0 %v1543
    %v2694 = vpop.f32.mrf.mxu0
    %v2695 = vadd.f32 %v2502, %v2694
    %v2696 = vpop.f32.mrf.mxu0
    %v2697 = vadd.f32 %v2504, %v2696
    %v2698 = vpop.f32.mrf.mxu0
    %v2699 = vadd.f32 %v2506, %v2698
    %v2700 = vpop.f32.mrf.mxu0
    %v2701 = vadd.f32 %v2508, %v2700
    %2702 = vmatprep.mubr.bf16.mxu0 %v1548
    %2703 = vmatmul.mubr.bf16.gmra.mxu0 %v1547
    %v2704 = vpop.f32.mrf.mxu0
    %v2705 = vadd.f32 %v2512, %v2704
    %v2706 = vpop.f32.mrf.mxu0
    %v2707 = vadd.f32 %v2514, %v2706
    %v2708 = vpop.f32.mrf.mxu0
    %v2709 = vadd.f32 %v2516, %v2708
    %v2710 = vpop.f32.mrf.mxu0
    %v2711 = vadd.f32 %v2518, %v2710
    %2712 = vmatprep.mubr.bf16.mxu0 %v1552
    %2713 = vmatmul.mubr.bf16.gmra.mxu0 %v1551
    %v2714 = vpop.f32.mrf.mxu0
    %v2715 = vadd.f32 %v2522, %v2714
    %v2716 = vpop.f32.mrf.mxu0
    %v2717 = vadd.f32 %v2524, %v2716
    %v2718 = vpop.f32.mrf.mxu0
    %v2719 = vadd.f32 %v2526, %v2718
    %v2720 = vpop.f32.mrf.mxu0
    %v2721 = vadd.f32 %v2528, %v2720
    %2722 = vmatprep.mubr.bf16.mxu0 %v1556
    %2723 = vmatmul.mubr.bf16.gmra.mxu0 %v1555
    %v2724 = vpop.f32.mrf.mxu0
    %v2725 = vadd.f32 %v2532, %v2724
    %v2726 = vpop.f32.mrf.mxu0
    %v2727 = vadd.f32 %v2534, %v2726
    %v2728 = vpop.f32.mrf.mxu0
    %v2729 = vadd.f32 %v2536, %v2728
    %v2730 = vpop.f32.mrf.mxu0
    %v2731 = vadd.f32 %v2538, %v2730
    %2732 = vdwg.mxu0
    %2733 = vmatprep.subr.bf16.mxu0 %v2122
    %2734 = vmatpush1.bf16.msra.mxu0 %v2121
    %2735 = vmatprep.subr.bf16.mxu0 %v2118
    %2736 = vmatpush1.bf16.msra.mxu0 %v2117
    %2737 = vmatprep.subr.bf16.mxu0 %v2114
    %2738 = vmatpush1.bf16.msra.mxu0 %v2113
    %2739 = vmatprep.subr.bf16.mxu0 %v2110
    %2740 = vmatpush1.bf16.msra.mxu0 %v2109
    %2741 = vmatprep.subr.bf16.mxu0 %v2106
    %2742 = vmatpush1.bf16.msra.mxu0 %v2105
    %2743 = vmatprep.subr.bf16.mxu0 %v2102
    %2744 = vmatpush1.bf16.msra.mxu0 %v2101
    %2745 = vmatprep.subr.bf16.mxu0 %v2098
    %2746 = vmatpush1.bf16.msra.mxu0 %v2097
    %2747 = vmatprep.subr.bf16.mxu0 %v2094
    %2748 = vmatpush1.bf16.msra.mxu0 %v2093
    %2749 = vmatprep.subr.bf16.mxu0 %v2154
    %2750 = vmatpush2.bf16.msra.mxu0 %v2153
    %2751 = vmatprep.subr.bf16.mxu0 %v2150
    %2752 = vmatpush2.bf16.msra.mxu0 %v2149
    %2753 = vmatprep.subr.bf16.mxu0 %v2146
    %2754 = vmatpush2.bf16.msra.mxu0 %v2145
    %2755 = vmatprep.subr.bf16.mxu0 %v2142
    %2756 = vmatpush2.bf16.msra.mxu0 %v2141
    %2757 = vmatprep.subr.bf16.mxu0 %v2138
    %2758 = vmatpush2.bf16.msra.mxu0 %v2137
    %2759 = vmatprep.subr.bf16.mxu0 %v2134
    %2760 = vmatpush2.bf16.msra.mxu0 %v2133
    %2761 = vmatprep.subr.bf16.mxu0 %v2130
    %2762 = vmatpush2.bf16.msra.mxu0 %v2129
    %2763 = vmatprep.subr.bf16.mxu0 %v2126
    %2764 = vmatpush2.bf16.msra.mxu0 %v2125
    %2765 = vmatprep.mubr.bf16.mxu0 %v1494
    %2766 = vmatmul.mubr.bf16.gmra.mxu0 %v1493
    %v2767 = vpop.f32.mrf.mxu0
    %v2768 = vadd.f32 %v1698, %v2767
    %v2769 = vpop.f32.mrf.mxu0
    %v2770 = vadd.f32 %v1702, %v2769
    %v2771 = vpop.f32.mrf.mxu0
    %v2772 = vadd.f32 %v1698, %v2771
    %v2773 = vpop.f32.mrf.mxu0
    %v2774 = vadd.f32 %v1702, %v2773
    %2775 = vmatprep.mubr.bf16.mxu0 %v1498
    %2776 = vmatmul.mubr.bf16.gmra.mxu0 %v1497
    %v2777 = vpop.f32.mrf.mxu0
    %v2778 = vadd.f32 %v1698, %v2777
    %v2779 = vpop.f32.mrf.mxu0
    %v2780 = vadd.f32 %v1702, %v2779
    %v2781 = vpop.f32.mrf.mxu0
    %v2782 = vadd.f32 %v1698, %v2781
    %v2783 = vpop.f32.mrf.mxu0
    %v2784 = vadd.f32 %v1702, %v2783
    %2785 = vmatprep.mubr.bf16.mxu0 %v1502
    %2786 = vmatmul.mubr.bf16.gmra.mxu0 %v1501
    %v2787 = vpop.f32.mrf.mxu0
    %v2788 = vadd.f32 %v1698, %v2787
    %v2789 = vpop.f32.mrf.mxu0
    %v2790 = vadd.f32 %v1702, %v2789
    %v2791 = vpop.f32.mrf.mxu0
    %v2792 = vadd.f32 %v1698, %v2791
    %v2793 = vpop.f32.mrf.mxu0
    %v2794 = vadd.f32 %v1702, %v2793
    %2795 = vmatprep.mubr.bf16.mxu0 %v1506
    %2796 = vmatmul.mubr.bf16.gmra.mxu0 %v1505
    %v2797 = vpop.f32.mrf.mxu0
    %v2798 = vadd.f32 %v1698, %v2797
    %v2799 = vpop.f32.mrf.mxu0
    %v2800 = vadd.f32 %v1702, %v2799
    %v2801 = vpop.f32.mrf.mxu0
    %v2802 = vadd.f32 %v1698, %v2801
    %v2803 = vpop.f32.mrf.mxu0
    %v2804 = vadd.f32 %v1702, %v2803
    %2805 = vmatprep.mubr.bf16.mxu0 %v1510
    %2806 = vmatmul.mubr.bf16.gmra.mxu0 %v1509
    %v2807 = vpop.f32.mrf.mxu0
    %v2808 = vadd.f32 %v1698, %v2807
    %v2809 = vpop.f32.mrf.mxu0
    %v2810 = vadd.f32 %v1702, %v2809
    %v2811 = vpop.f32.mrf.mxu0
    %v2812 = vadd.f32 %v1698, %v2811
    %v2813 = vpop.f32.mrf.mxu0
    %v2814 = vadd.f32 %v1702, %v2813
    %2815 = vmatprep.mubr.bf16.mxu0 %v1514
    %2816 = vmatmul.mubr.bf16.gmra.mxu0 %v1513
    %v2817 = vpop.f32.mrf.mxu0
    %v2818 = vadd.f32 %v1698, %v2817
    %v2819 = vpop.f32.mrf.mxu0
    %v2820 = vadd.f32 %v1702, %v2819
    %v2821 = vpop.f32.mrf.mxu0
    %v2822 = vadd.f32 %v1698, %v2821
    %v2823 = vpop.f32.mrf.mxu0
    %v2824 = vadd.f32 %v1702, %v2823
    %2825 = vmatprep.mubr.bf16.mxu0 %v1518
    %2826 = vmatmul.mubr.bf16.gmra.mxu0 %v1517
    %v2827 = vpop.f32.mrf.mxu0
    %v2828 = vadd.f32 %v1698, %v2827
    %v2829 = vpop.f32.mrf.mxu0
    %v2830 = vadd.f32 %v1702, %v2829
    %v2831 = vpop.f32.mrf.mxu0
    %v2832 = vadd.f32 %v1698, %v2831
    %v2833 = vpop.f32.mrf.mxu0
    %v2834 = vadd.f32 %v1702, %v2833
    %2835 = vmatprep.mubr.bf16.mxu0 %v1522
    %2836 = vmatmul.mubr.bf16.gmra.mxu0 %v1521
    %v2837 = vpop.f32.mrf.mxu0
    %v2838 = vadd.f32 %v1698, %v2837
    %v2839 = vpop.f32.mrf.mxu0
    %v2840 = vadd.f32 %v1702, %v2839
    %v2841 = vpop.f32.mrf.mxu0
    %v2842 = vadd.f32 %v1698, %v2841
    %v2843 = vpop.f32.mrf.mxu0
    %v2844 = vadd.f32 %v1702, %v2843
    %2845 = vmatprep.mubr.bf16.mxu0 %v1526
    %2846 = vmatmul.mubr.bf16.gmra.mxu0 %v1525
    %v2847 = vpop.f32.mrf.mxu0
    %v2848 = vadd.f32 %v1698, %v2847
    %v2849 = vpop.f32.mrf.mxu0
    %v2850 = vadd.f32 %v1702, %v2849
    %v2851 = vpop.f32.mrf.mxu0
    %v2852 = vadd.f32 %v1698, %v2851
    %v2853 = vpop.f32.mrf.mxu0
    %v2854 = vadd.f32 %v1702, %v2853
    %2855 = vmatprep.mubr.bf16.mxu0 %v1530
    %2856 = vmatmul.mubr.bf16.gmra.mxu0 %v1529
    %v2857 = vpop.f32.mrf.mxu0
    %v2858 = vadd.f32 %v1698, %v2857
    %v2859 = vpop.f32.mrf.mxu0
    %v2860 = vadd.f32 %v1702, %v2859
    %v2861 = vpop.f32.mrf.mxu0
    %v2862 = vadd.f32 %v1698, %v2861
    %v2863 = vpop.f32.mrf.mxu0
    %v2864 = vadd.f32 %v1702, %v2863
    %2865 = vmatprep.mubr.bf16.mxu0 %v1534
    %2866 = vmatmul.mubr.bf16.gmra.mxu0 %v1533
    %v2867 = vpop.f32.mrf.mxu0
    %v2868 = vadd.f32 %v1698, %v2867
    %v2869 = vpop.f32.mrf.mxu0
    %v2870 = vadd.f32 %v1702, %v2869
    %v2871 = vpop.f32.mrf.mxu0
    %v2872 = vadd.f32 %v1698, %v2871
    %v2873 = vpop.f32.mrf.mxu0
    %v2874 = vadd.f32 %v1702, %v2873
    %2875 = vmatprep.mubr.bf16.mxu0 %v1538
    %2876 = vmatmul.mubr.bf16.gmra.mxu0 %v1537
    %v2877 = vpop.f32.mrf.mxu0
    %v2878 = vadd.f32 %v1698, %v2877
    %v2879 = vpop.f32.mrf.mxu0
    %v2880 = vadd.f32 %v1702, %v2879
    %v2881 = vpop.f32.mrf.mxu0
    %v2882 = vadd.f32 %v1698, %v2881
    %v2883 = vpop.f32.mrf.mxu0
    %v2884 = vadd.f32 %v1702, %v2883
    %2885 = vmatprep.mubr.bf16.mxu0 %v1542
    %2886 = vmatmul.mubr.bf16.gmra.mxu0 %v1541
    %v2887 = vpop.f32.mrf.mxu0
    %v2888 = vadd.f32 %v1698, %v2887
    %v2889 = vpop.f32.mrf.mxu0
    %v2890 = vadd.f32 %v1702, %v2889
    %v2891 = vpop.f32.mrf.mxu0
    %v2892 = vadd.f32 %v1698, %v2891
    %v2893 = vpop.f32.mrf.mxu0
    %v2894 = vadd.f32 %v1702, %v2893
    %2895 = vmatprep.mubr.bf16.mxu0 %v1546
    %2896 = vmatmul.mubr.bf16.gmra.mxu0 %v1545
    %v2897 = vpop.f32.mrf.mxu0
    %v2898 = vadd.f32 %v1698, %v2897
    %v2899 = vpop.f32.mrf.mxu0
    %v2900 = vadd.f32 %v1702, %v2899
    %v2901 = vpop.f32.mrf.mxu0
    %v2902 = vadd.f32 %v1698, %v2901
    %v2903 = vpop.f32.mrf.mxu0
    %v2904 = vadd.f32 %v1702, %v2903
    %2905 = vmatprep.mubr.bf16.mxu0 %v1550
    %2906 = vmatmul.mubr.bf16.gmra.mxu0 %v1549
    %v2907 = vpop.f32.mrf.mxu0
    %v2908 = vadd.f32 %v1698, %v2907
    %v2909 = vpop.f32.mrf.mxu0
    %v2910 = vadd.f32 %v1702, %v2909
    %v2911 = vpop.f32.mrf.mxu0
    %v2912 = vadd.f32 %v1698, %v2911
    %v2913 = vpop.f32.mrf.mxu0
    %v2914 = vadd.f32 %v1702, %v2913
    %2915 = vmatprep.mubr.bf16.mxu0 %v1554
    %2916 = vmatmul.mubr.bf16.gmra.mxu0 %v1553
    %v2917 = vpop.f32.mrf.mxu0
    %v2918 = vadd.f32 %v1698, %v2917
    %v2919 = vpop.f32.mrf.mxu0
    %v2920 = vadd.f32 %v1702, %v2919
    %v2921 = vpop.f32.mrf.mxu0
    %v2922 = vadd.f32 %v1698, %v2921
    %v2923 = vpop.f32.mrf.mxu0
    %v2924 = vadd.f32 %v1702, %v2923
    %2925 = vdwg.mxu0
    %2926 = vmatprep.subr.bf16.mxu0 %v2186
    %2927 = vmatpush1.bf16.msra.mxu0 %v2185
    %2928 = vmatprep.subr.bf16.mxu0 %v2182
    %2929 = vmatpush1.bf16.msra.mxu0 %v2181
    %2930 = vmatprep.subr.bf16.mxu0 %v2178
    %2931 = vmatpush1.bf16.msra.mxu0 %v2177
    %2932 = vmatprep.subr.bf16.mxu0 %v2174
    %2933 = vmatpush1.bf16.msra.mxu0 %v2173
    %2934 = vmatprep.subr.bf16.mxu0 %v2170
    %2935 = vmatpush1.bf16.msra.mxu0 %v2169
    %2936 = vmatprep.subr.bf16.mxu0 %v2166
    %2937 = vmatpush1.bf16.msra.mxu0 %v2165
    %2938 = vmatprep.subr.bf16.mxu0 %v2162
    %2939 = vmatpush1.bf16.msra.mxu0 %v2161
    %2940 = vmatprep.subr.bf16.mxu0 %v2158
    %2941 = vmatpush1.bf16.msra.mxu0 %v2157
    %2942 = vmatprep.subr.bf16.mxu0 %v2218
    %2943 = vmatpush2.bf16.msra.mxu0 %v2217
    %2944 = vmatprep.subr.bf16.mxu0 %v2214
    %2945 = vmatpush2.bf16.msra.mxu0 %v2213
    %2946 = vmatprep.subr.bf16.mxu0 %v2210
    %2947 = vmatpush2.bf16.msra.mxu0 %v2209
    %2948 = vmatprep.subr.bf16.mxu0 %v2206
    %2949 = vmatpush2.bf16.msra.mxu0 %v2205
    %2950 = vmatprep.subr.bf16.mxu0 %v2202
    %2951 = vmatpush2.bf16.msra.mxu0 %v2201
    %2952 = vmatprep.subr.bf16.mxu0 %v2198
    %2953 = vmatpush2.bf16.msra.mxu0 %v2197
    %2954 = vmatprep.subr.bf16.mxu0 %v2194
    %2955 = vmatpush2.bf16.msra.mxu0 %v2193
    %2956 = vmatprep.subr.bf16.mxu0 %v2190
    %2957 = vmatpush2.bf16.msra.mxu0 %v2189
    %2958 = vmatprep.mubr.bf16.mxu0 %v1496
    %2959 = vmatmul.mubr.bf16.gmra.mxu0 %v1495
    %v2960 = vpop.f32.mrf.mxu0
    %v2961 = vadd.f32 %v2768, %v2960
    %v2962 = vpop.f32.mrf.mxu0
    %v2963 = vadd.f32 %v2770, %v2962
    %v2964 = vpop.f32.mrf.mxu0
    %v2965 = vadd.f32 %v2772, %v2964
    %v2966 = vpop.f32.mrf.mxu0
    %v2967 = vadd.f32 %v2774, %v2966
    %2968 = vmatprep.mubr.bf16.mxu0 %v1500
    %2969 = vmatmul.mubr.bf16.gmra.mxu0 %v1499
    %v2970 = vpop.f32.mrf.mxu0
    %v2971 = vadd.f32 %v2778, %v2970
    %v2972 = vpop.f32.mrf.mxu0
    %v2973 = vadd.f32 %v2780, %v2972
    %v2974 = vpop.f32.mrf.mxu0
    %v2975 = vadd.f32 %v2782, %v2974
    %v2976 = vpop.f32.mrf.mxu0
    %v2977 = vadd.f32 %v2784, %v2976
    %2978 = vmatprep.mubr.bf16.mxu0 %v1504
    %2979 = vmatmul.mubr.bf16.gmra.mxu0 %v1503
    %v2980 = vpop.f32.mrf.mxu0
    %v2981 = vadd.f32 %v2788, %v2980
    %v2982 = vpop.f32.mrf.mxu0
    %v2983 = vadd.f32 %v2790, %v2982
    %v2984 = vpop.f32.mrf.mxu0
    %v2985 = vadd.f32 %v2792, %v2984
    %v2986 = vpop.f32.mrf.mxu0
    %v2987 = vadd.f32 %v2794, %v2986
    %2988 = vmatprep.mubr.bf16.mxu0 %v1508
    %2989 = vmatmul.mubr.bf16.gmra.mxu0 %v1507
    %v2990 = vpop.f32.mrf.mxu0
    %v2991 = vadd.f32 %v2798, %v2990
    %v2992 = vpop.f32.mrf.mxu0
    %v2993 = vadd.f32 %v2800, %v2992
    %v2994 = vpop.f32.mrf.mxu0
    %v2995 = vadd.f32 %v2802, %v2994
    %v2996 = vpop.f32.mrf.mxu0
    %v2997 = vadd.f32 %v2804, %v2996
    %2998 = vmatprep.mubr.bf16.mxu0 %v1512
    %2999 = vmatmul.mubr.bf16.gmra.mxu0 %v1511
    %v3000 = vpop.f32.mrf.mxu0
    %v3001 = vadd.f32 %v2808, %v3000
    %v3002 = vpop.f32.mrf.mxu0
    %v3003 = vadd.f32 %v2810, %v3002
    %v3004 = vpop.f32.mrf.mxu0
    %v3005 = vadd.f32 %v2812, %v3004
    %v3006 = vpop.f32.mrf.mxu0
    %v3007 = vadd.f32 %v2814, %v3006
    %3008 = vmatprep.mubr.bf16.mxu0 %v1516
    %3009 = vmatmul.mubr.bf16.gmra.mxu0 %v1515
    %v3010 = vpop.f32.mrf.mxu0
    %v3011 = vadd.f32 %v2818, %v3010
    %v3012 = vpop.f32.mrf.mxu0
    %v3013 = vadd.f32 %v2820, %v3012
    %v3014 = vpop.f32.mrf.mxu0
    %v3015 = vadd.f32 %v2822, %v3014
    %v3016 = vpop.f32.mrf.mxu0
    %v3017 = vadd.f32 %v2824, %v3016
    %3018 = vmatprep.mubr.bf16.mxu0 %v1520
    %3019 = vmatmul.mubr.bf16.gmra.mxu0 %v1519
    %v3020 = vpop.f32.mrf.mxu0
    %v3021 = vadd.f32 %v2828, %v3020
    %v3022 = vpop.f32.mrf.mxu0
    %v3023 = vadd.f32 %v2830, %v3022
    %v3024 = vpop.f32.mrf.mxu0
    %v3025 = vadd.f32 %v2832, %v3024
    %v3026 = vpop.f32.mrf.mxu0
    %v3027 = vadd.f32 %v2834, %v3026
    %3028 = vmatprep.mubr.bf16.mxu0 %v1524
    %3029 = vmatmul.mubr.bf16.gmra.mxu0 %v1523
    %v3030 = vpop.f32.mrf.mxu0
    %v3031 = vadd.f32 %v2838, %v3030
    %v3032 = vpop.f32.mrf.mxu0
    %v3033 = vadd.f32 %v2840, %v3032
    %v3034 = vpop.f32.mrf.mxu0
    %v3035 = vadd.f32 %v2842, %v3034
    %v3036 = vpop.f32.mrf.mxu0
    %v3037 = vadd.f32 %v2844, %v3036
    %3038 = vmatprep.mubr.bf16.mxu0 %v1528
    %3039 = vmatmul.mubr.bf16.gmra.mxu0 %v1527
    %v3040 = vpop.f32.mrf.mxu0
    %v3041 = vadd.f32 %v2848, %v3040
    %v3042 = vpop.f32.mrf.mxu0
    %v3043 = vadd.f32 %v2850, %v3042
    %v3044 = vpop.f32.mrf.mxu0
    %v3045 = vadd.f32 %v2852, %v3044
    %v3046 = vpop.f32.mrf.mxu0
    %v3047 = vadd.f32 %v2854, %v3046
    %3048 = vmatprep.mubr.bf16.mxu0 %v1532
    %3049 = vmatmul.mubr.bf16.gmra.mxu0 %v1531
    %v3050 = vpop.f32.mrf.mxu0
    %v3051 = vadd.f32 %v2858, %v3050
    %v3052 = vpop.f32.mrf.mxu0
    %v3053 = vadd.f32 %v2860, %v3052
    %v3054 = vpop.f32.mrf.mxu0
    %v3055 = vadd.f32 %v2862, %v3054
    %v3056 = vpop.f32.mrf.mxu0
    %v3057 = vadd.f32 %v2864, %v3056
    %3058 = vmatprep.mubr.bf16.mxu0 %v1536
    %3059 = vmatmul.mubr.bf16.gmra.mxu0 %v1535
    %v3060 = vpop.f32.mrf.mxu0
    %v3061 = vadd.f32 %v2868, %v3060
    %v3062 = vpop.f32.mrf.mxu0
    %v3063 = vadd.f32 %v2870, %v3062
    %v3064 = vpop.f32.mrf.mxu0
    %v3065 = vadd.f32 %v2872, %v3064
    %v3066 = vpop.f32.mrf.mxu0
    %v3067 = vadd.f32 %v2874, %v3066
    %3068 = vmatprep.mubr.bf16.mxu0 %v1540
    %3069 = vmatmul.mubr.bf16.gmra.mxu0 %v1539
    %v3070 = vpop.f32.mrf.mxu0
    %v3071 = vadd.f32 %v2878, %v3070
    %v3072 = vpop.f32.mrf.mxu0
    %v3073 = vadd.f32 %v2880, %v3072
    %v3074 = vpop.f32.mrf.mxu0
    %v3075 = vadd.f32 %v2882, %v3074
    %v3076 = vpop.f32.mrf.mxu0
    %v3077 = vadd.f32 %v2884, %v3076
    %3078 = vmatprep.mubr.bf16.mxu0 %v1544
    %3079 = vmatmul.mubr.bf16.gmra.mxu0 %v1543
    %v3080 = vpop.f32.mrf.mxu0
    %v3081 = vadd.f32 %v2888, %v3080
    %v3082 = vpop.f32.mrf.mxu0
    %v3083 = vadd.f32 %v2890, %v3082
    %v3084 = vpop.f32.mrf.mxu0
    %v3085 = vadd.f32 %v2892, %v3084
    %v3086 = vpop.f32.mrf.mxu0
    %v3087 = vadd.f32 %v2894, %v3086
    %3088 = vmatprep.mubr.bf16.mxu0 %v1548
    %3089 = vmatmul.mubr.bf16.gmra.mxu0 %v1547
    %v3090 = vpop.f32.mrf.mxu0
    %v3091 = vadd.f32 %v2898, %v3090
    %v3092 = vpop.f32.mrf.mxu0
    %v3093 = vadd.f32 %v2900, %v3092
    %v3094 = vpop.f32.mrf.mxu0
    %v3095 = vadd.f32 %v2902, %v3094
    %v3096 = vpop.f32.mrf.mxu0
    %v3097 = vadd.f32 %v2904, %v3096
    %3098 = vmatprep.mubr.bf16.mxu0 %v1552
    %3099 = vmatmul.mubr.bf16.gmra.mxu0 %v1551
    %v3100 = vpop.f32.mrf.mxu0
    %v3101 = vadd.f32 %v2908, %v3100
    %v3102 = vpop.f32.mrf.mxu0
    %v3103 = vadd.f32 %v2910, %v3102
    %v3104 = vpop.f32.mrf.mxu0
    %v3105 = vadd.f32 %v2912, %v3104
    %v3106 = vpop.f32.mrf.mxu0
    %v3107 = vadd.f32 %v2914, %v3106
    %3108 = vmatprep.mubr.bf16.mxu0 %v1556
    %3109 = vmatmul.mubr.bf16.gmra.mxu0 %v1555
    %v3110 = vpop.f32.mrf.mxu0
    %v3111 = vadd.f32 %v2918, %v3110
    %v3112 = vpop.f32.mrf.mxu0
    %v3113 = vadd.f32 %v2920, %v3112
    %v3114 = vpop.f32.mrf.mxu0
    %v3115 = vadd.f32 %v2922, %v3114
    %v3116 = vpop.f32.mrf.mxu0
    %v3117 = vadd.f32 %v2924, %v3116
    %3118 = vdwg.mxu0
    %v3119 = vmax.f32 %v2575, 0.0
    %v3120 = vmax.f32 %v2577, 0.0
    %v3121 = vmax.f32 %v2961, 0.0
    %v3122 = vmax.f32 %v2963, 0.0
    %v3123 = vmax.f32 %v2579, 0.0
    %v3124 = vmax.f32 %v2581, 0.0
    %v3125 = vmax.f32 %v2965, 0.0
    %v3126 = vmax.f32 %v2967, 0.0
    %v3127 = vmax.f32 %v2585, 0.0
    %v3128 = vmax.f32 %v2587, 0.0
    %v3129 = vmax.f32 %v2971, 0.0
    %v3130 = vmax.f32 %v2973, 0.0
    %v3131 = vmax.f32 %v2589, 0.0
    %v3132 = vmax.f32 %v2591, 0.0
    %v3133 = vmax.f32 %v2975, 0.0
    %v3134 = vmax.f32 %v2977, 0.0
    %v3135 = vmax.f32 %v2595, 0.0
    %v3136 = vmax.f32 %v2597, 0.0
    %v3137 = vmax.f32 %v2981, 0.0
    %v3138 = vmax.f32 %v2983, 0.0
    %v3139 = vmax.f32 %v2599, 0.0
    %v3140 = vmax.f32 %v2601, 0.0
    %v3141 = vmax.f32 %v2985, 0.0
    %v3142 = vmax.f32 %v2987, 0.0
    %v3143 = vmax.f32 %v2605, 0.0
    %v3144 = vmax.f32 %v2607, 0.0
    %v3145 = vmax.f32 %v2991, 0.0
    %v3146 = vmax.f32 %v2993, 0.0
    %v3147 = vmax.f32 %v2609, 0.0
    %v3148 = vmax.f32 %v2611, 0.0
    %v3149 = vmax.f32 %v2995, 0.0
    %v3150 = vmax.f32 %v2997, 0.0
    %v3151 = vmax.f32 %v2615, 0.0
    %v3152 = vmax.f32 %v2617, 0.0
    %v3153 = vmax.f32 %v3001, 0.0
    %v3154 = vmax.f32 %v3003, 0.0
    %v3155 = vmax.f32 %v2619, 0.0
    %v3156 = vmax.f32 %v2621, 0.0
    %v3157 = vmax.f32 %v3005, 0.0
    %v3158 = vmax.f32 %v3007, 0.0
    %v3159 = vmax.f32 %v2625, 0.0
    %v3160 = vmax.f32 %v2627, 0.0
    %v3161 = vmax.f32 %v3011, 0.0
    %v3162 = vmax.f32 %v3013, 0.0
    %v3163 = vmax.f32 %v2629, 0.0
    %v3164 = vmax.f32 %v2631, 0.0
    %v3165 = vmax.f32 %v3015, 0.0
    %v3166 = vmax.f32 %v3017, 0.0
    %v3167 = vmax.f32 %v2635, 0.0
    %v3168 = vmax.f32 %v2637, 0.0
    %v3169 = vmax.f32 %v3021, 0.0
    %v3170 = vmax.f32 %v3023, 0.0
    %v3171 = vmax.f32 %v2639, 0.0
    %v3172 = vmax.f32 %v2641, 0.0
    %v3173 = vmax.f32 %v3025, 0.0
    %v3174 = vmax.f32 %v3027, 0.0
    %v3175 = vmax.f32 %v2645, 0.0
    %v3176 = vmax.f32 %v2647, 0.0
    %v3177 = vmax.f32 %v3031, 0.0
    %v3178 = vmax.f32 %v3033, 0.0
    %v3179 = vmax.f32 %v2649, 0.0
    %v3180 = vmax.f32 %v2651, 0.0
    %v3181 = vmax.f32 %v3035, 0.0
    %v3182 = vmax.f32 %v3037, 0.0
    %v3183 = vmax.f32 %v2655, 0.0
    %v3184 = vmax.f32 %v2657, 0.0
    %v3185 = vmax.f32 %v3041, 0.0
    %v3186 = vmax.f32 %v3043, 0.0
    %v3187 = vmax.f32 %v2659, 0.0
    %v3188 = vmax.f32 %v2661, 0.0
    %v3189 = vmax.f32 %v3045, 0.0
    %v3190 = vmax.f32 %v3047, 0.0
    %v3191 = vmax.f32 %v2665, 0.0
    %v3192 = vmax.f32 %v2667, 0.0
    %v3193 = vmax.f32 %v3051, 0.0
    %v3194 = vmax.f32 %v3053, 0.0
    %v3195 = vmax.f32 %v2669, 0.0
    %v3196 = vmax.f32 %v2671, 0.0
    %v3197 = vmax.f32 %v3055, 0.0
    %v3198 = vmax.f32 %v3057, 0.0
    %v3199 = vmax.f32 %v2675, 0.0
    %v3200 = vmax.f32 %v2677, 0.0
    %v3201 = vmax.f32 %v3061, 0.0
    %v3202 = vmax.f32 %v3063, 0.0
    %v3203 = vmax.f32 %v2679, 0.0
    %v3204 = vmax.f32 %v2681, 0.0
    %v3205 = vmax.f32 %v3065, 0.0
    %v3206 = vmax.f32 %v3067, 0.0
    %v3207 = vmax.f32 %v2685, 0.0
    %v3208 = vmax.f32 %v2687, 0.0
    %v3209 = vmax.f32 %v3071, 0.0
    %v3210 = vmax.f32 %v3073, 0.0
    %v3211 = vmax.f32 %v2689, 0.0
    %v3212 = vmax.f32 %v2691, 0.0
    %v3213 = vmax.f32 %v3075, 0.0
    %v3214 = vmax.f32 %v3077, 0.0
    %v3215 = vmax.f32 %v2695, 0.0
    %v3216 = vmax.f32 %v2697, 0.0
    %v3217 = vmax.f32 %v3081, 0.0
    %v3218 = vmax.f32 %v3083, 0.0
    %v3219 = vmax.f32 %v2699, 0.0
    %v3220 = vmax.f32 %v2701, 0.0
    %v3221 = vmax.f32 %v3085, 0.0
    %v3222 = vmax.f32 %v3087, 0.0
    %v3223 = vmax.f32 %v2705, 0.0
    %v3224 = vmax.f32 %v2707, 0.0
    %v3225 = vmax.f32 %v3091, 0.0
    %v3226 = vmax.f32 %v3093, 0.0
    %v3227 = vmax.f32 %v2709, 0.0
    %v3228 = vmax.f32 %v2711, 0.0
    %v3229 = vmax.f32 %v3095, 0.0
    %v3230 = vmax.f32 %v3097, 0.0
    %v3231 = vmax.f32 %v2715, 0.0
    %v3232 = vmax.f32 %v2717, 0.0
    %v3233 = vmax.f32 %v3101, 0.0
    %v3234 = vmax.f32 %v3103, 0.0
    %v3235 = vmax.f32 %v2719, 0.0
    %v3236 = vmax.f32 %v2721, 0.0
    %v3237 = vmax.f32 %v3105, 0.0
    %v3238 = vmax.f32 %v3107, 0.0
    %v3239 = vmax.f32 %v2725, 0.0
    %v3240 = vmax.f32 %v2727, 0.0
    %v3241 = vmax.f32 %v3111, 0.0
    %v3242 = vmax.f32 %v3113, 0.0
    %v3243 = vmax.f32 %v2729, 0.0
    %v3244 = vmax.f32 %v2731, 0.0
    %v3245 = vmax.f32 %v3115, 0.0
    %v3246 = vmax.f32 %v3117, 0.0
    %v3247 = vpack.c.bf16 %v3123, %v3119
    %v3248 = vpack.c.bf16 %v3124, %v3120
    %v3249 = vpack.c.bf16 %v3125, %v3121
    %v3250 = vpack.c.bf16 %v3126, %v3122
    %v3251 = vpack.c.bf16 %v3131, %v3127
    %v3252 = vpack.c.bf16 %v3132, %v3128
    %v3253 = vpack.c.bf16 %v3133, %v3129
    %v3254 = vpack.c.bf16 %v3134, %v3130
    %v3255 = vpack.c.bf16 %v3139, %v3135
    %v3256 = vpack.c.bf16 %v3140, %v3136
    %v3257 = vpack.c.bf16 %v3141, %v3137
    %v3258 = vpack.c.bf16 %v3142, %v3138
    %v3259 = vpack.c.bf16 %v3147, %v3143
    %v3260 = vpack.c.bf16 %v3148, %v3144
    %v3261 = vpack.c.bf16 %v3149, %v3145
    %v3262 = vpack.c.bf16 %v3150, %v3146
    %v3263 = vpack.c.bf16 %v3155, %v3151
    %v3264 = vpack.c.bf16 %v3156, %v3152
    %v3265 = vpack.c.bf16 %v3157, %v3153
    %v3266 = vpack.c.bf16 %v3158, %v3154
    %v3267 = vpack.c.bf16 %v3163, %v3159
    %v3268 = vpack.c.bf16 %v3164, %v3160
    %v3269 = vpack.c.bf16 %v3165, %v3161
    %v3270 = vpack.c.bf16 %v3166, %v3162
    %v3271 = vpack.c.bf16 %v3171, %v3167
    %v3272 = vpack.c.bf16 %v3172, %v3168
    %v3273 = vpack.c.bf16 %v3173, %v3169
    %v3274 = vpack.c.bf16 %v3174, %v3170
    %v3275 = vpack.c.bf16 %v3179, %v3175
    %v3276 = vpack.c.bf16 %v3180, %v3176
    %v3277 = vpack.c.bf16 %v3181, %v3177
    %v3278 = vpack.c.bf16 %v3182, %v3178
    %v3279 = vpack.c.bf16 %v3187, %v3183
    %v3280 = vpack.c.bf16 %v3188, %v3184
    %v3281 = vpack.c.bf16 %v3189, %v3185
    %v3282 = vpack.c.bf16 %v3190, %v3186
    %v3283 = vpack.c.bf16 %v3195, %v3191
    %v3284 = vpack.c.bf16 %v3196, %v3192
    %v3285 = vpack.c.bf16 %v3197, %v3193
    %v3286 = vpack.c.bf16 %v3198, %v3194
    %v3287 = vpack.c.bf16 %v3203, %v3199
    %v3288 = vpack.c.bf16 %v3204, %v3200
    %v3289 = vpack.c.bf16 %v3205, %v3201
    %v3290 = vpack.c.bf16 %v3206, %v3202
    %v3291 = vpack.c.bf16 %v3211, %v3207
    %v3292 = vpack.c.bf16 %v3212, %v3208
    %v3293 = vpack.c.bf16 %v3213, %v3209
    %v3294 = vpack.c.bf16 %v3214, %v3210
    %v3295 = vpack.c.bf16 %v3219, %v3215
    %v3296 = vpack.c.bf16 %v3220, %v3216
    %v3297 = vpack.c.bf16 %v3221, %v3217
    %v3298 = vpack.c.bf16 %v3222, %v3218
    %v3299 = vpack.c.bf16 %v3227, %v3223
    %v3300 = vpack.c.bf16 %v3228, %v3224
    %v3301 = vpack.c.bf16 %v3229, %v3225
    %v3302 = vpack.c.bf16 %v3230, %v3226
    %v3303 = vpack.c.bf16 %v3235, %v3231
    %v3304 = vpack.c.bf16 %v3236, %v3232
    %v3305 = vpack.c.bf16 %v3237, %v3233
    %v3306 = vpack.c.bf16 %v3238, %v3234
    %v3307 = vpack.c.bf16 %v3243, %v3239
    %v3308 = vpack.c.bf16 %v3244, %v3240
    %v3309 = vpack.c.bf16 %v3245, %v3241
    %v3310 = vpack.c.bf16 %v3246, %v3242
    %v3311 = vld [vmem:[#allocation7] sm:$0xff]
    %v3312 = vld [vmem:[#allocation7 + $0x8] sm:$0xff]
    %v3313 = vld [vmem:[#allocation7 + $0x10] sm:$0xff]
    %v3314 = vld [vmem:[#allocation7 + $0x18] sm:$0xff]
    %v3315 = vld [vmem:[#allocation7 + $0x20] sm:$0xff]
    %v3316 = vld [vmem:[#allocation7 + $0x28] sm:$0xff]
    %v3317 = vld [vmem:[#allocation7 + $0x30] sm:$0xff]
    %v3318 = vld [vmem:[#allocation7 + $0x38] sm:$0xff]
    %v3319 = vld [vmem:[#allocation7 + $0x40] sm:$0xff]
    %v3320 = vld [vmem:[#allocation7 + $0x48] sm:$0xff]
    %v3321 = vld [vmem:[#allocation7 + $0x50] sm:$0xff]
    %v3322 = vld [vmem:[#allocation7 + $0x58] sm:$0xff]
    %v3323 = vld [vmem:[#allocation7 + $0x60] sm:$0xff]
    %v3324 = vld [vmem:[#allocation7 + $0x68] sm:$0xff]
    %v3325 = vld [vmem:[#allocation7 + $0x70] sm:$0xff]
    %v3326 = vld [vmem:[#allocation7 + $0x78] sm:$0xff]
    %v3327 = vld [vmem:[#allocation7 + $0x80] sm:$0xff]
    %v3328 = vld [vmem:[#allocation7 + $0x88] sm:$0xff]
    %v3329 = vld [vmem:[#allocation7 + $0x90] sm:$0xff]
    %v3330 = vld [vmem:[#allocation7 + $0x98] sm:$0xff]
    %v3331 = vld [vmem:[#allocation7 + $0xa0] sm:$0xff]
    %v3332 = vld [vmem:[#allocation7 + $0xa8] sm:$0xff]
    %v3333 = vld [vmem:[#allocation7 + $0xb0] sm:$0xff]
    %v3334 = vld [vmem:[#allocation7 + $0xb8] sm:$0xff]
    %v3335 = vld [vmem:[#allocation7 + $0xc0] sm:$0xff]
    %v3336 = vld [vmem:[#allocation7 + $0xc8] sm:$0xff]
    %v3337 = vld [vmem:[#allocation7 + $0xd0] sm:$0xff]
    %v3338 = vld [vmem:[#allocation7 + $0xd8] sm:$0xff]
    %v3339 = vld [vmem:[#allocation7 + $0xe0] sm:$0xff]
    %v3340 = vld [vmem:[#allocation7 + $0xe8] sm:$0xff]
    %v3341 = vld [vmem:[#allocation7 + $0xf0] sm:$0xff]
    %v3342 = vld [vmem:[#allocation7 + $0xf8] sm:$0xff]
    %v3343 = vld [vmem:[#allocation7 + $0x100] sm:$0xff]
    %v3344 = vld [vmem:[#allocation7 + $0x108] sm:$0xff]
    %v3345 = vld [vmem:[#allocation7 + $0x110] sm:$0xff]
    %v3346 = vld [vmem:[#allocation7 + $0x118] sm:$0xff]
    %v3347 = vld [vmem:[#allocation7 + $0x120] sm:$0xff]
    %v3348 = vld [vmem:[#allocation7 + $0x128] sm:$0xff]
    %v3349 = vld [vmem:[#allocation7 + $0x130] sm:$0xff]
    %v3350 = vld [vmem:[#allocation7 + $0x138] sm:$0xff]
    %v3351 = vld [vmem:[#allocation7 + $0x140] sm:$0xff]
    %v3352 = vld [vmem:[#allocation7 + $0x148] sm:$0xff]
    %v3353 = vld [vmem:[#allocation7 + $0x150] sm:$0xff]
    %v3354 = vld [vmem:[#allocation7 + $0x158] sm:$0xff]
    %v3355 = vld [vmem:[#allocation7 + $0x160] sm:$0xff]
    %v3356 = vld [vmem:[#allocation7 + $0x168] sm:$0xff]
    %v3357 = vld [vmem:[#allocation7 + $0x170] sm:$0xff]
    %v3358 = vld [vmem:[#allocation7 + $0x178] sm:$0xff]
    %v3359 = vld [vmem:[#allocation7 + $0x180] sm:$0xff]
    %v3360 = vld [vmem:[#allocation7 + $0x188] sm:$0xff]
    %v3361 = vld [vmem:[#allocation7 + $0x190] sm:$0xff]
    %v3362 = vld [vmem:[#allocation7 + $0x198] sm:$0xff]
    %v3363 = vld [vmem:[#allocation7 + $0x1a0] sm:$0xff]
    %v3364 = vld [vmem:[#allocation7 + $0x1a8] sm:$0xff]
    %v3365 = vld [vmem:[#allocation7 + $0x1b0] sm:$0xff]
    %v3366 = vld [vmem:[#allocation7 + $0x1b8] sm:$0xff]
    %v3367 = vld [vmem:[#allocation7 + $0x1c0] sm:$0xff]
    %v3368 = vld [vmem:[#allocation7 + $0x1c8] sm:$0xff]
    %v3369 = vld [vmem:[#allocation7 + $0x1d0] sm:$0xff]
    %v3370 = vld [vmem:[#allocation7 + $0x1d8] sm:$0xff]
    %v3371 = vld [vmem:[#allocation7 + $0x1e0] sm:$0xff]
    %v3372 = vld [vmem:[#allocation7 + $0x1e8] sm:$0xff]
    %v3373 = vld [vmem:[#allocation7 + $0x1f0] sm:$0xff]
    %v3374 = vld [vmem:[#allocation7 + $0x1f8] sm:$0xff]
    %v3375 = vld [vmem:[%s8] sm:$0x3]
    %v3377 = vlaneseq
    %v3378 = vshrl.u32 %v3377, 7
    %v3379 = vsub.s32 0, %v3378
    %v3380 = vrot.slane %v3375, %v3379
    %v3381 = vlaneseq
    %v3382 = vshrl.u32 %v3381, 7
    %v3383 = vsub.s32 1, %v3382
    %v3384 = vrot.slane %v3375, %v3383
    %v3451 = vunpack.c.l.b16 %v3311
    %v3452 = vunpack.c.h.b16 %v3311
    %v3453 = vunpack.c.l.b16 %v3312
    %v3454 = vunpack.c.h.b16 %v3312
    %v3455 = vunpack.c.l.b16 %v3313
    %v3456 = vunpack.c.h.b16 %v3313
    %v3457 = vunpack.c.l.b16 %v3314
    %v3458 = vunpack.c.h.b16 %v3314
    %v3459 = vunpack.c.l.b16 %v3315
    %v3460 = vunpack.c.h.b16 %v3315
    %v3461 = vunpack.c.l.b16 %v3316
    %v3462 = vunpack.c.h.b16 %v3316
    %v3463 = vunpack.c.l.b16 %v3317
    %v3464 = vunpack.c.h.b16 %v3317
    %v3465 = vunpack.c.l.b16 %v3318
    %v3466 = vunpack.c.h.b16 %v3318
    %v3467 = vunpack.c.l.b16 %v3319
    %v3468 = vunpack.c.h.b16 %v3319
    %v3469 = vunpack.c.l.b16 %v3320
    %v3470 = vunpack.c.h.b16 %v3320
    %v3471 = vunpack.c.l.b16 %v3321
    %v3472 = vunpack.c.h.b16 %v3321
    %v3473 = vunpack.c.l.b16 %v3322
    %v3474 = vunpack.c.h.b16 %v3322
    %v3475 = vunpack.c.l.b16 %v3323
    %v3476 = vunpack.c.h.b16 %v3323
    %v3477 = vunpack.c.l.b16 %v3324
    %v3478 = vunpack.c.h.b16 %v3324
    %v3479 = vunpack.c.l.b16 %v3325
    %v3480 = vunpack.c.h.b16 %v3325
    %v3481 = vunpack.c.l.b16 %v3326
    %v3482 = vunpack.c.h.b16 %v3326
    %v3483 = vunpack.c.l.b16 %v3327
    %v3484 = vunpack.c.h.b16 %v3327
    %v3485 = vunpack.c.l.b16 %v3328
    %v3486 = vunpack.c.h.b16 %v3328
    %v3487 = vunpack.c.l.b16 %v3329
    %v3488 = vunpack.c.h.b16 %v3329
    %v3489 = vunpack.c.l.b16 %v3330
    %v3490 = vunpack.c.h.b16 %v3330
    %v3491 = vunpack.c.l.b16 %v3331
    %v3492 = vunpack.c.h.b16 %v3331
    %v3493 = vunpack.c.l.b16 %v3332
    %v3494 = vunpack.c.h.b16 %v3332
    %v3495 = vunpack.c.l.b16 %v3333
    %v3496 = vunpack.c.h.b16 %v3333
    %v3497 = vunpack.c.l.b16 %v3334
    %v3498 = vunpack.c.h.b16 %v3334
    %v3499 = vunpack.c.l.b16 %v3335
    %v3500 = vunpack.c.h.b16 %v3335
    %v3501 = vunpack.c.l.b16 %v3336
    %v3502 = vunpack.c.h.b16 %v3336
    %v3503 = vunpack.c.l.b16 %v3337
    %v3504 = vunpack.c.h.b16 %v3337
    %v3505 = vunpack.c.l.b16 %v3338
    %v3506 = vunpack.c.h.b16 %v3338
    %v3507 = vunpack.c.l.b16 %v3339
    %v3508 = vunpack.c.h.b16 %v3339
    %v3509 = vunpack.c.l.b16 %v3340
    %v3510 = vunpack.c.h.b16 %v3340
    %v3511 = vunpack.c.l.b16 %v3341
    %v3512 = vunpack.c.h.b16 %v3341
    %v3513 = vunpack.c.l.b16 %v3342
    %v3514 = vunpack.c.h.b16 %v3342
    %v3515 = vunpack.c.l.b16 %v3343
    %v3516 = vunpack.c.h.b16 %v3343
    %v3517 = vunpack.c.l.b16 %v3344
    %v3518 = vunpack.c.h.b16 %v3344
    %v3519 = vunpack.c.l.b16 %v3345
    %v3520 = vunpack.c.h.b16 %v3345
    %v3521 = vunpack.c.l.b16 %v3346
    %v3522 = vunpack.c.h.b16 %v3346
    %v3523 = vunpack.c.l.b16 %v3347
    %v3524 = vunpack.c.h.b16 %v3347
    %v3525 = vunpack.c.l.b16 %v3348
    %v3526 = vunpack.c.h.b16 %v3348
    %v3527 = vunpack.c.l.b16 %v3349
    %v3528 = vunpack.c.h.b16 %v3349
    %v3529 = vunpack.c.l.b16 %v3350
    %v3530 = vunpack.c.h.b16 %v3350
    %v3531 = vunpack.c.l.b16 %v3351
    %v3532 = vunpack.c.h.b16 %v3351
    %v3533 = vunpack.c.l.b16 %v3352
    %v3534 = vunpack.c.h.b16 %v3352
    %v3535 = vunpack.c.l.b16 %v3353
    %v3536 = vunpack.c.h.b16 %v3353
    %v3537 = vunpack.c.l.b16 %v3354
    %v3538 = vunpack.c.h.b16 %v3354
    %v3539 = vunpack.c.l.b16 %v3355
    %v3540 = vunpack.c.h.b16 %v3355
    %v3541 = vunpack.c.l.b16 %v3356
    %v3542 = vunpack.c.h.b16 %v3356
    %v3543 = vunpack.c.l.b16 %v3357
    %v3544 = vunpack.c.h.b16 %v3357
    %v3545 = vunpack.c.l.b16 %v3358
    %v3546 = vunpack.c.h.b16 %v3358
    %v3547 = vunpack.c.l.b16 %v3359
    %v3548 = vunpack.c.h.b16 %v3359
    %v3549 = vunpack.c.l.b16 %v3360
    %v3550 = vunpack.c.h.b16 %v3360
    %v3551 = vunpack.c.l.b16 %v3361
    %v3552 = vunpack.c.h.b16 %v3361
    %v3553 = vunpack.c.l.b16 %v3362
    %v3554 = vunpack.c.h.b16 %v3362
    %v3555 = vunpack.c.l.b16 %v3363
    %v3556 = vunpack.c.h.b16 %v3363
    %v3557 = vunpack.c.l.b16 %v3364
    %v3558 = vunpack.c.h.b16 %v3364
    %v3559 = vunpack.c.l.b16 %v3365
    %v3560 = vunpack.c.h.b16 %v3365
    %v3561 = vunpack.c.l.b16 %v3366
    %v3562 = vunpack.c.h.b16 %v3366
    %v3563 = vunpack.c.l.b16 %v3367
    %v3564 = vunpack.c.h.b16 %v3367
    %v3565 = vunpack.c.l.b16 %v3368
    %v3566 = vunpack.c.h.b16 %v3368
    %v3567 = vunpack.c.l.b16 %v3369
    %v3568 = vunpack.c.h.b16 %v3369
    %v3569 = vunpack.c.l.b16 %v3370
    %v3570 = vunpack.c.h.b16 %v3370
    %v3571 = vunpack.c.l.b16 %v3371
    %v3572 = vunpack.c.h.b16 %v3371
    %v3573 = vunpack.c.l.b16 %v3372
    %v3574 = vunpack.c.h.b16 %v3372
    %v3575 = vunpack.c.l.b16 %v3373
    %v3576 = vunpack.c.h.b16 %v3373
    %v3577 = vunpack.c.l.b16 %v3374
    %v3578 = vunpack.c.h.b16 %v3374
    %v3579 = vpack.c.b16 %v3453, %v3451
    %v3580 = vpack.c.b16 %v3454, %v3452
    %v3581 = vpack.c.b16 %v3457, %v3455
    %v3582 = vpack.c.b16 %v3458, %v3456
    %v3583 = vpack.c.b16 %v3461, %v3459
    %v3584 = vpack.c.b16 %v3462, %v3460
    %v3585 = vpack.c.b16 %v3465, %v3463
    %v3586 = vpack.c.b16 %v3466, %v3464
    %v3587 = vpack.c.b16 %v3469, %v3467
    %v3588 = vpack.c.b16 %v3470, %v3468
    %v3589 = vpack.c.b16 %v3473, %v3471
    %v3590 = vpack.c.b16 %v3474, %v3472
    %v3591 = vpack.c.b16 %v3477, %v3475
    %v3592 = vpack.c.b16 %v3478, %v3476
    %v3593 = vpack.c.b16 %v3481, %v3479
    %v3594 = vpack.c.b16 %v3482, %v3480
    %v3595 = vpack.c.b16 %v3485, %v3483
    %v3596 = vpack.c.b16 %v3486, %v3484
    %v3597 = vpack.c.b16 %v3489, %v3487
    %v3598 = vpack.c.b16 %v3490, %v3488
    %v3599 = vpack.c.b16 %v3493, %v3491
    %v3600 = vpack.c.b16 %v3494, %v3492
    %v3601 = vpack.c.b16 %v3497, %v3495
    %v3602 = vpack.c.b16 %v3498, %v3496
    %v3603 = vpack.c.b16 %v3501, %v3499
    %v3604 = vpack.c.b16 %v3502, %v3500
    %v3605 = vpack.c.b16 %v3505, %v3503
    %v3606 = vpack.c.b16 %v3506, %v3504
    %v3607 = vpack.c.b16 %v3509, %v3507
    %v3608 = vpack.c.b16 %v3510, %v3508
    %v3609 = vpack.c.b16 %v3513, %v3511
    %v3610 = vpack.c.b16 %v3514, %v3512
    %v3611 = vpack.c.b16 %v3517, %v3515
    %v3612 = vpack.c.b16 %v3518, %v3516
    %v3613 = vpack.c.b16 %v3521, %v3519
    %v3614 = vpack.c.b16 %v3522, %v3520
    %v3615 = vpack.c.b16 %v3525, %v3523
    %v3616 = vpack.c.b16 %v3526, %v3524
    %v3617 = vpack.c.b16 %v3529, %v3527
    %v3618 = vpack.c.b16 %v3530, %v3528
    %v3619 = vpack.c.b16 %v3533, %v3531
    %v3620 = vpack.c.b16 %v3534, %v3532
    %v3621 = vpack.c.b16 %v3537, %v3535
    %v3622 = vpack.c.b16 %v3538, %v3536
    %v3623 = vpack.c.b16 %v3541, %v3539
    %v3624 = vpack.c.b16 %v3542, %v3540
    %v3625 = vpack.c.b16 %v3545, %v3543
    %v3626 = vpack.c.b16 %v3546, %v3544
    %v3627 = vpack.c.b16 %v3549, %v3547
    %v3628 = vpack.c.b16 %v3550, %v3548
    %v3629 = vpack.c.b16 %v3553, %v3551
    %v3630 = vpack.c.b16 %v3554, %v3552
    %v3631 = vpack.c.b16 %v3557, %v3555
    %v3632 = vpack.c.b16 %v3558, %v3556
    %v3633 = vpack.c.b16 %v3561, %v3559
    %v3634 = vpack.c.b16 %v3562, %v3560
    %v3635 = vpack.c.b16 %v3565, %v3563
    %v3636 = vpack.c.b16 %v3566, %v3564
    %v3637 = vpack.c.b16 %v3569, %v3567
    %v3638 = vpack.c.b16 %v3570, %v3568
    %v3639 = vpack.c.b16 %v3573, %v3571
    %v3640 = vpack.c.b16 %v3574, %v3572
    %v3641 = vpack.c.b16 %v3577, %v3575
    %v3642 = vpack.c.b16 %v3578, %v3576
    %3707 = vmatprep.subr.bf16.mxu0 %v3594
    %3708 = vmatpush1.bf16.msra.mxu0 %v3593
    %3709 = vmatprep.subr.bf16.mxu0 %v3592
    %3710 = vmatpush1.bf16.msra.mxu0 %v3591
    %3711 = vmatprep.subr.bf16.mxu0 %v3590
    %3712 = vmatpush1.bf16.msra.mxu0 %v3589
    %3713 = vmatprep.subr.bf16.mxu0 %v3588
    %3714 = vmatpush1.bf16.msra.mxu0 %v3587
    %3715 = vmatprep.subr.bf16.mxu0 %v3586
    %3716 = vmatpush1.bf16.msra.mxu0 %v3585
    %3717 = vmatprep.subr.bf16.mxu0 %v3584
    %3718 = vmatpush1.bf16.msra.mxu0 %v3583
    %3719 = vmatprep.subr.bf16.mxu0 %v3582
    %3720 = vmatpush1.bf16.msra.mxu0 %v3581
    %3721 = vmatprep.subr.bf16.mxu0 %v3580
    %3722 = vmatpush1.bf16.msra.mxu0 %v3579
    %3723 = vmatprep.subr.bf16.mxu0 %v3610
    %3724 = vmatpush2.bf16.msra.mxu0 %v3609
    %3725 = vmatprep.subr.bf16.mxu0 %v3608
    %3726 = vmatpush2.bf16.msra.mxu0 %v3607
    %3727 = vmatprep.subr.bf16.mxu0 %v3606
    %3728 = vmatpush2.bf16.msra.mxu0 %v3605
    %3729 = vmatprep.subr.bf16.mxu0 %v3604
    %3730 = vmatpush2.bf16.msra.mxu0 %v3603
    %3731 = vmatprep.subr.bf16.mxu0 %v3602
    %3732 = vmatpush2.bf16.msra.mxu0 %v3601
    %3733 = vmatprep.subr.bf16.mxu0 %v3600
    %3734 = vmatpush2.bf16.msra.mxu0 %v3599
    %3735 = vmatprep.subr.bf16.mxu0 %v3598
    %3736 = vmatpush2.bf16.msra.mxu0 %v3597
    %3737 = vmatprep.subr.bf16.mxu0 %v3596
    %3738 = vmatpush2.bf16.msra.mxu0 %v3595
    %3739 = vmatprep.mubr.bf16.mxu0 %v3248
    %3740 = vmatmul.mubr.bf16.gmra.mxu0 %v3247
    %v3741 = vpop.f32.mrf.mxu0
    %v3742 = vadd.f32 %v3380, %v3741
    %v3743 = vpop.f32.mrf.mxu0
    %v3744 = vadd.f32 %v3384, %v3743
    %v3745 = vpop.f32.mrf.mxu0
    %v3746 = vadd.f32 %v3380, %v3745
    %v3747 = vpop.f32.mrf.mxu0
    %v3748 = vadd.f32 %v3384, %v3747
    %3749 = vmatprep.mubr.bf16.mxu0 %v3252
    %3750 = vmatmul.mubr.bf16.gmra.mxu0 %v3251
    %v3751 = vpop.f32.mrf.mxu0
    %v3752 = vadd.f32 %v3380, %v3751
    %v3753 = vpop.f32.mrf.mxu0
    %v3754 = vadd.f32 %v3384, %v3753
    %v3755 = vpop.f32.mrf.mxu0
    %v3756 = vadd.f32 %v3380, %v3755
    %v3757 = vpop.f32.mrf.mxu0
    %v3758 = vadd.f32 %v3384, %v3757
    %3759 = vmatprep.mubr.bf16.mxu0 %v3256
    %3760 = vmatmul.mubr.bf16.gmra.mxu0 %v3255
    %v3761 = vpop.f32.mrf.mxu0
    %v3762 = vadd.f32 %v3380, %v3761
    %v3763 = vpop.f32.mrf.mxu0
    %v3764 = vadd.f32 %v3384, %v3763
    %v3765 = vpop.f32.mrf.mxu0
    %v3766 = vadd.f32 %v3380, %v3765
    %v3767 = vpop.f32.mrf.mxu0
    %v3768 = vadd.f32 %v3384, %v3767
    %3769 = vmatprep.mubr.bf16.mxu0 %v3260
    %3770 = vmatmul.mubr.bf16.gmra.mxu0 %v3259
    %v3771 = vpop.f32.mrf.mxu0
    %v3772 = vadd.f32 %v3380, %v3771
    %v3773 = vpop.f32.mrf.mxu0
    %v3774 = vadd.f32 %v3384, %v3773
    %v3775 = vpop.f32.mrf.mxu0
    %v3776 = vadd.f32 %v3380, %v3775
    %v3777 = vpop.f32.mrf.mxu0
    %v3778 = vadd.f32 %v3384, %v3777
    %3779 = vmatprep.mubr.bf16.mxu0 %v3264
    %3780 = vmatmul.mubr.bf16.gmra.mxu0 %v3263
    %v3781 = vpop.f32.mrf.mxu0
    %v3782 = vadd.f32 %v3380, %v3781
    %v3783 = vpop.f32.mrf.mxu0
    %v3784 = vadd.f32 %v3384, %v3783
    %v3785 = vpop.f32.mrf.mxu0
    %v3786 = vadd.f32 %v3380, %v3785
    %v3787 = vpop.f32.mrf.mxu0
    %v3788 = vadd.f32 %v3384, %v3787
    %3789 = vmatprep.mubr.bf16.mxu0 %v3268
    %3790 = vmatmul.mubr.bf16.gmra.mxu0 %v3267
    %v3791 = vpop.f32.mrf.mxu0
    %v3792 = vadd.f32 %v3380, %v3791
    %v3793 = vpop.f32.mrf.mxu0
    %v3794 = vadd.f32 %v3384, %v3793
    %v3795 = vpop.f32.mrf.mxu0
    %v3796 = vadd.f32 %v3380, %v3795
    %v3797 = vpop.f32.mrf.mxu0
    %v3798 = vadd.f32 %v3384, %v3797
    %3799 = vmatprep.mubr.bf16.mxu0 %v3272
    %3800 = vmatmul.mubr.bf16.gmra.mxu0 %v3271
    %v3801 = vpop.f32.mrf.mxu0
    %v3802 = vadd.f32 %v3380, %v3801
    %v3803 = vpop.f32.mrf.mxu0
    %v3804 = vadd.f32 %v3384, %v3803
    %v3805 = vpop.f32.mrf.mxu0
    %v3806 = vadd.f32 %v3380, %v3805
    %v3807 = vpop.f32.mrf.mxu0
    %v3808 = vadd.f32 %v3384, %v3807
    %3809 = vmatprep.mubr.bf16.mxu0 %v3276
    %3810 = vmatmul.mubr.bf16.gmra.mxu0 %v3275
    %v3811 = vpop.f32.mrf.mxu0
    %v3812 = vadd.f32 %v3380, %v3811
    %v3813 = vpop.f32.mrf.mxu0
    %v3814 = vadd.f32 %v3384, %v3813
    %v3815 = vpop.f32.mrf.mxu0
    %v3816 = vadd.f32 %v3380, %v3815
    %v3817 = vpop.f32.mrf.mxu0
    %v3818 = vadd.f32 %v3384, %v3817
    %3819 = vmatprep.mubr.bf16.mxu0 %v3280
    %3820 = vmatmul.mubr.bf16.gmra.mxu0 %v3279
    %v3821 = vpop.f32.mrf.mxu0
    %v3822 = vadd.f32 %v3380, %v3821
    %v3823 = vpop.f32.mrf.mxu0
    %v3824 = vadd.f32 %v3384, %v3823
    %v3825 = vpop.f32.mrf.mxu0
    %v3826 = vadd.f32 %v3380, %v3825
    %v3827 = vpop.f32.mrf.mxu0
    %v3828 = vadd.f32 %v3384, %v3827
    %3829 = vmatprep.mubr.bf16.mxu0 %v3284
    %3830 = vmatmul.mubr.bf16.gmra.mxu0 %v3283
    %v3831 = vpop.f32.mrf.mxu0
    %v3832 = vadd.f32 %v3380, %v3831
    %v3833 = vpop.f32.mrf.mxu0
    %v3834 = vadd.f32 %v3384, %v3833
    %v3835 = vpop.f32.mrf.mxu0
    %v3836 = vadd.f32 %v3380, %v3835
    %v3837 = vpop.f32.mrf.mxu0
    %v3838 = vadd.f32 %v3384, %v3837
    %3839 = vmatprep.mubr.bf16.mxu0 %v3288
    %3840 = vmatmul.mubr.bf16.gmra.mxu0 %v3287
    %v3841 = vpop.f32.mrf.mxu0
    %v3842 = vadd.f32 %v3380, %v3841
    %v3843 = vpop.f32.mrf.mxu0
    %v3844 = vadd.f32 %v3384, %v3843
    %v3845 = vpop.f32.mrf.mxu0
    %v3846 = vadd.f32 %v3380, %v3845
    %v3847 = vpop.f32.mrf.mxu0
    %v3848 = vadd.f32 %v3384, %v3847
    %3849 = vmatprep.mubr.bf16.mxu0 %v3292
    %3850 = vmatmul.mubr.bf16.gmra.mxu0 %v3291
    %v3851 = vpop.f32.mrf.mxu0
    %v3852 = vadd.f32 %v3380, %v3851
    %v3853 = vpop.f32.mrf.mxu0
    %v3854 = vadd.f32 %v3384, %v3853
    %v3855 = vpop.f32.mrf.mxu0
    %v3856 = vadd.f32 %v3380, %v3855
    %v3857 = vpop.f32.mrf.mxu0
    %v3858 = vadd.f32 %v3384, %v3857
    %3859 = vmatprep.mubr.bf16.mxu0 %v3296
    %3860 = vmatmul.mubr.bf16.gmra.mxu0 %v3295
    %v3861 = vpop.f32.mrf.mxu0
    %v3862 = vadd.f32 %v3380, %v3861
    %v3863 = vpop.f32.mrf.mxu0
    %v3864 = vadd.f32 %v3384, %v3863
    %v3865 = vpop.f32.mrf.mxu0
    %v3866 = vadd.f32 %v3380, %v3865
    %v3867 = vpop.f32.mrf.mxu0
    %v3868 = vadd.f32 %v3384, %v3867
    %3869 = vmatprep.mubr.bf16.mxu0 %v3300
    %3870 = vmatmul.mubr.bf16.gmra.mxu0 %v3299
    %v3871 = vpop.f32.mrf.mxu0
    %v3872 = vadd.f32 %v3380, %v3871
    %v3873 = vpop.f32.mrf.mxu0
    %v3874 = vadd.f32 %v3384, %v3873
    %v3875 = vpop.f32.mrf.mxu0
    %v3876 = vadd.f32 %v3380, %v3875
    %v3877 = vpop.f32.mrf.mxu0
    %v3878 = vadd.f32 %v3384, %v3877
    %3879 = vmatprep.mubr.bf16.mxu0 %v3304
    %3880 = vmatmul.mubr.bf16.gmra.mxu0 %v3303
    %v3881 = vpop.f32.mrf.mxu0
    %v3882 = vadd.f32 %v3380, %v3881
    %v3883 = vpop.f32.mrf.mxu0
    %v3884 = vadd.f32 %v3384, %v3883
    %v3885 = vpop.f32.mrf.mxu0
    %v3886 = vadd.f32 %v3380, %v3885
    %v3887 = vpop.f32.mrf.mxu0
    %v3888 = vadd.f32 %v3384, %v3887
    %3889 = vmatprep.mubr.bf16.mxu0 %v3308
    %3890 = vmatmul.mubr.bf16.gmra.mxu0 %v3307
    %v3891 = vpop.f32.mrf.mxu0
    %v3892 = vadd.f32 %v3380, %v3891
    %v3893 = vpop.f32.mrf.mxu0
    %v3894 = vadd.f32 %v3384, %v3893
    %v3895 = vpop.f32.mrf.mxu0
    %v3896 = vadd.f32 %v3380, %v3895
    %v3897 = vpop.f32.mrf.mxu0
    %v3898 = vadd.f32 %v3384, %v3897
    %3899 = vdwg.mxu0
    %3900 = vmatprep.subr.bf16.mxu0 %v3626
    %3901 = vmatpush1.bf16.msra.mxu0 %v3625
    %3902 = vmatprep.subr.bf16.mxu0 %v3624
    %3903 = vmatpush1.bf16.msra.mxu0 %v3623
    %3904 = vmatprep.subr.bf16.mxu0 %v3622
    %3905 = vmatpush1.bf16.msra.mxu0 %v3621
    %3906 = vmatprep.subr.bf16.mxu0 %v3620
    %3907 = vmatpush1.bf16.msra.mxu0 %v3619
    %3908 = vmatprep.subr.bf16.mxu0 %v3618
    %3909 = vmatpush1.bf16.msra.mxu0 %v3617
    %3910 = vmatprep.subr.bf16.mxu0 %v3616
    %3911 = vmatpush1.bf16.msra.mxu0 %v3615
    %3912 = vmatprep.subr.bf16.mxu0 %v3614
    %3913 = vmatpush1.bf16.msra.mxu0 %v3613
    %3914 = vmatprep.subr.bf16.mxu0 %v3612
    %3915 = vmatpush1.bf16.msra.mxu0 %v3611
    %3916 = vmatprep.subr.bf16.mxu0 %v3642
    %3917 = vmatpush2.bf16.msra.mxu0 %v3641
    %3918 = vmatprep.subr.bf16.mxu0 %v3640
    %3919 = vmatpush2.bf16.msra.mxu0 %v3639
    %3920 = vmatprep.subr.bf16.mxu0 %v3638
    %3921 = vmatpush2.bf16.msra.mxu0 %v3637
    %3922 = vmatprep.subr.bf16.mxu0 %v3636
    %3923 = vmatpush2.bf16.msra.mxu0 %v3635
    %3924 = vmatprep.subr.bf16.mxu0 %v3634
    %3925 = vmatpush2.bf16.msra.mxu0 %v3633
    %3926 = vmatprep.subr.bf16.mxu0 %v3632
    %3927 = vmatpush2.bf16.msra.mxu0 %v3631
    %3928 = vmatprep.subr.bf16.mxu0 %v3630
    %3929 = vmatpush2.bf16.msra.mxu0 %v3629
    %3930 = vmatprep.subr.bf16.mxu0 %v3628
    %3931 = vmatpush2.bf16.msra.mxu0 %v3627
    %3932 = vmatprep.mubr.bf16.mxu0 %v3250
    %3933 = vmatmul.mubr.bf16.gmra.mxu0 %v3249
    %v3934 = vpop.f32.mrf.mxu0
    %v3935 = vadd.f32 %v3742, %v3934
    %v3936 = vpop.f32.mrf.mxu0
    %v3937 = vadd.f32 %v3744, %v3936
    %v3938 = vpop.f32.mrf.mxu0
    %v3939 = vadd.f32 %v3746, %v3938
    %v3940 = vpop.f32.mrf.mxu0
    %v3941 = vadd.f32 %v3748, %v3940
    %3942 = vmatprep.mubr.bf16.mxu0 %v3254
    %3943 = vmatmul.mubr.bf16.gmra.mxu0 %v3253
    %v3944 = vpop.f32.mrf.mxu0
    %v3945 = vadd.f32 %v3752, %v3944
    %v3946 = vpop.f32.mrf.mxu0
    %v3947 = vadd.f32 %v3754, %v3946
    %v3948 = vpop.f32.mrf.mxu0
    %v3949 = vadd.f32 %v3756, %v3948
    %v3950 = vpop.f32.mrf.mxu0
    %v3951 = vadd.f32 %v3758, %v3950
    %3952 = vmatprep.mubr.bf16.mxu0 %v3258
    %3953 = vmatmul.mubr.bf16.gmra.mxu0 %v3257
    %v3954 = vpop.f32.mrf.mxu0
    %v3955 = vadd.f32 %v3762, %v3954
    %v3956 = vpop.f32.mrf.mxu0
    %v3957 = vadd.f32 %v3764, %v3956
    %v3958 = vpop.f32.mrf.mxu0
    %v3959 = vadd.f32 %v3766, %v3958
    %v3960 = vpop.f32.mrf.mxu0
    %v3961 = vadd.f32 %v3768, %v3960
    %3962 = vmatprep.mubr.bf16.mxu0 %v3262
    %3963 = vmatmul.mubr.bf16.gmra.mxu0 %v3261
    %v3964 = vpop.f32.mrf.mxu0
    %v3965 = vadd.f32 %v3772, %v3964
    %v3966 = vpop.f32.mrf.mxu0
    %v3967 = vadd.f32 %v3774, %v3966
    %v3968 = vpop.f32.mrf.mxu0
    %v3969 = vadd.f32 %v3776, %v3968
    %v3970 = vpop.f32.mrf.mxu0
    %v3971 = vadd.f32 %v3778, %v3970
    %3972 = vmatprep.mubr.bf16.mxu0 %v3266
    %3973 = vmatmul.mubr.bf16.gmra.mxu0 %v3265
    %v3974 = vpop.f32.mrf.mxu0
    %v3975 = vadd.f32 %v3782, %v3974
    %v3976 = vpop.f32.mrf.mxu0
    %v3977 = vadd.f32 %v3784, %v3976
    %v3978 = vpop.f32.mrf.mxu0
    %v3979 = vadd.f32 %v3786, %v3978
    %v3980 = vpop.f32.mrf.mxu0
    %v3981 = vadd.f32 %v3788, %v3980
    %3982 = vmatprep.mubr.bf16.mxu0 %v3270
    %3983 = vmatmul.mubr.bf16.gmra.mxu0 %v3269
    %v3984 = vpop.f32.mrf.mxu0
    %v3985 = vadd.f32 %v3792, %v3984
    %v3986 = vpop.f32.mrf.mxu0
    %v3987 = vadd.f32 %v3794, %v3986
    %v3988 = vpop.f32.mrf.mxu0
    %v3989 = vadd.f32 %v3796, %v3988
    %v3990 = vpop.f32.mrf.mxu0
    %v3991 = vadd.f32 %v3798, %v3990
    %3992 = vmatprep.mubr.bf16.mxu0 %v3274
    %3993 = vmatmul.mubr.bf16.gmra.mxu0 %v3273
    %v3994 = vpop.f32.mrf.mxu0
    %v3995 = vadd.f32 %v3802, %v3994
    %v3996 = vpop.f32.mrf.mxu0
    %v3997 = vadd.f32 %v3804, %v3996
    %v3998 = vpop.f32.mrf.mxu0
    %v3999 = vadd.f32 %v3806, %v3998
    %v4000 = vpop.f32.mrf.mxu0
    %v4001 = vadd.f32 %v3808, %v4000
    %4002 = vmatprep.mubr.bf16.mxu0 %v3278
    %4003 = vmatmul.mubr.bf16.gmra.mxu0 %v3277
    %v4004 = vpop.f32.mrf.mxu0
    %v4005 = vadd.f32 %v3812, %v4004
    %v4006 = vpop.f32.mrf.mxu0
    %v4007 = vadd.f32 %v3814, %v4006
    %v4008 = vpop.f32.mrf.mxu0
    %v4009 = vadd.f32 %v3816, %v4008
    %v4010 = vpop.f32.mrf.mxu0
    %v4011 = vadd.f32 %v3818, %v4010
    %4012 = vmatprep.mubr.bf16.mxu0 %v3282
    %4013 = vmatmul.mubr.bf16.gmra.mxu0 %v3281
    %v4014 = vpop.f32.mrf.mxu0
    %v4015 = vadd.f32 %v3822, %v4014
    %v4016 = vpop.f32.mrf.mxu0
    %v4017 = vadd.f32 %v3824, %v4016
    %v4018 = vpop.f32.mrf.mxu0
    %v4019 = vadd.f32 %v3826, %v4018
    %v4020 = vpop.f32.mrf.mxu0
    %v4021 = vadd.f32 %v3828, %v4020
    %4022 = vmatprep.mubr.bf16.mxu0 %v3286
    %4023 = vmatmul.mubr.bf16.gmra.mxu0 %v3285
    %v4024 = vpop.f32.mrf.mxu0
    %v4025 = vadd.f32 %v3832, %v4024
    %v4026 = vpop.f32.mrf.mxu0
    %v4027 = vadd.f32 %v3834, %v4026
    %v4028 = vpop.f32.mrf.mxu0
    %v4029 = vadd.f32 %v3836, %v4028
    %v4030 = vpop.f32.mrf.mxu0
    %v4031 = vadd.f32 %v3838, %v4030
    %4032 = vmatprep.mubr.bf16.mxu0 %v3290
    %4033 = vmatmul.mubr.bf16.gmra.mxu0 %v3289
    %v4034 = vpop.f32.mrf.mxu0
    %v4035 = vadd.f32 %v3842, %v4034
    %v4036 = vpop.f32.mrf.mxu0
    %v4037 = vadd.f32 %v3844, %v4036
    %v4038 = vpop.f32.mrf.mxu0
    %v4039 = vadd.f32 %v3846, %v4038
    %v4040 = vpop.f32.mrf.mxu0
    %v4041 = vadd.f32 %v3848, %v4040
    %4042 = vmatprep.mubr.bf16.mxu0 %v3294
    %4043 = vmatmul.mubr.bf16.gmra.mxu0 %v3293
    %v4044 = vpop.f32.mrf.mxu0
    %v4045 = vadd.f32 %v3852, %v4044
    %v4046 = vpop.f32.mrf.mxu0
    %v4047 = vadd.f32 %v3854, %v4046
    %v4048 = vpop.f32.mrf.mxu0
    %v4049 = vadd.f32 %v3856, %v4048
    %v4050 = vpop.f32.mrf.mxu0
    %v4051 = vadd.f32 %v3858, %v4050
    %4052 = vmatprep.mubr.bf16.mxu0 %v3298
    %4053 = vmatmul.mubr.bf16.gmra.mxu0 %v3297
    %v4054 = vpop.f32.mrf.mxu0
    %v4055 = vadd.f32 %v3862, %v4054
    %v4056 = vpop.f32.mrf.mxu0
    %v4057 = vadd.f32 %v3864, %v4056
    %v4058 = vpop.f32.mrf.mxu0
    %v4059 = vadd.f32 %v3866, %v4058
    %v4060 = vpop.f32.mrf.mxu0
    %v4061 = vadd.f32 %v3868, %v4060
    %4062 = vmatprep.mubr.bf16.mxu0 %v3302
    %4063 = vmatmul.mubr.bf16.gmra.mxu0 %v3301
    %v4064 = vpop.f32.mrf.mxu0
    %v4065 = vadd.f32 %v3872, %v4064
    %v4066 = vpop.f32.mrf.mxu0
    %v4067 = vadd.f32 %v3874, %v4066
    %v4068 = vpop.f32.mrf.mxu0
    %v4069 = vadd.f32 %v3876, %v4068
    %v4070 = vpop.f32.mrf.mxu0
    %v4071 = vadd.f32 %v3878, %v4070
    %4072 = vmatprep.mubr.bf16.mxu0 %v3306
    %4073 = vmatmul.mubr.bf16.gmra.mxu0 %v3305
    %v4074 = vpop.f32.mrf.mxu0
    %v4075 = vadd.f32 %v3882, %v4074
    %v4076 = vpop.f32.mrf.mxu0
    %v4077 = vadd.f32 %v3884, %v4076
    %v4078 = vpop.f32.mrf.mxu0
    %v4079 = vadd.f32 %v3886, %v4078
    %v4080 = vpop.f32.mrf.mxu0
    %v4081 = vadd.f32 %v3888, %v4080
    %4082 = vmatprep.mubr.bf16.mxu0 %v3310
    %4083 = vmatmul.mubr.bf16.gmra.mxu0 %v3309
    %v4084 = vpop.f32.mrf.mxu0
    %v4085 = vadd.f32 %v3892, %v4084
    %v4086 = vpop.f32.mrf.mxu0
    %v4087 = vadd.f32 %v3894, %v4086
    %v4088 = vpop.f32.mrf.mxu0
    %v4089 = vadd.f32 %v3896, %v4088
    %v4090 = vpop.f32.mrf.mxu0
    %v4091 = vadd.f32 %v3898, %v4090
    %4092 = vdwg.mxu0
    %v4093 = vmax.f32 %v3935, 0.0
    %v4094 = vmax.f32 %v3937, 0.0
    %v4095 = vmax.f32 %v3939, 0.0
    %v4096 = vmax.f32 %v3941, 0.0
    %v4097 = vmax.f32 %v3945, 0.0
    %v4098 = vmax.f32 %v3947, 0.0
    %v4099 = vmax.f32 %v3949, 0.0
    %v4100 = vmax.f32 %v3951, 0.0
    %v4101 = vmax.f32 %v3955, 0.0
    %v4102 = vmax.f32 %v3957, 0.0
    %v4103 = vmax.f32 %v3959, 0.0
    %v4104 = vmax.f32 %v3961, 0.0
    %v4105 = vmax.f32 %v3965, 0.0
    %v4106 = vmax.f32 %v3967, 0.0
    %v4107 = vmax.f32 %v3969, 0.0
    %v4108 = vmax.f32 %v3971, 0.0
    %v4109 = vmax.f32 %v3975, 0.0
    %v4110 = vmax.f32 %v3977, 0.0
    %v4111 = vmax.f32 %v3979, 0.0
    %v4112 = vmax.f32 %v3981, 0.0
    %v4113 = vmax.f32 %v3985, 0.0
    %v4114 = vmax.f32 %v3987, 0.0
    %v4115 = vmax.f32 %v3989, 0.0
    %v4116 = vmax.f32 %v3991, 0.0
    %v4117 = vmax.f32 %v3995, 0.0
    %v4118 = vmax.f32 %v3997, 0.0
    %v4119 = vmax.f32 %v3999, 0.0
    %v4120 = vmax.f32 %v4001, 0.0
    %v4121 = vmax.f32 %v4005, 0.0
    %v4122 = vmax.f32 %v4007, 0.0
    %v4123 = vmax.f32 %v4009, 0.0
    %v4124 = vmax.f32 %v4011, 0.0
    %v4125 = vmax.f32 %v4015, 0.0
    %v4126 = vmax.f32 %v4017, 0.0
    %v4127 = vmax.f32 %v4019, 0.0
    %v4128 = vmax.f32 %v4021, 0.0
    %v4129 = vmax.f32 %v4025, 0.0
    %v4130 = vmax.f32 %v4027, 0.0
    %v4131 = vmax.f32 %v4029, 0.0
    %v4132 = vmax.f32 %v4031, 0.0
    %v4133 = vmax.f32 %v4035, 0.0
    %v4134 = vmax.f32 %v4037, 0.0
    %v4135 = vmax.f32 %v4039, 0.0
    %v4136 = vmax.f32 %v4041, 0.0
    %v4137 = vmax.f32 %v4045, 0.0
    %v4138 = vmax.f32 %v4047, 0.0
    %v4139 = vmax.f32 %v4049, 0.0
    %v4140 = vmax.f32 %v4051, 0.0
    %v4141 = vmax.f32 %v4055, 0.0
    %v4142 = vmax.f32 %v4057, 0.0
    %v4143 = vmax.f32 %v4059, 0.0
    %v4144 = vmax.f32 %v4061, 0.0
    %v4145 = vmax.f32 %v4065, 0.0
    %v4146 = vmax.f32 %v4067, 0.0
    %v4147 = vmax.f32 %v4069, 0.0
    %v4148 = vmax.f32 %v4071, 0.0
    %v4149 = vmax.f32 %v4075, 0.0
    %v4150 = vmax.f32 %v4077, 0.0
    %v4151 = vmax.f32 %v4079, 0.0
    %v4152 = vmax.f32 %v4081, 0.0
    %v4153 = vmax.f32 %v4085, 0.0
    %v4154 = vmax.f32 %v4087, 0.0
    %v4155 = vmax.f32 %v4089, 0.0
    %v4156 = vmax.f32 %v4091, 0.0
    %v4157 = vpack.c.bf16 %v4095, %v4093
    %v4158 = vpack.c.bf16 %v4096, %v4094
    %v4159 = vpack.c.bf16 %v4099, %v4097
    %v4160 = vpack.c.bf16 %v4100, %v4098
    %v4161 = vpack.c.bf16 %v4103, %v4101
    %v4162 = vpack.c.bf16 %v4104, %v4102
    %v4163 = vpack.c.bf16 %v4107, %v4105
    %v4164 = vpack.c.bf16 %v4108, %v4106
    %v4165 = vpack.c.bf16 %v4111, %v4109
    %v4166 = vpack.c.bf16 %v4112, %v4110
    %v4167 = vpack.c.bf16 %v4115, %v4113
    %v4168 = vpack.c.bf16 %v4116, %v4114
    %v4169 = vpack.c.bf16 %v4119, %v4117
    %v4170 = vpack.c.bf16 %v4120, %v4118
    %v4171 = vpack.c.bf16 %v4123, %v4121
    %v4172 = vpack.c.bf16 %v4124, %v4122
    %v4173 = vpack.c.bf16 %v4127, %v4125
    %v4174 = vpack.c.bf16 %v4128, %v4126
    %v4175 = vpack.c.bf16 %v4131, %v4129
    %v4176 = vpack.c.bf16 %v4132, %v4130
    %v4177 = vpack.c.bf16 %v4135, %v4133
    %v4178 = vpack.c.bf16 %v4136, %v4134
    %v4179 = vpack.c.bf16 %v4139, %v4137
    %v4180 = vpack.c.bf16 %v4140, %v4138
    %v4181 = vpack.c.bf16 %v4143, %v4141
    %v4182 = vpack.c.bf16 %v4144, %v4142
    %v4183 = vpack.c.bf16 %v4147, %v4145
    %v4184 = vpack.c.bf16 %v4148, %v4146
    %v4185 = vpack.c.bf16 %v4151, %v4149
    %v4186 = vpack.c.bf16 %v4152, %v4150
    %v4187 = vpack.c.bf16 %v4155, %v4153
    %v4188 = vpack.c.bf16 %v4156, %v4154
    %v4189 = vld [vmem:[%s9] sm:$0xf]
    %v4190 = vld [vmem:[%s9 + $0x4] sm:$0xf]
    %v4191 = vld [vmem:[%s9 + $0x8] sm:$0xf]
    %v4192 = vld [vmem:[%s9 + $0xc] sm:$0xf]
    %v4193 = vld [vmem:[%s9 + $0x10] sm:$0xf]
    %v4194 = vld [vmem:[%s9 + $0x14] sm:$0xf]
    %v4195 = vld [vmem:[%s9 + $0x18] sm:$0xf]
    %v4196 = vld [vmem:[%s9 + $0x1c] sm:$0xf]
    %v4197 = vld [vmem:[%s9 + $0x20] sm:$0xf]
    %v4198 = vld [vmem:[%s9 + $0x24] sm:$0xf]
    %v4199 = vld [vmem:[%s9 + $0x28] sm:$0xf]
    %v4200 = vld [vmem:[%s9 + $0x2c] sm:$0xf]
    %v4201 = vld [vmem:[%s9 + $0x30] sm:$0xf]
    %v4202 = vld [vmem:[%s9 + $0x34] sm:$0xf]
    %v4203 = vld [vmem:[%s9 + $0x38] sm:$0xf]
    %v4204 = vld [vmem:[%s9 + $0x3c] sm:$0xf]
    %v4205 = vld [vmem:[%s9 + $0x40] sm:$0xf]
    %v4206 = vld [vmem:[%s9 + $0x44] sm:$0xf]
    %v4207 = vld [vmem:[%s9 + $0x48] sm:$0xf]
    %v4208 = vld [vmem:[%s9 + $0x4c] sm:$0xf]
    %v4209 = vld [vmem:[%s9 + $0x50] sm:$0xf]
    %v4210 = vld [vmem:[%s9 + $0x54] sm:$0xf]
    %v4211 = vld [vmem:[%s9 + $0x58] sm:$0xf]
    %v4212 = vld [vmem:[%s9 + $0x5c] sm:$0xf]
    %v4213 = vld [vmem:[%s9 + $0x60] sm:$0xf]
    %v4214 = vld [vmem:[%s9 + $0x64] sm:$0xf]
    %v4215 = vld [vmem:[%s9 + $0x68] sm:$0xf]
    %v4216 = vld [vmem:[%s9 + $0x6c] sm:$0xf]
    %v4217 = vld [vmem:[%s9 + $0x70] sm:$0xf]
    %v4218 = vld [vmem:[%s9 + $0x74] sm:$0xf]
    %v4219 = vld [vmem:[%s9 + $0x78] sm:$0xf]
    %v4220 = vld [vmem:[%s9 + $0x7c] sm:$0xf]
    %v4221 = vld [vmem:[#allocation2] sm:$0x1]
    %v4223 = vlaneseq
    %v4224 = vshrl.u32 %v4223, 7
    %v4225 = vsub.s32 0, %v4224
    %v4226 = vrot.slane %v4221, %v4225
    %v4260 = vunpack.c.l.b16 %v4189
    %v4261 = vunpack.c.l.b16 %v4190
    %v4262 = vunpack.c.l.b16 %v4191
    %v4263 = vunpack.c.l.b16 %v4192
    %v4264 = vunpack.c.l.b16 %v4193
    %v4265 = vunpack.c.l.b16 %v4194
    %v4266 = vunpack.c.l.b16 %v4195
    %v4267 = vunpack.c.l.b16 %v4196
    %v4268 = vunpack.c.l.b16 %v4197
    %v4269 = vunpack.c.l.b16 %v4198
    %v4270 = vunpack.c.l.b16 %v4199
    %v4271 = vunpack.c.l.b16 %v4200
    %v4272 = vunpack.c.l.b16 %v4201
    %v4273 = vunpack.c.l.b16 %v4202
    %v4274 = vunpack.c.l.b16 %v4203
    %v4275 = vunpack.c.l.b16 %v4204
    %v4276 = vunpack.c.l.b16 %v4205
    %v4277 = vunpack.c.l.b16 %v4206
    %v4278 = vunpack.c.l.b16 %v4207
    %v4279 = vunpack.c.l.b16 %v4208
    %v4280 = vunpack.c.l.b16 %v4209
    %v4281 = vunpack.c.l.b16 %v4210
    %v4282 = vunpack.c.l.b16 %v4211
    %v4283 = vunpack.c.l.b16 %v4212
    %v4284 = vunpack.c.l.b16 %v4213
    %v4285 = vunpack.c.l.b16 %v4214
    %v4286 = vunpack.c.l.b16 %v4215
    %v4287 = vunpack.c.l.b16 %v4216
    %v4288 = vunpack.c.l.b16 %v4217
    %v4289 = vunpack.c.l.b16 %v4218
    %v4290 = vunpack.c.l.b16 %v4219
    %v4291 = vunpack.c.l.b16 %v4220
    %v4292 = vpack.c.b16 %v4261, %v4260
    %v4293 = vpack.c.b16 %v4263, %v4262
    %v4294 = vpack.c.b16 %v4265, %v4264
    %v4295 = vpack.c.b16 %v4267, %v4266
    %v4296 = vpack.c.b16 %v4269, %v4268
    %v4297 = vpack.c.b16 %v4271, %v4270
    %v4298 = vpack.c.b16 %v4273, %v4272
    %v4299 = vpack.c.b16 %v4275, %v4274
    %v4300 = vpack.c.b16 %v4277, %v4276
    %v4301 = vpack.c.b16 %v4279, %v4278
    %v4302 = vpack.c.b16 %v4281, %v4280
    %v4303 = vpack.c.b16 %v4283, %v4282
    %v4304 = vpack.c.b16 %v4285, %v4284
    %v4305 = vpack.c.b16 %v4287, %v4286
    %v4306 = vpack.c.b16 %v4289, %v4288
    %v4307 = vpack.c.b16 %v4291, %v4290
    %4324 = vmatprep.subr.bf16.mxu0 0
    %4325 = vmatpush1.bf16.msra.mxu0 %v4299
    %4326 = vmatprep.subr.bf16.mxu0 0
    %4327 = vmatpush1.bf16.msra.mxu0 %v4298
    %4328 = vmatprep.subr.bf16.mxu0 0
    %4329 = vmatpush1.bf16.msra.mxu0 %v4297
    %4330 = vmatprep.subr.bf16.mxu0 0
    %4331 = vmatpush1.bf16.msra.mxu0 %v4296
    %4332 = vmatprep.subr.bf16.mxu0 0
    %4333 = vmatpush1.bf16.msra.mxu0 %v4295
    %4334 = vmatprep.subr.bf16.mxu0 0
    %4335 = vmatpush1.bf16.msra.mxu0 %v4294
    %4336 = vmatprep.subr.bf16.mxu0 0
    %4337 = vmatpush1.bf16.msra.mxu0 %v4293
    %4338 = vmatprep.subr.bf16.mxu0 0
    %4339 = vmatpush1.bf16.msra.mxu0 %v4292
    %4340 = vmatprep.subr.bf16.mxu0 0
    %4341 = vmatpush2.bf16.msra.mxu0 %v4307
    %4342 = vmatprep.subr.bf16.mxu0 0
    %4343 = vmatpush2.bf16.msra.mxu0 %v4306
    %4344 = vmatprep.subr.bf16.mxu0 0
    %4345 = vmatpush2.bf16.msra.mxu0 %v4305
    %4346 = vmatprep.subr.bf16.mxu0 0
    %4347 = vmatpush2.bf16.msra.mxu0 %v4304
    %4348 = vmatprep.subr.bf16.mxu0 0
    %4349 = vmatpush2.bf16.msra.mxu0 %v4303
    %4350 = vmatprep.subr.bf16.mxu0 0
    %4351 = vmatpush2.bf16.msra.mxu0 %v4302
    %4352 = vmatprep.subr.bf16.mxu0 0
    %4353 = vmatpush2.bf16.msra.mxu0 %v4301
    %4354 = vmatprep.subr.bf16.mxu0 0
    %4355 = vmatpush2.bf16.msra.mxu0 %v4300
    %4356 = vmatprep.mubr.bf16.mxu0 %v4158
    %4357 = vmatmul.mubr.bf16.gmra.mxu0 %v4157
    %v4358 = vpop.f32.mrf.mxu0
    %v4359 = vadd.f32 %v4226, %v4358
    %v4360 = vpop.f32.mrf.mxu0
    %v4361 = vpop.f32.mrf.mxu0
    %v4362 = vadd.f32 %v4226, %v4361
    %v4363 = vpop.f32.mrf.mxu0
    %4364 = vmatprep.mubr.bf16.mxu0 %v4160
    %4365 = vmatmul.mubr.bf16.gmra.mxu0 %v4159
    %v4366 = vpop.f32.mrf.mxu0
    %v4367 = vadd.f32 %v4226, %v4366
    %v4368 = vpop.f32.mrf.mxu0
    %v4369 = vpop.f32.mrf.mxu0
    %v4370 = vadd.f32 %v4226, %v4369
    %v4371 = vpop.f32.mrf.mxu0
    %4372 = vmatprep.mubr.bf16.mxu0 %v4162
    %4373 = vmatmul.mubr.bf16.gmra.mxu0 %v4161
    %v4374 = vpop.f32.mrf.mxu0
    %v4375 = vadd.f32 %v4226, %v4374
    %v4376 = vpop.f32.mrf.mxu0
    %v4377 = vpop.f32.mrf.mxu0
    %v4378 = vadd.f32 %v4226, %v4377
    %v4379 = vpop.f32.mrf.mxu0
    %4380 = vmatprep.mubr.bf16.mxu0 %v4164
    %4381 = vmatmul.mubr.bf16.gmra.mxu0 %v4163
    %v4382 = vpop.f32.mrf.mxu0
    %v4383 = vadd.f32 %v4226, %v4382
    %v4384 = vpop.f32.mrf.mxu0
    %v4385 = vpop.f32.mrf.mxu0
    %v4386 = vadd.f32 %v4226, %v4385
    %v4387 = vpop.f32.mrf.mxu0
    %4388 = vmatprep.mubr.bf16.mxu0 %v4166
    %4389 = vmatmul.mubr.bf16.gmra.mxu0 %v4165
    %v4390 = vpop.f32.mrf.mxu0
    %v4391 = vadd.f32 %v4226, %v4390
    %v4392 = vpop.f32.mrf.mxu0
    %v4393 = vpop.f32.mrf.mxu0
    %v4394 = vadd.f32 %v4226, %v4393
    %v4395 = vpop.f32.mrf.mxu0
    %4396 = vmatprep.mubr.bf16.mxu0 %v4168
    %4397 = vmatmul.mubr.bf16.gmra.mxu0 %v4167
    %v4398 = vpop.f32.mrf.mxu0
    %v4399 = vadd.f32 %v4226, %v4398
    %v4400 = vpop.f32.mrf.mxu0
    %v4401 = vpop.f32.mrf.mxu0
    %v4402 = vadd.f32 %v4226, %v4401
    %v4403 = vpop.f32.mrf.mxu0
    %4404 = vmatprep.mubr.bf16.mxu0 %v4170
    %4405 = vmatmul.mubr.bf16.gmra.mxu0 %v4169
    %v4406 = vpop.f32.mrf.mxu0
    %v4407 = vadd.f32 %v4226, %v4406
    %v4408 = vpop.f32.mrf.mxu0
    %v4409 = vpop.f32.mrf.mxu0
    %v4410 = vadd.f32 %v4226, %v4409
    %v4411 = vpop.f32.mrf.mxu0
    %4412 = vmatprep.mubr.bf16.mxu0 %v4172
    %4413 = vmatmul.mubr.bf16.gmra.mxu0 %v4171
    %v4414 = vpop.f32.mrf.mxu0
    %v4415 = vadd.f32 %v4226, %v4414
    %v4416 = vpop.f32.mrf.mxu0
    %v4417 = vpop.f32.mrf.mxu0
    %v4418 = vadd.f32 %v4226, %v4417
    %v4419 = vpop.f32.mrf.mxu0
    %4420 = vmatprep.mubr.bf16.mxu0 %v4174
    %4421 = vmatmul.mubr.bf16.gmra.mxu0 %v4173
    %v4422 = vpop.f32.mrf.mxu0
    %v4423 = vadd.f32 %v4226, %v4422
    %v4424 = vpop.f32.mrf.mxu0
    %v4425 = vpop.f32.mrf.mxu0
    %v4426 = vadd.f32 %v4226, %v4425
    %v4427 = vpop.f32.mrf.mxu0
    %4428 = vmatprep.mubr.bf16.mxu0 %v4176
    %4429 = vmatmul.mubr.bf16.gmra.mxu0 %v4175
    %v4430 = vpop.f32.mrf.mxu0
    %v4431 = vadd.f32 %v4226, %v4430
    %v4432 = vpop.f32.mrf.mxu0
    %v4433 = vpop.f32.mrf.mxu0
    %v4434 = vadd.f32 %v4226, %v4433
    %v4435 = vpop.f32.mrf.mxu0
    %4436 = vmatprep.mubr.bf16.mxu0 %v4178
    %4437 = vmatmul.mubr.bf16.gmra.mxu0 %v4177
    %v4438 = vpop.f32.mrf.mxu0
    %v4439 = vadd.f32 %v4226, %v4438
    %v4440 = vpop.f32.mrf.mxu0
    %v4441 = vpop.f32.mrf.mxu0
    %v4442 = vadd.f32 %v4226, %v4441
    %v4443 = vpop.f32.mrf.mxu0
    %4444 = vmatprep.mubr.bf16.mxu0 %v4180
    %4445 = vmatmul.mubr.bf16.gmra.mxu0 %v4179
    %v4446 = vpop.f32.mrf.mxu0
    %v4447 = vadd.f32 %v4226, %v4446
    %v4448 = vpop.f32.mrf.mxu0
    %v4449 = vpop.f32.mrf.mxu0
    %v4450 = vadd.f32 %v4226, %v4449
    %v4451 = vpop.f32.mrf.mxu0
    %4452 = vmatprep.mubr.bf16.mxu0 %v4182
    %4453 = vmatmul.mubr.bf16.gmra.mxu0 %v4181
    %v4454 = vpop.f32.mrf.mxu0
    %v4455 = vadd.f32 %v4226, %v4454
    %v4456 = vpop.f32.mrf.mxu0
    %v4457 = vpop.f32.mrf.mxu0
    %v4458 = vadd.f32 %v4226, %v4457
    %v4459 = vpop.f32.mrf.mxu0
    %4460 = vmatprep.mubr.bf16.mxu0 %v4184
    %4461 = vmatmul.mubr.bf16.gmra.mxu0 %v4183
    %v4462 = vpop.f32.mrf.mxu0
    %v4463 = vadd.f32 %v4226, %v4462
    %v4464 = vpop.f32.mrf.mxu0
    %v4465 = vpop.f32.mrf.mxu0
    %v4466 = vadd.f32 %v4226, %v4465
    %v4467 = vpop.f32.mrf.mxu0
    %4468 = vmatprep.mubr.bf16.mxu0 %v4186
    %4469 = vmatmul.mubr.bf16.gmra.mxu0 %v4185
    %v4470 = vpop.f32.mrf.mxu0
    %v4471 = vadd.f32 %v4226, %v4470
    %v4472 = vpop.f32.mrf.mxu0
    %v4473 = vpop.f32.mrf.mxu0
    %v4474 = vadd.f32 %v4226, %v4473
    %v4475 = vpop.f32.mrf.mxu0
    %4476 = vmatprep.mubr.bf16.mxu0 %v4188
    %4477 = vmatmul.mubr.bf16.gmra.mxu0 %v4187
    %v4478 = vpop.f32.mrf.mxu0
    %v4479 = vadd.f32 %v4226, %v4478
    %v4480 = vpop.f32.mrf.mxu0
    %v4481 = vpop.f32.mrf.mxu0
    %v4482 = vadd.f32 %v4226, %v4481
    %v4483 = vpop.f32.mrf.mxu0
    %4484 = vdwg.mxu0
    %v4485 = vxor.u32 %v4359, 2147483648
    %v4486 = vxor.u32 %v4362, 2147483648
    %v4487 = vxor.u32 %v4367, 2147483648
    %v4488 = vxor.u32 %v4370, 2147483648
    %v4489 = vxor.u32 %v4375, 2147483648
    %v4490 = vxor.u32 %v4378, 2147483648
    %v4491 = vxor.u32 %v4383, 2147483648
    %v4492 = vxor.u32 %v4386, 2147483648
    %v4493 = vxor.u32 %v4391, 2147483648
    %v4494 = vxor.u32 %v4394, 2147483648
    %v4495 = vxor.u32 %v4399, 2147483648
    %v4496 = vxor.u32 %v4402, 2147483648
    %v4497 = vxor.u32 %v4407, 2147483648
    %v4498 = vxor.u32 %v4410, 2147483648
    %v4499 = vxor.u32 %v4415, 2147483648
    %v4500 = vxor.u32 %v4418, 2147483648
    %v4501 = vxor.u32 %v4423, 2147483648
    %v4502 = vxor.u32 %v4426, 2147483648
    %v4503 = vxor.u32 %v4431, 2147483648
    %v4504 = vxor.u32 %v4434, 2147483648
    %v4505 = vxor.u32 %v4439, 2147483648
    %v4506 = vxor.u32 %v4442, 2147483648
    %v4507 = vxor.u32 %v4447, 2147483648
    %v4508 = vxor.u32 %v4450, 2147483648
    %v4509 = vxor.u32 %v4455, 2147483648
    %v4510 = vxor.u32 %v4458, 2147483648
    %v4511 = vxor.u32 %v4463, 2147483648
    %v4512 = vxor.u32 %v4466, 2147483648
    %v4513 = vxor.u32 %v4471, 2147483648
    %v4514 = vxor.u32 %v4474, 2147483648
    %v4515 = vxor.u32 %v4479, 2147483648
    %v4516 = vxor.u32 %v4482, 2147483648
    %v4517 = vmul.f32 %v4485, 1.442695
    %v4518 = vpow.pop %v4517
    %v4519 = vmul.f32 %v4486, 1.442695
    %v4520 = vpow.pop %v4519
    %v4521 = vmul.f32 %v4487, 1.442695
    %v4522 = vpow.pop %v4521
    %v4523 = vmul.f32 %v4488, 1.442695
    %v4524 = vpow.pop %v4523
    %v4525 = vmul.f32 %v4489, 1.442695
    %v4526 = vpow.pop %v4525
    %v4527 = vmul.f32 %v4490, 1.442695
    %v4528 = vpow.pop %v4527
    %v4529 = vmul.f32 %v4491, 1.442695
    %v4530 = vpow.pop %v4529
    %v4531 = vmul.f32 %v4492, 1.442695
    %v4532 = vpow.pop %v4531
    %v4533 = vmul.f32 %v4493, 1.442695
    %v4534 = vpow.pop %v4533
    %v4535 = vmul.f32 %v4494, 1.442695
    %v4536 = vpow.pop %v4535
    %v4537 = vmul.f32 %v4495, 1.442695
    %v4538 = vpow.pop %v4537
    %v4539 = vmul.f32 %v4496, 1.442695
    %v4540 = vpow.pop %v4539
    %v4541 = vmul.f32 %v4497, 1.442695
    %v4542 = vpow.pop %v4541
    %v4543 = vmul.f32 %v4498, 1.442695
    %v4544 = vpow.pop %v4543
    %v4545 = vmul.f32 %v4499, 1.442695
    %v4546 = vpow.pop %v4545
    %v4547 = vmul.f32 %v4500, 1.442695
    %v4548 = vpow.pop %v4547
    %v4549 = vmul.f32 %v4501, 1.442695
    %v4550 = vpow.pop %v4549
    %v4551 = vmul.f32 %v4502, 1.442695
    %v4552 = vpow.pop %v4551
    %v4553 = vmul.f32 %v4503, 1.442695
    %v4554 = vpow.pop %v4553
    %v4555 = vmul.f32 %v4504, 1.442695
    %v4556 = vpow.pop %v4555
    %v4557 = vmul.f32 %v4505, 1.442695
    %v4558 = vpow.pop %v4557
    %v4559 = vmul.f32 %v4506, 1.442695
    %v4560 = vpow.pop %v4559
    %v4561 = vmul.f32 %v4507, 1.442695
    %v4562 = vpow.pop %v4561
    %v4563 = vmul.f32 %v4508, 1.442695
    %v4564 = vpow.pop %v4563
    %v4565 = vmul.f32 %v4509, 1.442695
    %v4566 = vpow.pop %v4565
    %v4567 = vmul.f32 %v4510, 1.442695
    %v4568 = vpow.pop %v4567
    %v4569 = vmul.f32 %v4511, 1.442695
    %v4570 = vpow.pop %v4569
    %v4571 = vmul.f32 %v4512, 1.442695
    %v4572 = vpow.pop %v4571
    %v4573 = vmul.f32 %v4513, 1.442695
    %v4574 = vpow.pop %v4573
    %v4575 = vmul.f32 %v4514, 1.442695
    %v4576 = vpow.pop %v4575
    %v4577 = vmul.f32 %v4515, 1.442695
    %v4578 = vpow.pop %v4577
    %v4579 = vmul.f32 %v4516, 1.442695
    %v4580 = vpow.pop %v4579
    %v4581 = vadd.f32 %v4518, 1.0
    %v4582 = vadd.f32 %v4520, 1.0
    %v4583 = vadd.f32 %v4522, 1.0
    %v4584 = vadd.f32 %v4524, 1.0
    %v4585 = vadd.f32 %v4526, 1.0
    %v4586 = vadd.f32 %v4528, 1.0
    %v4587 = vadd.f32 %v4530, 1.0
    %v4588 = vadd.f32 %v4532, 1.0
    %v4589 = vadd.f32 %v4534, 1.0
    %v4590 = vadd.f32 %v4536, 1.0
    %v4591 = vadd.f32 %v4538, 1.0
    %v4592 = vadd.f32 %v4540, 1.0
    %v4593 = vadd.f32 %v4542, 1.0
    %v4594 = vadd.f32 %v4544, 1.0
    %v4595 = vadd.f32 %v4546, 1.0
    %v4596 = vadd.f32 %v4548, 1.0
    %v4597 = vadd.f32 %v4550, 1.0
    %v4598 = vadd.f32 %v4552, 1.0
    %v4599 = vadd.f32 %v4554, 1.0
    %v4600 = vadd.f32 %v4556, 1.0
    %v4601 = vadd.f32 %v4558, 1.0
    %v4602 = vadd.f32 %v4560, 1.0
    %v4603 = vadd.f32 %v4562, 1.0
    %v4604 = vadd.f32 %v4564, 1.0
    %v4605 = vadd.f32 %v4566, 1.0
    %v4606 = vadd.f32 %v4568, 1.0
    %v4607 = vadd.f32 %v4570, 1.0
    %v4608 = vadd.f32 %v4572, 1.0
    %v4609 = vadd.f32 %v4574, 1.0
    %v4610 = vadd.f32 %v4576, 1.0
    %v4611 = vadd.f32 %v4578, 1.0
    %v4612 = vadd.f32 %v4580, 1.0
    %v4613 = vrcp.pop %v4581
    %v4614 = vmul.f32 1.0, %v4613
    %v4615 = vrcp.pop %v4582
    %v4616 = vmul.f32 1.0, %v4615
    %v4617 = vrcp.pop %v4583
    %v4618 = vmul.f32 1.0, %v4617
    %v4619 = vrcp.pop %v4584
    %v4620 = vmul.f32 1.0, %v4619
    %v4621 = vrcp.pop %v4585
    %v4622 = vmul.f32 1.0, %v4621
    %v4623 = vrcp.pop %v4586
    %v4624 = vmul.f32 1.0, %v4623
    %v4625 = vrcp.pop %v4587
    %v4626 = vmul.f32 1.0, %v4625
    %v4627 = vrcp.pop %v4588
    %v4628 = vmul.f32 1.0, %v4627
    %v4629 = vrcp.pop %v4589
    %v4630 = vmul.f32 1.0, %v4629
    %v4631 = vrcp.pop %v4590
    %v4632 = vmul.f32 1.0, %v4631
    %v4633 = vrcp.pop %v4591
    %v4634 = vmul.f32 1.0, %v4633
    %v4635 = vrcp.pop %v4592
    %v4636 = vmul.f32 1.0, %v4635
    %v4637 = vrcp.pop %v4593
    %v4638 = vmul.f32 1.0, %v4637
    %v4639 = vrcp.pop %v4594
    %v4640 = vmul.f32 1.0, %v4639
    %v4641 = vrcp.pop %v4595
    %v4642 = vmul.f32 1.0, %v4641
    %v4643 = vrcp.pop %v4596
    %v4644 = vmul.f32 1.0, %v4643
    %v4645 = vrcp.pop %v4597
    %v4646 = vmul.f32 1.0, %v4645
    %v4647 = vrcp.pop %v4598
    %v4648 = vmul.f32 1.0, %v4647
    %v4649 = vrcp.pop %v4599
    %v4650 = vmul.f32 1.0, %v4649
    %v4651 = vrcp.pop %v4600
    %v4652 = vmul.f32 1.0, %v4651
    %v4653 = vrcp.pop %v4601
    %v4654 = vmul.f32 1.0, %v4653
    %v4655 = vrcp.pop %v4602
    %v4656 = vmul.f32 1.0, %v4655
    %v4657 = vrcp.pop %v4603
    %v4658 = vmul.f32 1.0, %v4657
    %v4659 = vrcp.pop %v4604
    %v4660 = vmul.f32 1.0, %v4659
    %v4661 = vrcp.pop %v4605
    %v4662 = vmul.f32 1.0, %v4661
    %v4663 = vrcp.pop %v4606
    %v4664 = vmul.f32 1.0, %v4663
    %v4665 = vrcp.pop %v4607
    %v4666 = vmul.f32 1.0, %v4665
    %v4667 = vrcp.pop %v4608
    %v4668 = vmul.f32 1.0, %v4667
    %v4669 = vrcp.pop %v4609
    %v4670 = vmul.f32 1.0, %v4669
    %v4671 = vrcp.pop %v4610
    %v4672 = vmul.f32 1.0, %v4671
    %v4673 = vrcp.pop %v4611
    %v4674 = vmul.f32 1.0, %v4673
    %v4675 = vrcp.pop %v4612
    %v4676 = vmul.f32 1.0, %v4675
    %vm4677 = vcmask 7168
    %4678 = vst.msk [vmem:[%s11] sm:$0xff] %vm4677, %v4614
    %4679 = vst.msk [vmem:[%s11 + $0x8] sm:$0xff] %vm4677, %v4616
    %4680 = vst.msk [vmem:[%s11 + $0x10] sm:$0xff] %vm4677, %v4618
    %4681 = vst.msk [vmem:[%s11 + $0x18] sm:$0xff] %vm4677, %v4620
    %4682 = vst.msk [vmem:[%s11 + $0x20] sm:$0xff] %vm4677, %v4622
    %4683 = vst.msk [vmem:[%s11 + $0x28] sm:$0xff] %vm4677, %v4624
    %4684 = vst.msk [vmem:[%s11 + $0x30] sm:$0xff] %vm4677, %v4626
    %4685 = vst.msk [vmem:[%s11 + $0x38] sm:$0xff] %vm4677, %v4628
    %4686 = vst.msk [vmem:[%s11 + $0x40] sm:$0xff] %vm4677, %v4630
    %4687 = vst.msk [vmem:[%s11 + $0x48] sm:$0xff] %vm4677, %v4632
    %4688 = vst.msk [vmem:[%s11 + $0x50] sm:$0xff] %vm4677, %v4634
    %4689 = vst.msk [vmem:[%s11 + $0x58] sm:$0xff] %vm4677, %v4636
    %4690 = vst.msk [vmem:[%s11 + $0x60] sm:$0xff] %vm4677, %v4638
    %4691 = vst.msk [vmem:[%s11 + $0x68] sm:$0xff] %vm4677, %v4640
    %4692 = vst.msk [vmem:[%s11 + $0x70] sm:$0xff] %vm4677, %v4642
    %4693 = vst.msk [vmem:[%s11 + $0x78] sm:$0xff] %vm4677, %v4644
    %4694 = vst.msk [vmem:[%s11 + $0x80] sm:$0xff] %vm4677, %v4646
    %4695 = vst.msk [vmem:[%s11 + $0x88] sm:$0xff] %vm4677, %v4648
    %4696 = vst.msk [vmem:[%s11 + $0x90] sm:$0xff] %vm4677, %v4650
    %4697 = vst.msk [vmem:[%s11 + $0x98] sm:$0xff] %vm4677, %v4652
    %4698 = vst.msk [vmem:[%s11 + $0xa0] sm:$0xff] %vm4677, %v4654
    %4699 = vst.msk [vmem:[%s11 + $0xa8] sm:$0xff] %vm4677, %v4656
    %4700 = vst.msk [vmem:[%s11 + $0xb0] sm:$0xff] %vm4677, %v4658
    %4701 = vst.msk [vmem:[%s11 + $0xb8] sm:$0xff] %vm4677, %v4660
    %4702 = vst.msk [vmem:[%s11 + $0xc0] sm:$0xff] %vm4677, %v4662
    %4703 = vst.msk [vmem:[%s11 + $0xc8] sm:$0xff] %vm4677, %v4664
    %4704 = vst.msk [vmem:[%s11 + $0xd0] sm:$0xff] %vm4677, %v4666
    %4705 = vst.msk [vmem:[%s11 + $0xd8] sm:$0xff] %vm4677, %v4668
    %4706 = vst.msk [vmem:[%s11 + $0xe0] sm:$0xff] %vm4677, %v4670
    %4707 = vst.msk [vmem:[%s11 + $0xe8] sm:$0xff] %vm4677, %v4672
    %4708 = vst.msk [vmem:[%s11 + $0xf0] sm:$0xff] %vm4677, %v4674
    %4709 = vst.msk [vmem:[%s11 + $0xf8] sm:$0xff] %vm4677, %v4676
    // Predicated region
    $region58: #{net_forward.1} parent=1 // pred_check
      _
    $region59: #{net_forward.1} parent=1 // pred_check_branch
      %4711 = sbr.rel (0) target = $region61
    $region60: #{net_forward.1} parent=1 // pred_region
      _
    $region61: #{net_forward.1} parent=1 // pred_fallthru
      _
    // Predicated region
    $region62: #{net_forward.1} parent=1 // pred_check
      _
    $region63: #{net_forward.1} parent=1 // pred_check_branch
      %4713 = sbr.rel (0) target = $region65
    $region64: #{net_forward.1} parent=1 // pred_region
      _
    $region65: #{net_forward.1} parent=1 // pred_fallthru
      _
    %4714 = vsyncpa [#allocation4], 1
    %4715 = vsyncpa [#allocation6], 1

</llo_original>
